<compile_context>
chip_gen: v6e
topology: v6e:2x2x1
jax: 0.10.0
libtpu: 0.0.40
codegen_flags: <defaults>
</compile_context>

<pallas_src>
import math
import functools

import jax
import jax.numpy as jnp
from jax.experimental import pallas as pl
from jax.experimental.pallas import tpu as pltpu

# ---------------- small, forward-consistent config ----------------
B = 2
MAX_SEQ = 16          # sequence length S (mask is built for max_seq, so S == max_seq)
D = 128               # embedding_dim
NUM_LAYERS = 2        # num_layer (small for the demo)
VOCAB = 40            # vocab_size
PAD_TOKEN = VOCAB - 1
H = D // 64           # heads per EncoderLayer: h = d_model // 64
DH = D // H
EPS = 1e-6            # LayerNorm eps
VOCAB_PAD = ((VOCAB + 127) // 128) * 128   # lane-dense padded vocab width


# ---------------- fused Pallas kernel (all layers + final FC) ----------------
def _mt_fwd_kernel(tok_ref, x_ref,
                   wqkv_ref, bqkv_ref, wo_ref, bo_ref,
                   w1_ref, b1_ref, w2_ref, b2_ref,
                   g1_ref, be1_ref, g2_ref, be2_ref,
                   eflipT_ref, fcw_ref, fcb_ref,
                   logits_ref, *attn_refs,
                   S, D, H, DH, L, pad_token):
    f32 = jnp.float32
    bf16 = jnp.bfloat16
    inv_sqrt_dh = 1.0 / math.sqrt(DH)

    x = x_ref[0]                                           # (S, D) f32, stays resident

    # ---- look-ahead mask bias built in-kernel from the token row ----
    tok = tok_ref[0]                                       # (1, S) int32
    ii = jax.lax.broadcasted_iota(jnp.int32, (S, S), 0)    # query index i
    jj = jax.lax.broadcasted_iota(jnp.int32, (S, S), 1)    # key index j
    causal = (jj > ii).astype(f32)
    padm = (tok == pad_token).astype(f32)                  # (1, S), broadcasts over i
    mbias = jnp.maximum(causal, padm) * (-1e9)             # (S, S): 0 / -1e9 like the reference

    # diagonal selectors for the relative-attention skew (hoisted out of the layer loop)
    diff = ii - jj                                         # diff[i, j] = i - j
    sels = [(diff == r).astype(f32) for r in range(S)]     # sels[r]: ones on r-th lower diagonal

    eflipT = eflipT_ref[...]                               # (DH, S) bf16; column r == E[S-1-r]

    for l in range(L):                                     # static unroll over layers
        xb = x.astype(bf16)

        # fused QKV projection: one (S, D) x (D, 3D) MXU matmul
        qkv = jnp.dot(xb, wqkv_ref[l], preferred_element_type=f32) + bqkv_ref[l]   # (S, 3D)

        # per-head stacks (H, S, DH) — H is tiny and static
        qh = jnp.stack([qkv[:, h * DH:(h + 1) * DH] for h in range(H)], 0).astype(bf16)
        kh = jnp.stack([qkv[:, D + h * DH:D + (h + 1) * DH] for h in range(H)], 0).astype(bf16)
        vh = jnp.stack([qkv[:, 2 * D + h * DH:2 * D + (h + 1) * DH] for h in range(H)], 0).astype(bf16)

        # QK^T for all heads at once: batched MXU matmul -> (H, S, S)
        scores = jax.lax.dot_general(qh, kh, (((2,), (2,)), ((0,), (0,))),
                                     preferred_element_type=f32)

        # relative term on the MXU: rel[h, i, r] = q_h[i] . E[S-1-r]
        rel = jnp.stack(
            [jnp.dot(qh[h], eflipT, preferred_element_type=f32) for h in range(H)], 0)  # (H,S,S)

        # skew: Srel[h, i, j] = rel[h, i, i-j] for j <= i, else 0
        # (equals the reference QE -> _qe_masking -> _skewing result).
        # TODO(synk): at production sizes (S a multiple of 128) use the strided
        #             pltpu.roll skew instead of this static O(S) select loop.
        srel = jnp.zeros((H, S, S), f32)
        for r in range(S):
            srel = srel + rel[:, :, r:r + 1] * sels[r][None]

        logits = (scores + srel) * inv_sqrt_dh + mbias[None]

        # softmax in f32 (reciprocal on the EUP slot)
        mx = jnp.max(logits, axis=-1, keepdims=True)
        p = jnp.exp(logits - mx)
        attn = p * pl.reciprocal(jnp.sum(p, axis=-1, keepdims=True), approx=True)
        attn_refs[l][0] = attn                             # (H, S, S) weights for this layer

        # context: batched (H,S,S) x (H,S,DH) -> (H,S,DH), then Wo projection
        ctx = jax.lax.dot_general(attn.astype(bf16), vh, (((2,), (1,)), ((0,), (0,))),
                                  preferred_element_type=f32)
        wo = wo_ref[l]                                     # (D, D) bf16
        attn_out = bo_ref[l]                               # (1, D) f32, broadcasts over rows
        for h in range(H):                                 # == concat(ctx over heads) @ Wo
            attn_out = attn_out + jnp.dot(ctx[h].astype(bf16), wo[h * DH:(h + 1) * DH, :],
                                          preferred_element_type=f32)

        # residual + LayerNorm1
        res1 = attn_out + x
        mu1 = jnp.mean(res1, axis=-1, keepdims=True)
        var1 = jnp.mean((res1 - mu1) ** 2, axis=-1, keepdims=True)
        out1 = (res1 - mu1) * jax.lax.rsqrt(var1 + EPS) * g1_ref[l] + be1_ref[l]

        # FFN: relu(out1 @ W1 + b1) @ W2 + b2
        h1 = jnp.dot(out1.astype(bf16), w1_ref[l], preferred_element_type=f32) + b1_ref[l]
        h1 = jnp.maximum(h1, 0.0)
        ffn = jnp.dot(h1.astype(bf16), w2_ref[l], preferred_element_type=f32) + b2_ref[l]

        # residual + LayerNorm2 -> next layer's input
        res2 = out1 + ffn
        mu2 = jnp.mean(res2, axis=-1, keepdims=True)
        var2 = jnp.mean((res2 - mu2) ** 2, axis=-1, keepdims=True)
        x = (res2 - mu2) * jax.lax.rsqrt(var2 + EPS) * g2_ref[l] + be2_ref[l]

    # final vocab projection (padded to a lane-dense 128-wide output)
    logits_ref[0] = jnp.dot(x.astype(bf16), fcw_ref[...], preferred_element_type=f32) + fcb_ref[...]


def _rep_spec(shape):
    """Same (replicated) block for every grid step (Pallas keeps it resident)."""
    n = len(shape)
    return pl.BlockSpec(shape, lambda b, _n=n: (0,) * _n)


def music_transformer_forward(tokens, params, kp):
    """tokens (B,S) int32 -> (logits (B,S,VOCAB) f32, [per-layer (B,H,S,S) attention weights])."""
    emb = params[0]
    Bq, S = tokens.shape

    # glue: embedding lookup + positional embedding (gather stays in JAX)
    x0 = (emb[tokens] * math.sqrt(D) + positional_embedding(S, D)[None]).astype(jnp.float32)
    tok3 = tokens[:, None, :].astype(jnp.int32)            # (B, 1, S) for a lane-dense block

    kernel = functools.partial(_mt_fwd_kernel, S=S, D=D, H=H, DH=DH, L=NUM_LAYERS,
                               pad_token=PAD_TOKEN)

    weight_args = (kp["wqkv"], kp["bqkv"], kp["wo"], kp["bo"],
                   kp["w1"], kp["b1"], kp["w2"], kp["b2"],
                   kp["g1"], kp["be1"], kp["g2"], kp["be2"],
                   kp["eflipT"], kp["fcw"], kp["fcb"])

    in_specs = [pl.BlockSpec((1, 1, S), lambda b: (b, 0, 0)),     # tokens (mask built in-kernel)
                pl.BlockSpec((1, S, D), lambda b: (b, 0, 0)),     # embedded inputs
                ] + [_rep_spec(w.shape) for w in weight_args]

    VP = kp["fcw"].shape[1]
    out_shape = tuple([jax.ShapeDtypeStruct((Bq, S, VP), jnp.float32)]
                      + [jax.ShapeDtypeStruct((Bq, H, S, S), jnp.float32)] * NUM_LAYERS)
    out_specs = tuple([pl.BlockSpec((1, S, VP), lambda b: (b, 0, 0))]
                      + [pl.BlockSpec((1, H, S, S), lambda b: (b, 0, 0, 0))] * NUM_LAYERS)

    outs = pl.pallas_call(
        kernel,
        out_shape=out_shape,
        grid_spec=pltpu.PrefetchScalarGridSpec(
            num_scalar_prefetch=0, grid=(Bq,),
            in_specs=in_specs, out_specs=out_specs),
        compiler_params=pltpu.CompilerParams(dimension_semantics=("parallel",)),
    )(tok3, x0, *weight_args)

    logits = outs[0][:, :, :VOCAB]                          # drop lane-padding columns
    weights = list(outs[1:])
    return logits, weights


# ---------------- glue: embeddings, params ----------------
def positional_embedding(S, d):
    # Matches DynamicPositionEmbedding formula.
    i = jnp.arange(d, dtype=jnp.float32)
    pos = jnp.arange(S, dtype=jnp.float32)
    rate = jnp.exp(-jnp.log(10000.0) * i / d) * jnp.exp(jnp.log(10000.0) / d * (i % 2))
    angle = pos[:, None] * rate[None, :] + 0.5 * jnp.pi * (i % 2)[None, :]
    return jnp.sin(angle)                                           # (S, d)


def mask_bias_from_tokens(tokens, pad_token):
    # look_ahead_mask = (trg == pad) | upper-triangular, as additive -1e9 bias (reference only).
    Bq, S = tokens.shape
    pad = (tokens == pad_token)[:, None, :]
    ii = jnp.arange(S)[:, None]
    jj = jnp.arange(S)[None, :]
    look = jnp.logical_or(pad, (jj > ii)[None])
    return look.astype(jnp.float32) * (-1e9)


def init_params(key):
    scale = 0.02
    keys = jax.random.split(key, 3 + NUM_LAYERS)
    emb = scale * jax.random.normal(keys[0], (VOCAB, D), jnp.float32)
    E = jax.random.normal(keys[1], (MAX_SEQ, DH), jnp.float32)      # relative embedding table
    fc_w = scale * jax.random.normal(keys[2], (D, VOCAB), jnp.float32)
    fc_b = jnp.zeros((1, VOCAB), jnp.float32)
    layers = []
    for l in range(NUM_LAYERS):
        ks = jax.random.split(keys[3 + l], 6)
        wq = scale * jax.random.normal(ks[0], (D, D), jnp.float32)
        wk = scale * jax.random.normal(ks[1], (D, D), jnp.float32)
        wv = scale * jax.random.normal(ks[2], (D, D), jnp.float32)
        wo = scale * jax.random.normal(ks[3], (D, D), jnp.float32)
        w1 = scale * jax.random.normal(ks[4], (D, D // 2), jnp.float32)
        w2 = scale * jax.random.normal(ks[5], (D // 2, D), jnp.float32)
        bq = jnp.zeros((1, D), jnp.float32)
        bk = jnp.zeros((1, D), jnp.float32)
        bv = jnp.zeros((1, D), jnp.float32)
        bo = jnp.zeros((1, D), jnp.float32)
        b1 = jnp.zeros((1, D // 2), jnp.float32)
        b2 = jnp.zeros((1, D), jnp.float32)
        g1 = jnp.ones((1, D), jnp.float32)
        be1 = jnp.zeros((1, D), jnp.float32)
        g2 = jnp.ones((1, D), jnp.float32)
        be2 = jnp.zeros((1, D), jnp.float32)
        layers.append((wq, bq, wk, bk, wv, bv, wo, bo,
                       w1, b1, w2, b2, g1, be1, g2, be2))
    return emb, E, fc_w, fc_b, layers


def prepare_kernel_params(params):
    """Stack per-layer weights, fuse QKV, flip E, pad the vocab projection, cast matmul weights to bf16."""
    emb, E, fc_w, fc_b, layers = params
    bf = jnp.bfloat16

    def stack(i):
        return jnp.stack([lp[i] for lp in layers], axis=0)

    kp = {}
    kp["wqkv"] = jnp.concatenate([stack(0), stack(2), stack(4)], axis=-1).astype(bf)  # (L, D, 3D)
    kp["bqkv"] = jnp.concatenate([stack(1), stack(3), stack(5)], axis=-1)             # (L, 1, 3D)
    kp["wo"] = stack(6).astype(bf)
    kp["bo"] = stack(7)
    kp["w1"] = stack(8).astype(bf)
    kp["b1"] = stack(9)
    kp["w2"] = stack(10).astype(bf)
    kp["b2"] = stack(11)
    kp["g1"], kp["be1"], kp["g2"], kp["be2"] = stack(12), stack(13), stack(14), stack(15)
    # eflipT[:, r] == E[S-1-r, :]  so  q @ eflipT gives q.E at relative offset r = i - j
    kp["eflipT"] = jnp.flip(E, axis=0).T.astype(bf)                                   # (DH, S)
    fcw_pad = jnp.zeros((D, VOCAB_PAD), jnp.float32).at[:, :VOCAB].set(fc_w)
    fcb_pad = jnp.zeros((1, VOCAB_PAD), jnp.float32).at[:, :VOCAB].set(fc_b)
    kp["fcw"] = fcw_pad.astype(bf)
    kp["fcb"] = fcb_pad
    return kp


# ---------------- pure-JAX reference (mirrors the PyTorch module, f32) ----------------
def _layernorm_ref(y, g, b):
    mu = jnp.mean(y, axis=-1, keepdims=True)
    var = jnp.mean((y - mu) ** 2, axis=-1, keepdims=True)
    return (y - mu) / jnp.sqrt(var + EPS) * g + b


def ref_forward(tokens, params):
    emb, E, fc_w, fc_b, layers = params
    Bq, S = tokens.shape
    hp = "highest"
    x = emb[tokens] * math.sqrt(D) + positional_embedding(S, D)[None]
    mb = mask_bias_from_tokens(tokens, PAD_TOKEN)
    for (wq, bq, wk, bk, wv, bv, wo, bo, w1, b1, w2, b2, g1, be1, g2, be2) in layers:
        def heads(y, w, b):
            z = jnp.einsum('bsd,de->bse', y, w, precision=hp) + b
            return z.reshape(Bq, S, H, DH).transpose(0, 2, 1, 3)
        q, k, v = heads(x, wq, bq), heads(x, wk, bk), heads(x, wv, bv)
        QE = jnp.einsum('bhld,md->bhlm', q, E, precision=hp)
        l_idx = jnp.arange(S)[:, None]
        m_idx = jnp.arange(S)[None, :]
        QE = jnp.where(m_idx >= S - 1 - l_idx, QE, 0.0)              # _qe_masking
        padded = jnp.pad(QE, ((0, 0), (0, 0), (0, 0), (1, 0)))       # _skewing
        Srel = padded.reshape(Bq, H, S + 1, S)[:, :, 1:, :]
        qkt = jnp.einsum('bhld,bhmd->bhlm', q, k, precision=hp)
        logits = (qkt + Srel) / math.sqrt(DH) + mb[:, None]
        attn = jax.nn.softmax(logits, axis=-1)
        ctx = jnp.einsum('bhlm,bhmd->bhld', attn, v, precision=hp)
        ctx = ctx.transpose(0, 2, 1, 3).reshape(Bq, S, D)
        attn_out = jnp.einsum('bsd,de->bse', ctx, wo, precision=hp) + bo
        out1 = _layernorm_ref(attn_out + x, g1, be1)
        ffn = jax.nn.relu(jnp.einsum('bsd,df->bsf', out1, w1, precision=hp) + b1)
        ffn = jnp.einsum('bsf,fd->bsd', ffn, w2, precision=hp) + b2
        x = _layernorm_ref(out1 + ffn, g2, be2)
    return jnp.einsum('bsd,dv->bsv', x, fc_w, precision=hp) + fc_b


# ---------------- main ----------------
if __name__ == "__main__":
    key = jax.random.PRNGKey(0)
    pkey, tkey = jax.random.split(key)
    params = init_params(pkey)
    kparams = prepare_kernel_params(params)
    tokens = jax.random.randint(tkey, (B, MAX_SEQ), 0, VOCAB - 1, dtype=jnp.int32)
    tokens = tokens.at[0, -2:].set(PAD_TOKEN)   # exercise the pad part of the mask

    logits, weights = music_transformer_forward(tokens, params, kparams)
    logits = jax.block_until_ready(logits)
    weights = [jax.block_until_ready(w) for w in weights]

    ref = jax.block_until_ready(ref_forward(tokens, params))
    err = float(jnp.max(jnp.abs(logits - ref)))

    assert logits.shape == (B, MAX_SEQ, VOCAB), logits.shape
    assert all(w.shape == (B, H, MAX_SEQ, MAX_SEQ) for w in weights)
    assert bool(jnp.all(jnp.isfinite(logits))), "non-finite output"
    assert all(bool(jnp.all(jnp.isfinite(w))) for w in weights), "non-finite attention weights"
    # tolerance covers bf16 MXU matmuls vs the f32 'highest' reference
    assert err < 5e-2, f"mismatch vs reference: {err}"
    print("KERNEL_OK")
</pallas_src>

<mosaic_0001>
module attributes {stable_mosaic.version = 11 : i64} {
  func.func @_mt_fwd_kernel(%arg0: i32, %arg1: memref<1x1x16xi32, #tpu.memory_space<vmem>>, %arg2: memref<1x16x128xf32, #tpu.memory_space<vmem>>, %arg3: memref<2x128x384xbf16, #tpu.memory_space<vmem>>, %arg4: memref<2x1x384xf32, #tpu.memory_space<vmem>>, %arg5: memref<2x128x128xbf16, #tpu.memory_space<vmem>>, %arg6: memref<2x1x128xf32, #tpu.memory_space<vmem>>, %arg7: memref<2x128x64xbf16, #tpu.memory_space<vmem>>, %arg8: memref<2x1x64xf32, #tpu.memory_space<vmem>>, %arg9: memref<2x64x128xbf16, #tpu.memory_space<vmem>>, %arg10: memref<2x1x128xf32, #tpu.memory_space<vmem>>, %arg11: memref<2x1x128xf32, #tpu.memory_space<vmem>>, %arg12: memref<2x1x128xf32, #tpu.memory_space<vmem>>, %arg13: memref<2x1x128xf32, #tpu.memory_space<vmem>>, %arg14: memref<2x1x128xf32, #tpu.memory_space<vmem>>, %arg15: memref<64x16xbf16, #tpu.memory_space<vmem>>, %arg16: memref<128x128xbf16, #tpu.memory_space<vmem>>, %arg17: memref<1x128xf32, #tpu.memory_space<vmem>>, %arg18: memref<1x16x128xf32, #tpu.memory_space<vmem>>, %arg19: memref<1x2x16x16xf32, #tpu.memory_space<vmem>>, %arg20: memref<1x2x16x16xf32, #tpu.memory_space<vmem>>) attributes {dimension_semantics = [#tpu.dimension_semantics<parallel>], iteration_bounds = array<i64: 2>, scalar_prefetch = 0 : i64, scratch_operands = 0 : i64, tpu.core_type = #tpu.core_type<tc>, window_params = [{transform_indices = @transform_0, window_bounds = array<i64: 1, 1, 16>}, {transform_indices = @transform_1, window_bounds = array<i64: 1, 16, 128>}, {pipeline_mode = #tpu.pipeline_mode<synchronous>, transform_indices = @transform_2, window_bounds = array<i64: 2, 128, 384>}, {pipeline_mode = #tpu.pipeline_mode<synchronous>, transform_indices = @transform_3, window_bounds = array<i64: 2, 1, 384>}, {pipeline_mode = #tpu.pipeline_mode<synchronous>, transform_indices = @transform_4, window_bounds = array<i64: 2, 128, 128>}, {pipeline_mode = #tpu.pipeline_mode<synchronous>, transform_indices = @transform_5, window_bounds = array<i64: 2, 1, 128>}, {pipeline_mode = #tpu.pipeline_mode<synchronous>, transform_indices = @transform_6, window_bounds = array<i64: 2, 128, 64>}, {pipeline_mode = #tpu.pipeline_mode<synchronous>, transform_indices = @transform_7, window_bounds = array<i64: 2, 1, 64>}, {pipeline_mode = #tpu.pipeline_mode<synchronous>, transform_indices = @transform_8, window_bounds = array<i64: 2, 64, 128>}, {pipeline_mode = #tpu.pipeline_mode<synchronous>, transform_indices = @transform_9, window_bounds = array<i64: 2, 1, 128>}, {pipeline_mode = #tpu.pipeline_mode<synchronous>, transform_indices = @transform_10, window_bounds = array<i64: 2, 1, 128>}, {pipeline_mode = #tpu.pipeline_mode<synchronous>, transform_indices = @transform_11, window_bounds = array<i64: 2, 1, 128>}, {pipeline_mode = #tpu.pipeline_mode<synchronous>, transform_indices = @transform_12, window_bounds = array<i64: 2, 1, 128>}, {pipeline_mode = #tpu.pipeline_mode<synchronous>, transform_indices = @transform_13, window_bounds = array<i64: 2, 1, 128>}, {pipeline_mode = #tpu.pipeline_mode<synchronous>, transform_indices = @transform_14, window_bounds = array<i64: 64, 16>}, {pipeline_mode = #tpu.pipeline_mode<synchronous>, transform_indices = @transform_15, window_bounds = array<i64: 128, 128>}, {pipeline_mode = #tpu.pipeline_mode<synchronous>, transform_indices = @transform_16, window_bounds = array<i64: 1, 128>}, {transform_indices = @transform_17, window_bounds = array<i64: 1, 16, 128>}, {transform_indices = @transform_18, window_bounds = array<i64: 1, 2, 16, 16>}, {transform_indices = @transform_19, window_bounds = array<i64: 1, 2, 16, 16>}]} {
    %c0 = arith.constant 0 : index
    %c0_0 = arith.constant 0 : index
    %c0_1 = arith.constant 0 : index
    %0 = vector.load %arg2[%c0, %c0_0, %c0_1] : memref<1x16x128xf32, #tpu.memory_space<vmem>>, vector<1x16x128xf32>
    %1 = vector.shape_cast %0 : vector<1x16x128xf32> to vector<16x128xf32>
    %c0_2 = arith.constant 0 : index
    %c0_3 = arith.constant 0 : index
    %c0_4 = arith.constant 0 : index
    %2 = vector.load %arg1[%c0_2, %c0_3, %c0_4] : memref<1x1x16xi32, #tpu.memory_space<vmem>>, vector<1x1x16xi32>
    %3 = vector.shape_cast %2 : vector<1x1x16xi32> to vector<1x16xi32>
    %4 = tpu.iota {dimensions = array<i32: 0>} : vector<16x16xi32>
    %5 = tpu.iota {dimensions = array<i32: 1>} : vector<16x16xi32>
    %6 = arith.cmpi sgt, %5, %4 : vector<16x16xi32>
    %7 = arith.extui %6 : vector<16x16xi1> to vector<16x16xi32>
    %8 = arith.sitofp %7 : vector<16x16xi32> to vector<16x16xf32>
    %c39_i32 = arith.constant 39 : i32
    %9 = vector.broadcast %c39_i32 : i32 to vector<1x16xi32>
    %10 = arith.cmpi eq, %3, %9 : vector<1x16xi32>
    %11 = arith.extui %10 : vector<1x16xi1> to vector<1x16xi32>
    %12 = arith.sitofp %11 : vector<1x16xi32> to vector<1x16xf32>
    %13 = vector.broadcast %12 : vector<1x16xf32> to vector<16x16xf32>
    %14 = arith.maximumf %8, %13 : vector<16x16xf32>
    %cst = arith.constant -1.000000e+09 : f32
    %15 = vector.broadcast %cst : f32 to vector<16x16xf32>
    %16 = arith.mulf %14, %15 : vector<16x16xf32>
    %17 = arith.subi %4, %5 : vector<16x16xi32>
    %c0_i32 = arith.constant 0 : i32
    %18 = vector.broadcast %c0_i32 : i32 to vector<16x16xi32>
    %19 = arith.cmpi eq, %17, %18 : vector<16x16xi32>
    %20 = arith.extui %19 : vector<16x16xi1> to vector<16x16xi32>
    %21 = arith.sitofp %20 : vector<16x16xi32> to vector<16x16xf32>
    %c1_i32 = arith.constant 1 : i32
    %22 = vector.broadcast %c1_i32 : i32 to vector<16x16xi32>
    %23 = arith.cmpi eq, %17, %22 : vector<16x16xi32>
    %24 = arith.extui %23 : vector<16x16xi1> to vector<16x16xi32>
    %25 = arith.sitofp %24 : vector<16x16xi32> to vector<16x16xf32>
    %c2_i32 = arith.constant 2 : i32
    %26 = vector.broadcast %c2_i32 : i32 to vector<16x16xi32>
    %27 = arith.cmpi eq, %17, %26 : vector<16x16xi32>
    %28 = arith.extui %27 : vector<16x16xi1> to vector<16x16xi32>
    %29 = arith.sitofp %28 : vector<16x16xi32> to vector<16x16xf32>
    %c3_i32 = arith.constant 3 : i32
    %30 = vector.broadcast %c3_i32 : i32 to vector<16x16xi32>
    %31 = arith.cmpi eq, %17, %30 : vector<16x16xi32>
    %32 = arith.extui %31 : vector<16x16xi1> to vector<16x16xi32>
    %33 = arith.sitofp %32 : vector<16x16xi32> to vector<16x16xf32>
    %c4_i32 = arith.constant 4 : i32
    %34 = vector.broadcast %c4_i32 : i32 to vector<16x16xi32>
    %35 = arith.cmpi eq, %17, %34 : vector<16x16xi32>
    %36 = arith.extui %35 : vector<16x16xi1> to vector<16x16xi32>
    %37 = arith.sitofp %36 : vector<16x16xi32> to vector<16x16xf32>
    %c5_i32 = arith.constant 5 : i32
    %38 = vector.broadcast %c5_i32 : i32 to vector<16x16xi32>
    %39 = arith.cmpi eq, %17, %38 : vector<16x16xi32>
    %40 = arith.extui %39 : vector<16x16xi1> to vector<16x16xi32>
    %41 = arith.sitofp %40 : vector<16x16xi32> to vector<16x16xf32>
    %c6_i32 = arith.constant 6 : i32
    %42 = vector.broadcast %c6_i32 : i32 to vector<16x16xi32>
    %43 = arith.cmpi eq, %17, %42 : vector<16x16xi32>
    %44 = arith.extui %43 : vector<16x16xi1> to vector<16x16xi32>
    %45 = arith.sitofp %44 : vector<16x16xi32> to vector<16x16xf32>
    %c7_i32 = arith.constant 7 : i32
    %46 = vector.broadcast %c7_i32 : i32 to vector<16x16xi32>
    %47 = arith.cmpi eq, %17, %46 : vector<16x16xi32>
    %48 = arith.extui %47 : vector<16x16xi1> to vector<16x16xi32>
    %49 = arith.sitofp %48 : vector<16x16xi32> to vector<16x16xf32>
    %c8_i32 = arith.constant 8 : i32
    %50 = vector.broadcast %c8_i32 : i32 to vector<16x16xi32>
    %51 = arith.cmpi eq, %17, %50 : vector<16x16xi32>
    %52 = arith.extui %51 : vector<16x16xi1> to vector<16x16xi32>
    %53 = arith.sitofp %52 : vector<16x16xi32> to vector<16x16xf32>
    %c9_i32 = arith.constant 9 : i32
    %54 = vector.broadcast %c9_i32 : i32 to vector<16x16xi32>
    %55 = arith.cmpi eq, %17, %54 : vector<16x16xi32>
    %56 = arith.extui %55 : vector<16x16xi1> to vector<16x16xi32>
    %57 = arith.sitofp %56 : vector<16x16xi32> to vector<16x16xf32>
    %c10_i32 = arith.constant 10 : i32
    %58 = vector.broadcast %c10_i32 : i32 to vector<16x16xi32>
    %59 = arith.cmpi eq, %17, %58 : vector<16x16xi32>
    %60 = arith.extui %59 : vector<16x16xi1> to vector<16x16xi32>
    %61 = arith.sitofp %60 : vector<16x16xi32> to vector<16x16xf32>
    %c11_i32 = arith.constant 11 : i32
    %62 = vector.broadcast %c11_i32 : i32 to vector<16x16xi32>
    %63 = arith.cmpi eq, %17, %62 : vector<16x16xi32>
    %64 = arith.extui %63 : vector<16x16xi1> to vector<16x16xi32>
    %65 = arith.sitofp %64 : vector<16x16xi32> to vector<16x16xf32>
    %c12_i32 = arith.constant 12 : i32
    %66 = vector.broadcast %c12_i32 : i32 to vector<16x16xi32>
    %67 = arith.cmpi eq, %17, %66 : vector<16x16xi32>
    %68 = arith.extui %67 : vector<16x16xi1> to vector<16x16xi32>
    %69 = arith.sitofp %68 : vector<16x16xi32> to vector<16x16xf32>
    %c13_i32 = arith.constant 13 : i32
    %70 = vector.broadcast %c13_i32 : i32 to vector<16x16xi32>
    %71 = arith.cmpi eq, %17, %70 : vector<16x16xi32>
    %72 = arith.extui %71 : vector<16x16xi1> to vector<16x16xi32>
    %73 = arith.sitofp %72 : vector<16x16xi32> to vector<16x16xf32>
    %c14_i32 = arith.constant 14 : i32
    %74 = vector.broadcast %c14_i32 : i32 to vector<16x16xi32>
    %75 = arith.cmpi eq, %17, %74 : vector<16x16xi32>
    %76 = arith.extui %75 : vector<16x16xi1> to vector<16x16xi32>
    %77 = arith.sitofp %76 : vector<16x16xi32> to vector<16x16xf32>
    %c15_i32 = arith.constant 15 : i32
    %78 = vector.broadcast %c15_i32 : i32 to vector<16x16xi32>
    %79 = arith.cmpi eq, %17, %78 : vector<16x16xi32>
    %80 = arith.extui %79 : vector<16x16xi1> to vector<16x16xi32>
    %81 = arith.sitofp %80 : vector<16x16xi32> to vector<16x16xf32>
    %c0_5 = arith.constant 0 : index
    %c0_6 = arith.constant 0 : index
    %82 = vector.load %arg15[%c0_5, %c0_6] : memref<64x16xbf16, #tpu.memory_space<vmem>>, vector<64x16xbf16>
    %83 = arith.truncf %1 : vector<16x128xf32> to vector<16x128xbf16>
    %c0_7 = arith.constant 0 : index
    %c0_8 = arith.constant 0 : index
    %c0_9 = arith.constant 0 : index
    %84 = vector.load %arg3[%c0_7, %c0_8, %c0_9] : memref<2x128x384xbf16, #tpu.memory_space<vmem>>, vector<1x128x384xbf16>
    %85 = vector.shape_cast %84 : vector<1x128x384xbf16> to vector<128x384xbf16>
    %cst_10 = arith.constant dense<0.000000e+00> : vector<16x384xf32>
    %86 = tpu.matmul %83, %85, %cst_10 {dimension_numbers = #tpu.dot_dimension_numbers<[1], [0], [0], [1], [0, 0, 1, 1], [], []>} : vector<16x128xbf16>, vector<128x384xbf16>, vector<16x384xf32> -> vector<16x384xf32>
    %c0_11 = arith.constant 0 : index
    %c0_12 = arith.constant 0 : index
    %c0_13 = arith.constant 0 : index
    %87 = vector.load %arg4[%c0_11, %c0_12, %c0_13] : memref<2x1x384xf32, #tpu.memory_space<vmem>>, vector<1x1x384xf32>
    %88 = vector.shape_cast %87 : vector<1x1x384xf32> to vector<1x384xf32>
    %89 = vector.broadcast %88 : vector<1x384xf32> to vector<16x384xf32>
    %90 = arith.addf %86, %89 : vector<16x384xf32>
    %91 = vector.extract_strided_slice %90 {offsets = [0, 0], sizes = [16, 64], strides = [1, 1]} : vector<16x384xf32> to vector<16x64xf32>
    %92 = vector.extract_strided_slice %90 {offsets = [0, 64], sizes = [16, 64], strides = [1, 1]} : vector<16x384xf32> to vector<16x64xf32>
    %93 = vector.shape_cast %91 : vector<16x64xf32> to vector<1x16x64xf32>
    %94 = vector.shape_cast %92 : vector<16x64xf32> to vector<1x16x64xf32>
    %95 = tpu.concatenate %93, %94 in 0 : vector<1x16x64xf32>, vector<1x16x64xf32> -> vector<2x16x64xf32>
    %96 = arith.truncf %95 : vector<2x16x64xf32> to vector<2x16x64xbf16>
    %97 = vector.extract_strided_slice %90 {offsets = [0, 128], sizes = [16, 64], strides = [1, 1]} : vector<16x384xf32> to vector<16x64xf32>
    %98 = vector.extract_strided_slice %90 {offsets = [0, 192], sizes = [16, 64], strides = [1, 1]} : vector<16x384xf32> to vector<16x64xf32>
    %99 = vector.shape_cast %97 : vector<16x64xf32> to vector<1x16x64xf32>
    %100 = vector.shape_cast %98 : vector<16x64xf32> to vector<1x16x64xf32>
    %101 = tpu.concatenate %99, %100 in 0 : vector<1x16x64xf32>, vector<1x16x64xf32> -> vector<2x16x64xf32>
    %102 = arith.truncf %101 : vector<2x16x64xf32> to vector<2x16x64xbf16>
    %103 = vector.extract_strided_slice %90 {offsets = [0, 256], sizes = [16, 64], strides = [1, 1]} : vector<16x384xf32> to vector<16x64xf32>
    %104 = vector.extract_strided_slice %90 {offsets = [0, 320], sizes = [16, 64], strides = [1, 1]} : vector<16x384xf32> to vector<16x64xf32>
    %105 = vector.shape_cast %103 : vector<16x64xf32> to vector<1x16x64xf32>
    %106 = vector.shape_cast %104 : vector<16x64xf32> to vector<1x16x64xf32>
    %107 = tpu.concatenate %105, %106 in 0 : vector<1x16x64xf32>, vector<1x16x64xf32> -> vector<2x16x64xf32>
    %108 = arith.truncf %107 : vector<2x16x64xf32> to vector<2x16x64xbf16>
    %cst_14 = arith.constant dense<0.000000e+00> : vector<2x16x16xf32>
    %109 = tpu.matmul %96, %102, %cst_14 {dimension_numbers = #tpu.dot_dimension_numbers<[2], [2], [1], [1], [0, 0, 0, 1, 1, 1], [0], [0]>} : vector<2x16x64xbf16>, vector<2x16x64xbf16>, vector<2x16x16xf32> -> vector<2x16x16xf32>
    %110 = vector.extract_strided_slice %96 {offsets = [0, 0, 0], sizes = [1, 16, 64], strides = [1, 1, 1]} : vector<2x16x64xbf16> to vector<1x16x64xbf16>
    %111 = vector.shape_cast %110 : vector<1x16x64xbf16> to vector<16x64xbf16>
    %cst_15 = arith.constant dense<0.000000e+00> : vector<16x16xf32>
    %112 = tpu.matmul %111, %82, %cst_15 {dimension_numbers = #tpu.dot_dimension_numbers<[1], [0], [0], [1], [0, 0, 1, 1], [], []>} : vector<16x64xbf16>, vector<64x16xbf16>, vector<16x16xf32> -> vector<16x16xf32>
    %113 = vector.extract_strided_slice %96 {offsets = [1, 0, 0], sizes = [1, 16, 64], strides = [1, 1, 1]} : vector<2x16x64xbf16> to vector<1x16x64xbf16>
    %114 = vector.shape_cast %113 : vector<1x16x64xbf16> to vector<16x64xbf16>
    %cst_16 = arith.constant dense<0.000000e+00> : vector<16x16xf32>
    %115 = tpu.matmul %114, %82, %cst_16 {dimension_numbers = #tpu.dot_dimension_numbers<[1], [0], [0], [1], [0, 0, 1, 1], [], []>} : vector<16x64xbf16>, vector<64x16xbf16>, vector<16x16xf32> -> vector<16x16xf32>
    %116 = vector.shape_cast %112 : vector<16x16xf32> to vector<1x16x16xf32>
    %117 = vector.shape_cast %115 : vector<16x16xf32> to vector<1x16x16xf32>
    %118 = tpu.concatenate %116, %117 in 0 : vector<1x16x16xf32>, vector<1x16x16xf32> -> vector<2x16x16xf32>
    %cst_17 = arith.constant 0.000000e+00 : f32
    %119 = vector.broadcast %cst_17 : f32 to vector<2x16x16xf32>
    %120 = vector.extract_strided_slice %118 {offsets = [0, 0, 0], sizes = [2, 16, 1], strides = [1, 1, 1]} : vector<2x16x16xf32> to vector<2x16x1xf32>
    %121 = vector.shape_cast %21 : vector<16x16xf32> to vector<1x16x16xf32>
    %122 = vector.broadcast %120 : vector<2x16x1xf32> to vector<2x16x16xf32>
    %123 = vector.broadcast %121 : vector<1x16x16xf32> to vector<2x16x16xf32>
    %124 = arith.mulf %122, %123 : vector<2x16x16xf32>
    %125 = arith.addf %119, %124 : vector<2x16x16xf32>
    %126 = vector.extract_strided_slice %118 {offsets = [0, 0, 1], sizes = [2, 16, 1], strides = [1, 1, 1]} : vector<2x16x16xf32> to vector<2x16x1xf32>
    %127 = vector.shape_cast %25 : vector<16x16xf32> to vector<1x16x16xf32>
    %128 = vector.broadcast %126 : vector<2x16x1xf32> to vector<2x16x16xf32>
    %129 = vector.broadcast %127 : vector<1x16x16xf32> to vector<2x16x16xf32>
    %130 = arith.mulf %128, %129 : vector<2x16x16xf32>
    %131 = arith.addf %125, %130 : vector<2x16x16xf32>
    %132 = vector.extract_strided_slice %118 {offsets = [0, 0, 2], sizes = [2, 16, 1], strides = [1, 1, 1]} : vector<2x16x16xf32> to vector<2x16x1xf32>
    %133 = vector.shape_cast %29 : vector<16x16xf32> to vector<1x16x16xf32>
    %134 = vector.broadcast %132 : vector<2x16x1xf32> to vector<2x16x16xf32>
    %135 = vector.broadcast %133 : vector<1x16x16xf32> to vector<2x16x16xf32>
    %136 = arith.mulf %134, %135 : vector<2x16x16xf32>
    %137 = arith.addf %131, %136 : vector<2x16x16xf32>
    %138 = vector.extract_strided_slice %118 {offsets = [0, 0, 3], sizes = [2, 16, 1], strides = [1, 1, 1]} : vector<2x16x16xf32> to vector<2x16x1xf32>
    %139 = vector.shape_cast %33 : vector<16x16xf32> to vector<1x16x16xf32>
    %140 = vector.broadcast %138 : vector<2x16x1xf32> to vector<2x16x16xf32>
    %141 = vector.broadcast %139 : vector<1x16x16xf32> to vector<2x16x16xf32>
    %142 = arith.mulf %140, %141 : vector<2x16x16xf32>
    %143 = arith.addf %137, %142 : vector<2x16x16xf32>
    %144 = vector.extract_strided_slice %118 {offsets = [0, 0, 4], sizes = [2, 16, 1], strides = [1, 1, 1]} : vector<2x16x16xf32> to vector<2x16x1xf32>
    %145 = vector.shape_cast %37 : vector<16x16xf32> to vector<1x16x16xf32>
    %146 = vector.broadcast %144 : vector<2x16x1xf32> to vector<2x16x16xf32>
    %147 = vector.broadcast %145 : vector<1x16x16xf32> to vector<2x16x16xf32>
    %148 = arith.mulf %146, %147 : vector<2x16x16xf32>
    %149 = arith.addf %143, %148 : vector<2x16x16xf32>
    %150 = vector.extract_strided_slice %118 {offsets = [0, 0, 5], sizes = [2, 16, 1], strides = [1, 1, 1]} : vector<2x16x16xf32> to vector<2x16x1xf32>
    %151 = vector.shape_cast %41 : vector<16x16xf32> to vector<1x16x16xf32>
    %152 = vector.broadcast %150 : vector<2x16x1xf32> to vector<2x16x16xf32>
    %153 = vector.broadcast %151 : vector<1x16x16xf32> to vector<2x16x16xf32>
    %154 = arith.mulf %152, %153 : vector<2x16x16xf32>
    %155 = arith.addf %149, %154 : vector<2x16x16xf32>
    %156 = vector.extract_strided_slice %118 {offsets = [0, 0, 6], sizes = [2, 16, 1], strides = [1, 1, 1]} : vector<2x16x16xf32> to vector<2x16x1xf32>
    %157 = vector.shape_cast %45 : vector<16x16xf32> to vector<1x16x16xf32>
    %158 = vector.broadcast %156 : vector<2x16x1xf32> to vector<2x16x16xf32>
    %159 = vector.broadcast %157 : vector<1x16x16xf32> to vector<2x16x16xf32>
    %160 = arith.mulf %158, %159 : vector<2x16x16xf32>
    %161 = arith.addf %155, %160 : vector<2x16x16xf32>
    %162 = vector.extract_strided_slice %118 {offsets = [0, 0, 7], sizes = [2, 16, 1], strides = [1, 1, 1]} : vector<2x16x16xf32> to vector<2x16x1xf32>
    %163 = vector.shape_cast %49 : vector<16x16xf32> to vector<1x16x16xf32>
    %164 = vector.broadcast %162 : vector<2x16x1xf32> to vector<2x16x16xf32>
    %165 = vector.broadcast %163 : vector<1x16x16xf32> to vector<2x16x16xf32>
    %166 = arith.mulf %164, %165 : vector<2x16x16xf32>
    %167 = arith.addf %161, %166 : vector<2x16x16xf32>
    %168 = vector.extract_strided_slice %118 {offsets = [0, 0, 8], sizes = [2, 16, 1], strides = [1, 1, 1]} : vector<2x16x16xf32> to vector<2x16x1xf32>
    %169 = vector.shape_cast %53 : vector<16x16xf32> to vector<1x16x16xf32>
    %170 = vector.broadcast %168 : vector<2x16x1xf32> to vector<2x16x16xf32>
    %171 = vector.broadcast %169 : vector<1x16x16xf32> to vector<2x16x16xf32>
    %172 = arith.mulf %170, %171 : vector<2x16x16xf32>
    %173 = arith.addf %167, %172 : vector<2x16x16xf32>
    %174 = vector.extract_strided_slice %118 {offsets = [0, 0, 9], sizes = [2, 16, 1], strides = [1, 1, 1]} : vector<2x16x16xf32> to vector<2x16x1xf32>
    %175 = vector.shape_cast %57 : vector<16x16xf32> to vector<1x16x16xf32>
    %176 = vector.broadcast %174 : vector<2x16x1xf32> to vector<2x16x16xf32>
    %177 = vector.broadcast %175 : vector<1x16x16xf32> to vector<2x16x16xf32>
    %178 = arith.mulf %176, %177 : vector<2x16x16xf32>
    %179 = arith.addf %173, %178 : vector<2x16x16xf32>
    %180 = vector.extract_strided_slice %118 {offsets = [0, 0, 10], sizes = [2, 16, 1], strides = [1, 1, 1]} : vector<2x16x16xf32> to vector<2x16x1xf32>
    %181 = vector.shape_cast %61 : vector<16x16xf32> to vector<1x16x16xf32>
    %182 = vector.broadcast %180 : vector<2x16x1xf32> to vector<2x16x16xf32>
    %183 = vector.broadcast %181 : vector<1x16x16xf32> to vector<2x16x16xf32>
    %184 = arith.mulf %182, %183 : vector<2x16x16xf32>
    %185 = arith.addf %179, %184 : vector<2x16x16xf32>
    %186 = vector.extract_strided_slice %118 {offsets = [0, 0, 11], sizes = [2, 16, 1], strides = [1, 1, 1]} : vector<2x16x16xf32> to vector<2x16x1xf32>
    %187 = vector.shape_cast %65 : vector<16x16xf32> to vector<1x16x16xf32>
    %188 = vector.broadcast %186 : vector<2x16x1xf32> to vector<2x16x16xf32>
    %189 = vector.broadcast %187 : vector<1x16x16xf32> to vector<2x16x16xf32>
    %190 = arith.mulf %188, %189 : vector<2x16x16xf32>
    %191 = arith.addf %185, %190 : vector<2x16x16xf32>
    %192 = vector.extract_strided_slice %118 {offsets = [0, 0, 12], sizes = [2, 16, 1], strides = [1, 1, 1]} : vector<2x16x16xf32> to vector<2x16x1xf32>
    %193 = vector.shape_cast %69 : vector<16x16xf32> to vector<1x16x16xf32>
    %194 = vector.broadcast %192 : vector<2x16x1xf32> to vector<2x16x16xf32>
    %195 = vector.broadcast %193 : vector<1x16x16xf32> to vector<2x16x16xf32>
    %196 = arith.mulf %194, %195 : vector<2x16x16xf32>
    %197 = arith.addf %191, %196 : vector<2x16x16xf32>
    %198 = vector.extract_strided_slice %118 {offsets = [0, 0, 13], sizes = [2, 16, 1], strides = [1, 1, 1]} : vector<2x16x16xf32> to vector<2x16x1xf32>
    %199 = vector.shape_cast %73 : vector<16x16xf32> to vector<1x16x16xf32>
    %200 = vector.broadcast %198 : vector<2x16x1xf32> to vector<2x16x16xf32>
    %201 = vector.broadcast %199 : vector<1x16x16xf32> to vector<2x16x16xf32>
    %202 = arith.mulf %200, %201 : vector<2x16x16xf32>
    %203 = arith.addf %197, %202 : vector<2x16x16xf32>
    %204 = vector.extract_strided_slice %118 {offsets = [0, 0, 14], sizes = [2, 16, 1], strides = [1, 1, 1]} : vector<2x16x16xf32> to vector<2x16x1xf32>
    %205 = vector.shape_cast %77 : vector<16x16xf32> to vector<1x16x16xf32>
    %206 = vector.broadcast %204 : vector<2x16x1xf32> to vector<2x16x16xf32>
    %207 = vector.broadcast %205 : vector<1x16x16xf32> to vector<2x16x16xf32>
    %208 = arith.mulf %206, %207 : vector<2x16x16xf32>
    %209 = arith.addf %203, %208 : vector<2x16x16xf32>
    %210 = vector.extract_strided_slice %118 {offsets = [0, 0, 15], sizes = [2, 16, 1], strides = [1, 1, 1]} : vector<2x16x16xf32> to vector<2x16x1xf32>
    %211 = vector.shape_cast %81 : vector<16x16xf32> to vector<1x16x16xf32>
    %212 = vector.broadcast %210 : vector<2x16x1xf32> to vector<2x16x16xf32>
    %213 = vector.broadcast %211 : vector<1x16x16xf32> to vector<2x16x16xf32>
    %214 = arith.mulf %212, %213 : vector<2x16x16xf32>
    %215 = arith.addf %209, %214 : vector<2x16x16xf32>
    %216 = arith.addf %109, %215 : vector<2x16x16xf32>
    %cst_18 = arith.constant 1.250000e-01 : f32
    %217 = vector.broadcast %cst_18 : f32 to vector<2x16x16xf32>
    %218 = arith.mulf %216, %217 : vector<2x16x16xf32>
    %219 = vector.shape_cast %16 : vector<16x16xf32> to vector<1x16x16xf32>
    %220 = vector.broadcast %219 : vector<1x16x16xf32> to vector<2x16x16xf32>
    %221 = arith.addf %218, %220 : vector<2x16x16xf32>
    %cst_19 = arith.constant dense<0xFF800000> : vector<2x16xf32>
    %222 = vector.multi_reduction <maximumf>, %221, %cst_19 [2] : vector<2x16x16xf32> to vector<2x16xf32>
    %223 = vector.shape_cast %222 : vector<2x16xf32> to vector<2x16x1xf32>
    %224 = vector.broadcast %223 : vector<2x16x1xf32> to vector<2x16x16xf32>
    %225 = arith.subf %221, %224 : vector<2x16x16xf32>
    %226 = math.exp %225 : vector<2x16x16xf32>
    %cst_20 = arith.constant dense<0.000000e+00> : vector<2x16xf32>
    %227 = vector.multi_reduction <add>, %226, %cst_20 [2] : vector<2x16x16xf32> to vector<2x16xf32>
    %228 = vector.shape_cast %227 : vector<2x16xf32> to vector<2x16x1xf32>
    %229 = tpu.reciprocal %228 {approx = true} : vector<2x16x1xf32> -> vector<2x16x1xf32>
    %230 = vector.broadcast %229 : vector<2x16x1xf32> to vector<2x16x16xf32>
    %231 = arith.mulf %226, %230 : vector<2x16x16xf32>
    %c0_21 = arith.constant 0 : index
    %c0_22 = arith.constant 0 : index
    %c0_23 = arith.constant 0 : index
    %c0_24 = arith.constant 0 : index
    %232 = vector.load %arg19[%c0_21, %c0_22, %c0_23, %c0_24] : memref<1x2x16x16xf32, #tpu.memory_space<vmem>>, vector<1x2x16x16xf32>
    %233 = vector.shape_cast %232 : vector<1x2x16x16xf32> to vector<2x16x16xf32>
    %234 = vector.shape_cast %231 : vector<2x16x16xf32> to vector<1x2x16x16xf32>
    tpu.vector_store %arg19[%c0_21, %c0_22, %c0_23, %c0_24], %234 {strides = array<i32>} : memref<1x2x16x16xf32, #tpu.memory_space<vmem>>, vector<1x2x16x16xf32>,
    %235 = arith.truncf %231 : vector<2x16x16xf32> to vector<2x16x16xbf16>
    %cst_25 = arith.constant dense<0.000000e+00> : vector<2x16x64xf32>
    %236 = tpu.matmul %235, %108, %cst_25 {dimension_numbers = #tpu.dot_dimension_numbers<[2], [1], [1], [2], [0, 0, 0, 1, 1, 2], [0], [0]>} : vector<2x16x16xbf16>, vector<2x16x64xbf16>, vector<2x16x64xf32> -> vector<2x16x64xf32>
    %c0_26 = arith.constant 0 : index
    %c0_27 = arith.constant 0 : index
    %c0_28 = arith.constant 0 : index
    %237 = vector.load %arg5[%c0_26, %c0_27, %c0_28] : memref<2x128x128xbf16, #tpu.memory_space<vmem>>, vector<1x128x128xbf16>
    %238 = vector.shape_cast %237 : vector<1x128x128xbf16> to vector<128x128xbf16>
    %c0_29 = arith.constant 0 : index
    %c0_30 = arith.constant 0 : index
    %c0_31 = arith.constant 0 : index
    %239 = vector.load %arg6[%c0_29, %c0_30, %c0_31] : memref<2x1x128xf32, #tpu.memory_space<vmem>>, vector<1x1x128xf32>
    %240 = vector.shape_cast %239 : vector<1x1x128xf32> to vector<1x128xf32>
    %241 = vector.extract_strided_slice %236 {offsets = [0, 0, 0], sizes = [1, 16, 64], strides = [1, 1, 1]} : vector<2x16x64xf32> to vector<1x16x64xf32>
    %242 = vector.shape_cast %241 : vector<1x16x64xf32> to vector<16x64xf32>
    %243 = arith.truncf %242 : vector<16x64xf32> to vector<16x64xbf16>
    %244 = vector.extract_strided_slice %238 {offsets = [0, 0], sizes = [64, 128], strides = [1, 1]} : vector<128x128xbf16> to vector<64x128xbf16>
    %cst_32 = arith.constant dense<0.000000e+00> : vector<16x128xf32>
    %245 = tpu.matmul %243, %244, %cst_32 {dimension_numbers = #tpu.dot_dimension_numbers<[1], [0], [0], [1], [0, 0, 1, 1], [], []>} : vector<16x64xbf16>, vector<64x128xbf16>, vector<16x128xf32> -> vector<16x128xf32>
    %246 = vector.broadcast %240 : vector<1x128xf32> to vector<16x128xf32>
    %247 = arith.addf %246, %245 : vector<16x128xf32>
    %248 = vector.extract_strided_slice %236 {offsets = [1, 0, 0], sizes = [1, 16, 64], strides = [1, 1, 1]} : vector<2x16x64xf32> to vector<1x16x64xf32>
    %249 = vector.shape_cast %248 : vector<1x16x64xf32> to vector<16x64xf32>
    %250 = arith.truncf %249 : vector<16x64xf32> to vector<16x64xbf16>
    %251 = vector.extract_strided_slice %238 {offsets = [64, 0], sizes = [64, 128], strides = [1, 1]} : vector<128x128xbf16> to vector<64x128xbf16>
    %cst_33 = arith.constant dense<0.000000e+00> : vector<16x128xf32>
    %252 = tpu.matmul %250, %251, %cst_33 {dimension_numbers = #tpu.dot_dimension_numbers<[1], [0], [0], [1], [0, 0, 1, 1], [], []>} : vector<16x64xbf16>, vector<64x128xbf16>, vector<16x128xf32> -> vector<16x128xf32>
    %253 = arith.addf %247, %252 : vector<16x128xf32>
    %254 = arith.addf %253, %1 : vector<16x128xf32>
    %cst_34 = arith.constant dense<0.000000e+00> : vector<16xf32>
    %255 = vector.multi_reduction <add>, %254, %cst_34 [1] : vector<16x128xf32> to vector<16xf32>
    %256 = vector.shape_cast %255 : vector<16xf32> to vector<16x1xf32>
    %cst_35 = arith.constant 1.280000e+02 : f32
    %257 = vector.broadcast %cst_35 : f32 to vector<16x1xf32>
    %258 = arith.divf %256, %257 : vector<16x1xf32>
    %259 = vector.broadcast %258 : vector<16x1xf32> to vector<16x128xf32>
    %260 = arith.subf %254, %259 : vector<16x128xf32>
    %261 = arith.mulf %260, %260 : vector<16x128xf32>
    %cst_36 = arith.constant dense<0.000000e+00> : vector<16xf32>
    %262 = vector.multi_reduction <add>, %261, %cst_36 [1] : vector<16x128xf32> to vector<16xf32>
    %263 = vector.shape_cast %262 : vector<16xf32> to vector<16x1xf32>
    %cst_37 = arith.constant 1.280000e+02 : f32
    %264 = vector.broadcast %cst_37 : f32 to vector<16x1xf32>
    %265 = arith.divf %263, %264 : vector<16x1xf32>
    %266 = vector.broadcast %258 : vector<16x1xf32> to vector<16x128xf32>
    %267 = arith.subf %254, %266 : vector<16x128xf32>
    %cst_38 = arith.constant 9.99999997E-7 : f32
    %268 = vector.broadcast %cst_38 : f32 to vector<16x1xf32>
    %269 = arith.addf %265, %268 : vector<16x1xf32>
    %270 = math.rsqrt %269 : vector<16x1xf32>
    %271 = vector.broadcast %270 : vector<16x1xf32> to vector<16x128xf32>
    %272 = arith.mulf %267, %271 : vector<16x128xf32>
    %c0_39 = arith.constant 0 : index
    %c0_40 = arith.constant 0 : index
    %c0_41 = arith.constant 0 : index
    %273 = vector.load %arg11[%c0_39, %c0_40, %c0_41] : memref<2x1x128xf32, #tpu.memory_space<vmem>>, vector<1x1x128xf32>
    %274 = vector.shape_cast %273 : vector<1x1x128xf32> to vector<1x128xf32>
    %275 = vector.broadcast %274 : vector<1x128xf32> to vector<16x128xf32>
    %276 = arith.mulf %272, %275 : vector<16x128xf32>
    %c0_42 = arith.constant 0 : index
    %c0_43 = arith.constant 0 : index
    %c0_44 = arith.constant 0 : index
    %277 = vector.load %arg12[%c0_42, %c0_43, %c0_44] : memref<2x1x128xf32, #tpu.memory_space<vmem>>, vector<1x1x128xf32>
    %278 = vector.shape_cast %277 : vector<1x1x128xf32> to vector<1x128xf32>
    %279 = vector.broadcast %278 : vector<1x128xf32> to vector<16x128xf32>
    %280 = arith.addf %276, %279 : vector<16x128xf32>
    %281 = arith.truncf %280 : vector<16x128xf32> to vector<16x128xbf16>
    %c0_45 = arith.constant 0 : index
    %c0_46 = arith.constant 0 : index
    %c0_47 = arith.constant 0 : index
    %282 = vector.load %arg7[%c0_45, %c0_46, %c0_47] : memref<2x128x64xbf16, #tpu.memory_space<vmem>>, vector<1x128x64xbf16>
    %283 = vector.shape_cast %282 : vector<1x128x64xbf16> to vector<128x64xbf16>
    %cst_48 = arith.constant dense<0.000000e+00> : vector<16x64xf32>
    %284 = tpu.matmul %281, %283, %cst_48 {dimension_numbers = #tpu.dot_dimension_numbers<[1], [0], [0], [1], [0, 0, 1, 1], [], []>} : vector<16x128xbf16>, vector<128x64xbf16>, vector<16x64xf32> -> vector<16x64xf32>
    %c0_49 = arith.constant 0 : index
    %c0_50 = arith.constant 0 : index
    %c0_51 = arith.constant 0 : index
    %285 = vector.load %arg8[%c0_49, %c0_50, %c0_51] : memref<2x1x64xf32, #tpu.memory_space<vmem>>, vector<1x1x64xf32>
    %286 = vector.shape_cast %285 : vector<1x1x64xf32> to vector<1x64xf32>
    %287 = vector.broadcast %286 : vector<1x64xf32> to vector<16x64xf32>
    %288 = arith.addf %284, %287 : vector<16x64xf32>
    %cst_52 = arith.constant 0.000000e+00 : f32
    %289 = vector.broadcast %cst_52 : f32 to vector<16x64xf32>
    %290 = arith.maximumf %288, %289 : vector<16x64xf32>
    %291 = arith.truncf %290 : vector<16x64xf32> to vector<16x64xbf16>
    %c0_53 = arith.constant 0 : index
    %c0_54 = arith.constant 0 : index
    %c0_55 = arith.constant 0 : index
    %292 = vector.load %arg9[%c0_53, %c0_54, %c0_55] : memref<2x64x128xbf16, #tpu.memory_space<vmem>>, vector<1x64x128xbf16>
    %293 = vector.shape_cast %292 : vector<1x64x128xbf16> to vector<64x128xbf16>
    %cst_56 = arith.constant dense<0.000000e+00> : vector<16x128xf32>
    %294 = tpu.matmul %291, %293, %cst_56 {dimension_numbers = #tpu.dot_dimension_numbers<[1], [0], [0], [1], [0, 0, 1, 1], [], []>} : vector<16x64xbf16>, vector<64x128xbf16>, vector<16x128xf32> -> vector<16x128xf32>
    %c0_57 = arith.constant 0 : index
    %c0_58 = arith.constant 0 : index
    %c0_59 = arith.constant 0 : index
    %295 = vector.load %arg10[%c0_57, %c0_58, %c0_59] : memref<2x1x128xf32, #tpu.memory_space<vmem>>, vector<1x1x128xf32>
    %296 = vector.shape_cast %295 : vector<1x1x128xf32> to vector<1x128xf32>
    %297 = vector.broadcast %296 : vector<1x128xf32> to vector<16x128xf32>
    %298 = arith.addf %294, %297 : vector<16x128xf32>
    %299 = arith.addf %280, %298 : vector<16x128xf32>
    %cst_60 = arith.constant dense<0.000000e+00> : vector<16xf32>
    %300 = vector.multi_reduction <add>, %299, %cst_60 [1] : vector<16x128xf32> to vector<16xf32>
    %301 = vector.shape_cast %300 : vector<16xf32> to vector<16x1xf32>
    %cst_61 = arith.constant 1.280000e+02 : f32
    %302 = vector.broadcast %cst_61 : f32 to vector<16x1xf32>
    %303 = arith.divf %301, %302 : vector<16x1xf32>
    %304 = vector.broadcast %303 : vector<16x1xf32> to vector<16x128xf32>
    %305 = arith.subf %299, %304 : vector<16x128xf32>
    %306 = arith.mulf %305, %305 : vector<16x128xf32>
    %cst_62 = arith.constant dense<0.000000e+00> : vector<16xf32>
    %307 = vector.multi_reduction <add>, %306, %cst_62 [1] : vector<16x128xf32> to vector<16xf32>
    %308 = vector.shape_cast %307 : vector<16xf32> to vector<16x1xf32>
    %cst_63 = arith.constant 1.280000e+02 : f32
    %309 = vector.broadcast %cst_63 : f32 to vector<16x1xf32>
    %310 = arith.divf %308, %309 : vector<16x1xf32>
    %311 = vector.broadcast %303 : vector<16x1xf32> to vector<16x128xf32>
    %312 = arith.subf %299, %311 : vector<16x128xf32>
    %cst_64 = arith.constant 9.99999997E-7 : f32
    %313 = vector.broadcast %cst_64 : f32 to vector<16x1xf32>
    %314 = arith.addf %310, %313 : vector<16x1xf32>
    %315 = math.rsqrt %314 : vector<16x1xf32>
    %316 = vector.broadcast %315 : vector<16x1xf32> to vector<16x128xf32>
    %317 = arith.mulf %312, %316 : vector<16x128xf32>
    %c0_65 = arith.constant 0 : index
    %c0_66 = arith.constant 0 : index
    %c0_67 = arith.constant 0 : index
    %318 = vector.load %arg13[%c0_65, %c0_66, %c0_67] : memref<2x1x128xf32, #tpu.memory_space<vmem>>, vector<1x1x128xf32>
    %319 = vector.shape_cast %318 : vector<1x1x128xf32> to vector<1x128xf32>
    %320 = vector.broadcast %319 : vector<1x128xf32> to vector<16x128xf32>
    %321 = arith.mulf %317, %320 : vector<16x128xf32>
    %c0_68 = arith.constant 0 : index
    %c0_69 = arith.constant 0 : index
    %c0_70 = arith.constant 0 : index
    %322 = vector.load %arg14[%c0_68, %c0_69, %c0_70] : memref<2x1x128xf32, #tpu.memory_space<vmem>>, vector<1x1x128xf32>
    %323 = vector.shape_cast %322 : vector<1x1x128xf32> to vector<1x128xf32>
    %324 = vector.broadcast %323 : vector<1x128xf32> to vector<16x128xf32>
    %325 = arith.addf %321, %324 : vector<16x128xf32>
    %326 = arith.truncf %325 : vector<16x128xf32> to vector<16x128xbf16>
    %c1 = arith.constant 1 : index
    %c0_71 = arith.constant 0 : index
    %c0_72 = arith.constant 0 : index
    %327 = vector.load %arg3[%c1, %c0_71, %c0_72] : memref<2x128x384xbf16, #tpu.memory_space<vmem>>, vector<1x128x384xbf16>
    %328 = vector.shape_cast %327 : vector<1x128x384xbf16> to vector<128x384xbf16>
    %cst_73 = arith.constant dense<0.000000e+00> : vector<16x384xf32>
    %329 = tpu.matmul %326, %328, %cst_73 {dimension_numbers = #tpu.dot_dimension_numbers<[1], [0], [0], [1], [0, 0, 1, 1], [], []>} : vector<16x128xbf16>, vector<128x384xbf16>, vector<16x384xf32> -> vector<16x384xf32>
    %c1_74 = arith.constant 1 : index
    %c0_75 = arith.constant 0 : index
    %c0_76 = arith.constant 0 : index
    %330 = vector.load %arg4[%c1_74, %c0_75, %c0_76] : memref<2x1x384xf32, #tpu.memory_space<vmem>>, vector<1x1x384xf32>
    %331 = vector.shape_cast %330 : vector<1x1x384xf32> to vector<1x384xf32>
    %332 = vector.broadcast %331 : vector<1x384xf32> to vector<16x384xf32>
    %333 = arith.addf %329, %332 : vector<16x384xf32>
    %334 = vector.extract_strided_slice %333 {offsets = [0, 0], sizes = [16, 64], strides = [1, 1]} : vector<16x384xf32> to vector<16x64xf32>
    %335 = vector.extract_strided_slice %333 {offsets = [0, 64], sizes = [16, 64], strides = [1, 1]} : vector<16x384xf32> to vector<16x64xf32>
    %336 = vector.shape_cast %334 : vector<16x64xf32> to vector<1x16x64xf32>
    %337 = vector.shape_cast %335 : vector<16x64xf32> to vector<1x16x64xf32>
    %338 = tpu.concatenate %336, %337 in 0 : vector<1x16x64xf32>, vector<1x16x64xf32> -> vector<2x16x64xf32>
    %339 = arith.truncf %338 : vector<2x16x64xf32> to vector<2x16x64xbf16>
    %340 = vector.extract_strided_slice %333 {offsets = [0, 128], sizes = [16, 64], strides = [1, 1]} : vector<16x384xf32> to vector<16x64xf32>
    %341 = vector.extract_strided_slice %333 {offsets = [0, 192], sizes = [16, 64], strides = [1, 1]} : vector<16x384xf32> to vector<16x64xf32>
    %342 = vector.shape_cast %340 : vector<16x64xf32> to vector<1x16x64xf32>
    %343 = vector.shape_cast %341 : vector<16x64xf32> to vector<1x16x64xf32>
    %344 = tpu.concatenate %342, %343 in 0 : vector<1x16x64xf32>, vector<1x16x64xf32> -> vector<2x16x64xf32>
    %345 = arith.truncf %344 : vector<2x16x64xf32> to vector<2x16x64xbf16>
    %346 = vector.extract_strided_slice %333 {offsets = [0, 256], sizes = [16, 64], strides = [1, 1]} : vector<16x384xf32> to vector<16x64xf32>
    %347 = vector.extract_strided_slice %333 {offsets = [0, 320], sizes = [16, 64], strides = [1, 1]} : vector<16x384xf32> to vector<16x64xf32>
    %348 = vector.shape_cast %346 : vector<16x64xf32> to vector<1x16x64xf32>
    %349 = vector.shape_cast %347 : vector<16x64xf32> to vector<1x16x64xf32>
    %350 = tpu.concatenate %348, %349 in 0 : vector<1x16x64xf32>, vector<1x16x64xf32> -> vector<2x16x64xf32>
    %351 = arith.truncf %350 : vector<2x16x64xf32> to vector<2x16x64xbf16>
    %cst_77 = arith.constant dense<0.000000e+00> : vector<2x16x16xf32>
    %352 = tpu.matmul %339, %345, %cst_77 {dimension_numbers = #tpu.dot_dimension_numbers<[2], [2], [1], [1], [0, 0, 0, 1, 1, 1], [0], [0]>} : vector<2x16x64xbf16>, vector<2x16x64xbf16>, vector<2x16x16xf32> -> vector<2x16x16xf32>
    %353 = vector.extract_strided_slice %339 {offsets = [0, 0, 0], sizes = [1, 16, 64], strides = [1, 1, 1]} : vector<2x16x64xbf16> to vector<1x16x64xbf16>
    %354 = vector.shape_cast %353 : vector<1x16x64xbf16> to vector<16x64xbf16>
    %cst_78 = arith.constant dense<0.000000e+00> : vector<16x16xf32>
    %355 = tpu.matmul %354, %82, %cst_78 {dimension_numbers = #tpu.dot_dimension_numbers<[1], [0], [0], [1], [0, 0, 1, 1], [], []>} : vector<16x64xbf16>, vector<64x16xbf16>, vector<16x16xf32> -> vector<16x16xf32>
    %356 = vector.extract_strided_slice %339 {offsets = [1, 0, 0], sizes = [1, 16, 64], strides = [1, 1, 1]} : vector<2x16x64xbf16> to vector<1x16x64xbf16>
    %357 = vector.shape_cast %356 : vector<1x16x64xbf16> to vector<16x64xbf16>
    %cst_79 = arith.constant dense<0.000000e+00> : vector<16x16xf32>
    %358 = tpu.matmul %357, %82, %cst_79 {dimension_numbers = #tpu.dot_dimension_numbers<[1], [0], [0], [1], [0, 0, 1, 1], [], []>} : vector<16x64xbf16>, vector<64x16xbf16>, vector<16x16xf32> -> vector<16x16xf32>
    %359 = vector.shape_cast %355 : vector<16x16xf32> to vector<1x16x16xf32>
    %360 = vector.shape_cast %358 : vector<16x16xf32> to vector<1x16x16xf32>
    %361 = tpu.concatenate %359, %360 in 0 : vector<1x16x16xf32>, vector<1x16x16xf32> -> vector<2x16x16xf32>
    %cst_80 = arith.constant 0.000000e+00 : f32
    %362 = vector.broadcast %cst_80 : f32 to vector<2x16x16xf32>
    %363 = vector.extract_strided_slice %361 {offsets = [0, 0, 0], sizes = [2, 16, 1], strides = [1, 1, 1]} : vector<2x16x16xf32> to vector<2x16x1xf32>
    %364 = vector.shape_cast %21 : vector<16x16xf32> to vector<1x16x16xf32>
    %365 = vector.broadcast %363 : vector<2x16x1xf32> to vector<2x16x16xf32>
    %366 = vector.broadcast %364 : vector<1x16x16xf32> to vector<2x16x16xf32>
    %367 = arith.mulf %365, %366 : vector<2x16x16xf32>
    %368 = arith.addf %362, %367 : vector<2x16x16xf32>
    %369 = vector.extract_strided_slice %361 {offsets = [0, 0, 1], sizes = [2, 16, 1], strides = [1, 1, 1]} : vector<2x16x16xf32> to vector<2x16x1xf32>
    %370 = vector.shape_cast %25 : vector<16x16xf32> to vector<1x16x16xf32>
    %371 = vector.broadcast %369 : vector<2x16x1xf32> to vector<2x16x16xf32>
    %372 = vector.broadcast %370 : vector<1x16x16xf32> to vector<2x16x16xf32>
    %373 = arith.mulf %371, %372 : vector<2x16x16xf32>
    %374 = arith.addf %368, %373 : vector<2x16x16xf32>
    %375 = vector.extract_strided_slice %361 {offsets = [0, 0, 2], sizes = [2, 16, 1], strides = [1, 1, 1]} : vector<2x16x16xf32> to vector<2x16x1xf32>
    %376 = vector.shape_cast %29 : vector<16x16xf32> to vector<1x16x16xf32>
    %377 = vector.broadcast %375 : vector<2x16x1xf32> to vector<2x16x16xf32>
    %378 = vector.broadcast %376 : vector<1x16x16xf32> to vector<2x16x16xf32>
    %379 = arith.mulf %377, %378 : vector<2x16x16xf32>
    %380 = arith.addf %374, %379 : vector<2x16x16xf32>
    %381 = vector.extract_strided_slice %361 {offsets = [0, 0, 3], sizes = [2, 16, 1], strides = [1, 1, 1]} : vector<2x16x16xf32> to vector<2x16x1xf32>
    %382 = vector.shape_cast %33 : vector<16x16xf32> to vector<1x16x16xf32>
    %383 = vector.broadcast %381 : vector<2x16x1xf32> to vector<2x16x16xf32>
    %384 = vector.broadcast %382 : vector<1x16x16xf32> to vector<2x16x16xf32>
    %385 = arith.mulf %383, %384 : vector<2x16x16xf32>
    %386 = arith.addf %380, %385 : vector<2x16x16xf32>
    %387 = vector.extract_strided_slice %361 {offsets = [0, 0, 4], sizes = [2, 16, 1], strides = [1, 1, 1]} : vector<2x16x16xf32> to vector<2x16x1xf32>
    %388 = vector.shape_cast %37 : vector<16x16xf32> to vector<1x16x16xf32>
    %389 = vector.broadcast %387 : vector<2x16x1xf32> to vector<2x16x16xf32>
    %390 = vector.broadcast %388 : vector<1x16x16xf32> to vector<2x16x16xf32>
    %391 = arith.mulf %389, %390 : vector<2x16x16xf32>
    %392 = arith.addf %386, %391 : vector<2x16x16xf32>
    %393 = vector.extract_strided_slice %361 {offsets = [0, 0, 5], sizes = [2, 16, 1], strides = [1, 1, 1]} : vector<2x16x16xf32> to vector<2x16x1xf32>
    %394 = vector.shape_cast %41 : vector<16x16xf32> to vector<1x16x16xf32>
    %395 = vector.broadcast %393 : vector<2x16x1xf32> to vector<2x16x16xf32>
    %396 = vector.broadcast %394 : vector<1x16x16xf32> to vector<2x16x16xf32>
    %397 = arith.mulf %395, %396 : vector<2x16x16xf32>
    %398 = arith.addf %392, %397 : vector<2x16x16xf32>
    %399 = vector.extract_strided_slice %361 {offsets = [0, 0, 6], sizes = [2, 16, 1], strides = [1, 1, 1]} : vector<2x16x16xf32> to vector<2x16x1xf32>
    %400 = vector.shape_cast %45 : vector<16x16xf32> to vector<1x16x16xf32>
    %401 = vector.broadcast %399 : vector<2x16x1xf32> to vector<2x16x16xf32>
    %402 = vector.broadcast %400 : vector<1x16x16xf32> to vector<2x16x16xf32>
    %403 = arith.mulf %401, %402 : vector<2x16x16xf32>
    %404 = arith.addf %398, %403 : vector<2x16x16xf32>
    %405 = vector.extract_strided_slice %361 {offsets = [0, 0, 7], sizes = [2, 16, 1], strides = [1, 1, 1]} : vector<2x16x16xf32> to vector<2x16x1xf32>
    %406 = vector.shape_cast %49 : vector<16x16xf32> to vector<1x16x16xf32>
    %407 = vector.broadcast %405 : vector<2x16x1xf32> to vector<2x16x16xf32>
    %408 = vector.broadcast %406 : vector<1x16x16xf32> to vector<2x16x16xf32>
    %409 = arith.mulf %407, %408 : vector<2x16x16xf32>
    %410 = arith.addf %404, %409 : vector<2x16x16xf32>
    %411 = vector.extract_strided_slice %361 {offsets = [0, 0, 8], sizes = [2, 16, 1], strides = [1, 1, 1]} : vector<2x16x16xf32> to vector<2x16x1xf32>
    %412 = vector.shape_cast %53 : vector<16x16xf32> to vector<1x16x16xf32>
    %413 = vector.broadcast %411 : vector<2x16x1xf32> to vector<2x16x16xf32>
    %414 = vector.broadcast %412 : vector<1x16x16xf32> to vector<2x16x16xf32>
    %415 = arith.mulf %413, %414 : vector<2x16x16xf32>
    %416 = arith.addf %410, %415 : vector<2x16x16xf32>
    %417 = vector.extract_strided_slice %361 {offsets = [0, 0, 9], sizes = [2, 16, 1], strides = [1, 1, 1]} : vector<2x16x16xf32> to vector<2x16x1xf32>
    %418 = vector.shape_cast %57 : vector<16x16xf32> to vector<1x16x16xf32>
    %419 = vector.broadcast %417 : vector<2x16x1xf32> to vector<2x16x16xf32>
    %420 = vector.broadcast %418 : vector<1x16x16xf32> to vector<2x16x16xf32>
    %421 = arith.mulf %419, %420 : vector<2x16x16xf32>
    %422 = arith.addf %416, %421 : vector<2x16x16xf32>
    %423 = vector.extract_strided_slice %361 {offsets = [0, 0, 10], sizes = [2, 16, 1], strides = [1, 1, 1]} : vector<2x16x16xf32> to vector<2x16x1xf32>
    %424 = vector.shape_cast %61 : vector<16x16xf32> to vector<1x16x16xf32>
    %425 = vector.broadcast %423 : vector<2x16x1xf32> to vector<2x16x16xf32>
    %426 = vector.broadcast %424 : vector<1x16x16xf32> to vector<2x16x16xf32>
    %427 = arith.mulf %425, %426 : vector<2x16x16xf32>
    %428 = arith.addf %422, %427 : vector<2x16x16xf32>
    %429 = vector.extract_strided_slice %361 {offsets = [0, 0, 11], sizes = [2, 16, 1], strides = [1, 1, 1]} : vector<2x16x16xf32> to vector<2x16x1xf32>
    %430 = vector.shape_cast %65 : vector<16x16xf32> to vector<1x16x16xf32>
    %431 = vector.broadcast %429 : vector<2x16x1xf32> to vector<2x16x16xf32>
    %432 = vector.broadcast %430 : vector<1x16x16xf32> to vector<2x16x16xf32>
    %433 = arith.mulf %431, %432 : vector<2x16x16xf32>
    %434 = arith.addf %428, %433 : vector<2x16x16xf32>
    %435 = vector.extract_strided_slice %361 {offsets = [0, 0, 12], sizes = [2, 16, 1], strides = [1, 1, 1]} : vector<2x16x16xf32> to vector<2x16x1xf32>
    %436 = vector.shape_cast %69 : vector<16x16xf32> to vector<1x16x16xf32>
    %437 = vector.broadcast %435 : vector<2x16x1xf32> to vector<2x16x16xf32>
    %438 = vector.broadcast %436 : vector<1x16x16xf32> to vector<2x16x16xf32>
    %439 = arith.mulf %437, %438 : vector<2x16x16xf32>
    %440 = arith.addf %434, %439 : vector<2x16x16xf32>
    %441 = vector.extract_strided_slice %361 {offsets = [0, 0, 13], sizes = [2, 16, 1], strides = [1, 1, 1]} : vector<2x16x16xf32> to vector<2x16x1xf32>
    %442 = vector.shape_cast %73 : vector<16x16xf32> to vector<1x16x16xf32>
    %443 = vector.broadcast %441 : vector<2x16x1xf32> to vector<2x16x16xf32>
    %444 = vector.broadcast %442 : vector<1x16x16xf32> to vector<2x16x16xf32>
    %445 = arith.mulf %443, %444 : vector<2x16x16xf32>
    %446 = arith.addf %440, %445 : vector<2x16x16xf32>
    %447 = vector.extract_strided_slice %361 {offsets = [0, 0, 14], sizes = [2, 16, 1], strides = [1, 1, 1]} : vector<2x16x16xf32> to vector<2x16x1xf32>
    %448 = vector.shape_cast %77 : vector<16x16xf32> to vector<1x16x16xf32>
    %449 = vector.broadcast %447 : vector<2x16x1xf32> to vector<2x16x16xf32>
    %450 = vector.broadcast %448 : vector<1x16x16xf32> to vector<2x16x16xf32>
    %451 = arith.mulf %449, %450 : vector<2x16x16xf32>
    %452 = arith.addf %446, %451 : vector<2x16x16xf32>
    %453 = vector.extract_strided_slice %361 {offsets = [0, 0, 15], sizes = [2, 16, 1], strides = [1, 1, 1]} : vector<2x16x16xf32> to vector<2x16x1xf32>
    %454 = vector.shape_cast %81 : vector<16x16xf32> to vector<1x16x16xf32>
    %455 = vector.broadcast %453 : vector<2x16x1xf32> to vector<2x16x16xf32>
    %456 = vector.broadcast %454 : vector<1x16x16xf32> to vector<2x16x16xf32>
    %457 = arith.mulf %455, %456 : vector<2x16x16xf32>
    %458 = arith.addf %452, %457 : vector<2x16x16xf32>
    %459 = arith.addf %352, %458 : vector<2x16x16xf32>
    %cst_81 = arith.constant 1.250000e-01 : f32
    %460 = vector.broadcast %cst_81 : f32 to vector<2x16x16xf32>
    %461 = arith.mulf %459, %460 : vector<2x16x16xf32>
    %462 = vector.shape_cast %16 : vector<16x16xf32> to vector<1x16x16xf32>
    %463 = vector.broadcast %462 : vector<1x16x16xf32> to vector<2x16x16xf32>
    %464 = arith.addf %461, %463 : vector<2x16x16xf32>
    %cst_82 = arith.constant dense<0xFF800000> : vector<2x16xf32>
    %465 = vector.multi_reduction <maximumf>, %464, %cst_82 [2] : vector<2x16x16xf32> to vector<2x16xf32>
    %466 = vector.shape_cast %465 : vector<2x16xf32> to vector<2x16x1xf32>
    %467 = vector.broadcast %466 : vector<2x16x1xf32> to vector<2x16x16xf32>
    %468 = arith.subf %464, %467 : vector<2x16x16xf32>
    %469 = math.exp %468 : vector<2x16x16xf32>
    %cst_83 = arith.constant dense<0.000000e+00> : vector<2x16xf32>
    %470 = vector.multi_reduction <add>, %469, %cst_83 [2] : vector<2x16x16xf32> to vector<2x16xf32>
    %471 = vector.shape_cast %470 : vector<2x16xf32> to vector<2x16x1xf32>
    %472 = tpu.reciprocal %471 {approx = true} : vector<2x16x1xf32> -> vector<2x16x1xf32>
    %473 = vector.broadcast %472 : vector<2x16x1xf32> to vector<2x16x16xf32>
    %474 = arith.mulf %469, %473 : vector<2x16x16xf32>
    %c0_84 = arith.constant 0 : index
    %c0_85 = arith.constant 0 : index
    %c0_86 = arith.constant 0 : index
    %c0_87 = arith.constant 0 : index
    %475 = vector.load %arg20[%c0_84, %c0_85, %c0_86, %c0_87] : memref<1x2x16x16xf32, #tpu.memory_space<vmem>>, vector<1x2x16x16xf32>
    %476 = vector.shape_cast %475 : vector<1x2x16x16xf32> to vector<2x16x16xf32>
    %477 = vector.shape_cast %474 : vector<2x16x16xf32> to vector<1x2x16x16xf32>
    tpu.vector_store %arg20[%c0_84, %c0_85, %c0_86, %c0_87], %477 {strides = array<i32>} : memref<1x2x16x16xf32, #tpu.memory_space<vmem>>, vector<1x2x16x16xf32>,
    %478 = arith.truncf %474 : vector<2x16x16xf32> to vector<2x16x16xbf16>
    %cst_88 = arith.constant dense<0.000000e+00> : vector<2x16x64xf32>
    %479 = tpu.matmul %478, %351, %cst_88 {dimension_numbers = #tpu.dot_dimension_numbers<[2], [1], [1], [2], [0, 0, 0, 1, 1, 2], [0], [0]>} : vector<2x16x16xbf16>, vector<2x16x64xbf16>, vector<2x16x64xf32> -> vector<2x16x64xf32>
    %c1_89 = arith.constant 1 : index
    %c0_90 = arith.constant 0 : index
    %c0_91 = arith.constant 0 : index
    %480 = vector.load %arg5[%c1_89, %c0_90, %c0_91] : memref<2x128x128xbf16, #tpu.memory_space<vmem>>, vector<1x128x128xbf16>
    %481 = vector.shape_cast %480 : vector<1x128x128xbf16> to vector<128x128xbf16>
    %c1_92 = arith.constant 1 : index
    %c0_93 = arith.constant 0 : index
    %c0_94 = arith.constant 0 : index
    %482 = vector.load %arg6[%c1_92, %c0_93, %c0_94] : memref<2x1x128xf32, #tpu.memory_space<vmem>>, vector<1x1x128xf32>
    %483 = vector.shape_cast %482 : vector<1x1x128xf32> to vector<1x128xf32>
    %484 = vector.extract_strided_slice %479 {offsets = [0, 0, 0], sizes = [1, 16, 64], strides = [1, 1, 1]} : vector<2x16x64xf32> to vector<1x16x64xf32>
    %485 = vector.shape_cast %484 : vector<1x16x64xf32> to vector<16x64xf32>
    %486 = arith.truncf %485 : vector<16x64xf32> to vector<16x64xbf16>
    %487 = vector.extract_strided_slice %481 {offsets = [0, 0], sizes = [64, 128], strides = [1, 1]} : vector<128x128xbf16> to vector<64x128xbf16>
    %cst_95 = arith.constant dense<0.000000e+00> : vector<16x128xf32>
    %488 = tpu.matmul %486, %487, %cst_95 {dimension_numbers = #tpu.dot_dimension_numbers<[1], [0], [0], [1], [0, 0, 1, 1], [], []>} : vector<16x64xbf16>, vector<64x128xbf16>, vector<16x128xf32> -> vector<16x128xf32>
    %489 = vector.broadcast %483 : vector<1x128xf32> to vector<16x128xf32>
    %490 = arith.addf %489, %488 : vector<16x128xf32>
    %491 = vector.extract_strided_slice %479 {offsets = [1, 0, 0], sizes = [1, 16, 64], strides = [1, 1, 1]} : vector<2x16x64xf32> to vector<1x16x64xf32>
    %492 = vector.shape_cast %491 : vector<1x16x64xf32> to vector<16x64xf32>
    %493 = arith.truncf %492 : vector<16x64xf32> to vector<16x64xbf16>
    %494 = vector.extract_strided_slice %481 {offsets = [64, 0], sizes = [64, 128], strides = [1, 1]} : vector<128x128xbf16> to vector<64x128xbf16>
    %cst_96 = arith.constant dense<0.000000e+00> : vector<16x128xf32>
    %495 = tpu.matmul %493, %494, %cst_96 {dimension_numbers = #tpu.dot_dimension_numbers<[1], [0], [0], [1], [0, 0, 1, 1], [], []>} : vector<16x64xbf16>, vector<64x128xbf16>, vector<16x128xf32> -> vector<16x128xf32>
    %496 = arith.addf %490, %495 : vector<16x128xf32>
    %497 = arith.addf %496, %325 : vector<16x128xf32>
    %cst_97 = arith.constant dense<0.000000e+00> : vector<16xf32>
    %498 = vector.multi_reduction <add>, %497, %cst_97 [1] : vector<16x128xf32> to vector<16xf32>
    %499 = vector.shape_cast %498 : vector<16xf32> to vector<16x1xf32>
    %cst_98 = arith.constant 1.280000e+02 : f32
    %500 = vector.broadcast %cst_98 : f32 to vector<16x1xf32>
    %501 = arith.divf %499, %500 : vector<16x1xf32>
    %502 = vector.broadcast %501 : vector<16x1xf32> to vector<16x128xf32>
    %503 = arith.subf %497, %502 : vector<16x128xf32>
    %504 = arith.mulf %503, %503 : vector<16x128xf32>
    %cst_99 = arith.constant dense<0.000000e+00> : vector<16xf32>
    %505 = vector.multi_reduction <add>, %504, %cst_99 [1] : vector<16x128xf32> to vector<16xf32>
    %506 = vector.shape_cast %505 : vector<16xf32> to vector<16x1xf32>
    %cst_100 = arith.constant 1.280000e+02 : f32
    %507 = vector.broadcast %cst_100 : f32 to vector<16x1xf32>
    %508 = arith.divf %506, %507 : vector<16x1xf32>
    %509 = vector.broadcast %501 : vector<16x1xf32> to vector<16x128xf32>
    %510 = arith.subf %497, %509 : vector<16x128xf32>
    %cst_101 = arith.constant 9.99999997E-7 : f32
    %511 = vector.broadcast %cst_101 : f32 to vector<16x1xf32>
    %512 = arith.addf %508, %511 : vector<16x1xf32>
    %513 = math.rsqrt %512 : vector<16x1xf32>
    %514 = vector.broadcast %513 : vector<16x1xf32> to vector<16x128xf32>
    %515 = arith.mulf %510, %514 : vector<16x128xf32>
    %c1_102 = arith.constant 1 : index
    %c0_103 = arith.constant 0 : index
    %c0_104 = arith.constant 0 : index
    %516 = vector.load %arg11[%c1_102, %c0_103, %c0_104] : memref<2x1x128xf32, #tpu.memory_space<vmem>>, vector<1x1x128xf32>
    %517 = vector.shape_cast %516 : vector<1x1x128xf32> to vector<1x128xf32>
    %518 = vector.broadcast %517 : vector<1x128xf32> to vector<16x128xf32>
    %519 = arith.mulf %515, %518 : vector<16x128xf32>
    %c1_105 = arith.constant 1 : index
    %c0_106 = arith.constant 0 : index
    %c0_107 = arith.constant 0 : index
    %520 = vector.load %arg12[%c1_105, %c0_106, %c0_107] : memref<2x1x128xf32, #tpu.memory_space<vmem>>, vector<1x1x128xf32>
    %521 = vector.shape_cast %520 : vector<1x1x128xf32> to vector<1x128xf32>
    %522 = vector.broadcast %521 : vector<1x128xf32> to vector<16x128xf32>
    %523 = arith.addf %519, %522 : vector<16x128xf32>
    %524 = arith.truncf %523 : vector<16x128xf32> to vector<16x128xbf16>
    %c1_108 = arith.constant 1 : index
    %c0_109 = arith.constant 0 : index
    %c0_110 = arith.constant 0 : index
    %525 = vector.load %arg7[%c1_108, %c0_109, %c0_110] : memref<2x128x64xbf16, #tpu.memory_space<vmem>>, vector<1x128x64xbf16>
    %526 = vector.shape_cast %525 : vector<1x128x64xbf16> to vector<128x64xbf16>
    %cst_111 = arith.constant dense<0.000000e+00> : vector<16x64xf32>
    %527 = tpu.matmul %524, %526, %cst_111 {dimension_numbers = #tpu.dot_dimension_numbers<[1], [0], [0], [1], [0, 0, 1, 1], [], []>} : vector<16x128xbf16>, vector<128x64xbf16>, vector<16x64xf32> -> vector<16x64xf32>
    %c1_112 = arith.constant 1 : index
    %c0_113 = arith.constant 0 : index
    %c0_114 = arith.constant 0 : index
    %528 = vector.load %arg8[%c1_112, %c0_113, %c0_114] : memref<2x1x64xf32, #tpu.memory_space<vmem>>, vector<1x1x64xf32>
    %529 = vector.shape_cast %528 : vector<1x1x64xf32> to vector<1x64xf32>
    %530 = vector.broadcast %529 : vector<1x64xf32> to vector<16x64xf32>
    %531 = arith.addf %527, %530 : vector<16x64xf32>
    %cst_115 = arith.constant 0.000000e+00 : f32
    %532 = vector.broadcast %cst_115 : f32 to vector<16x64xf32>
    %533 = arith.maximumf %531, %532 : vector<16x64xf32>
    %534 = arith.truncf %533 : vector<16x64xf32> to vector<16x64xbf16>
    %c1_116 = arith.constant 1 : index
    %c0_117 = arith.constant 0 : index
    %c0_118 = arith.constant 0 : index
    %535 = vector.load %arg9[%c1_116, %c0_117, %c0_118] : memref<2x64x128xbf16, #tpu.memory_space<vmem>>, vector<1x64x128xbf16>
    %536 = vector.shape_cast %535 : vector<1x64x128xbf16> to vector<64x128xbf16>
    %cst_119 = arith.constant dense<0.000000e+00> : vector<16x128xf32>
    %537 = tpu.matmul %534, %536, %cst_119 {dimension_numbers = #tpu.dot_dimension_numbers<[1], [0], [0], [1], [0, 0, 1, 1], [], []>} : vector<16x64xbf16>, vector<64x128xbf16>, vector<16x128xf32> -> vector<16x128xf32>
    %c1_120 = arith.constant 1 : index
    %c0_121 = arith.constant 0 : index
    %c0_122 = arith.constant 0 : index
    %538 = vector.load %arg10[%c1_120, %c0_121, %c0_122] : memref<2x1x128xf32, #tpu.memory_space<vmem>>, vector<1x1x128xf32>
    %539 = vector.shape_cast %538 : vector<1x1x128xf32> to vector<1x128xf32>
    %540 = vector.broadcast %539 : vector<1x128xf32> to vector<16x128xf32>
    %541 = arith.addf %537, %540 : vector<16x128xf32>
    %542 = arith.addf %523, %541 : vector<16x128xf32>
    %cst_123 = arith.constant dense<0.000000e+00> : vector<16xf32>
    %543 = vector.multi_reduction <add>, %542, %cst_123 [1] : vector<16x128xf32> to vector<16xf32>
    %544 = vector.shape_cast %543 : vector<16xf32> to vector<16x1xf32>
    %cst_124 = arith.constant 1.280000e+02 : f32
    %545 = vector.broadcast %cst_124 : f32 to vector<16x1xf32>
    %546 = arith.divf %544, %545 : vector<16x1xf32>
    %547 = vector.broadcast %546 : vector<16x1xf32> to vector<16x128xf32>
    %548 = arith.subf %542, %547 : vector<16x128xf32>
    %549 = arith.mulf %548, %548 : vector<16x128xf32>
    %cst_125 = arith.constant dense<0.000000e+00> : vector<16xf32>
    %550 = vector.multi_reduction <add>, %549, %cst_125 [1] : vector<16x128xf32> to vector<16xf32>
    %551 = vector.shape_cast %550 : vector<16xf32> to vector<16x1xf32>
    %cst_126 = arith.constant 1.280000e+02 : f32
    %552 = vector.broadcast %cst_126 : f32 to vector<16x1xf32>
    %553 = arith.divf %551, %552 : vector<16x1xf32>
    %554 = vector.broadcast %546 : vector<16x1xf32> to vector<16x128xf32>
    %555 = arith.subf %542, %554 : vector<16x128xf32>
    %cst_127 = arith.constant 9.99999997E-7 : f32
    %556 = vector.broadcast %cst_127 : f32 to vector<16x1xf32>
    %557 = arith.addf %553, %556 : vector<16x1xf32>
    %558 = math.rsqrt %557 : vector<16x1xf32>
    %559 = vector.broadcast %558 : vector<16x1xf32> to vector<16x128xf32>
    %560 = arith.mulf %555, %559 : vector<16x128xf32>
    %c1_128 = arith.constant 1 : index
    %c0_129 = arith.constant 0 : index
    %c0_130 = arith.constant 0 : index
    %561 = vector.load %arg13[%c1_128, %c0_129, %c0_130] : memref<2x1x128xf32, #tpu.memory_space<vmem>>, vector<1x1x128xf32>
    %562 = vector.shape_cast %561 : vector<1x1x128xf32> to vector<1x128xf32>
    %563 = vector.broadcast %562 : vector<1x128xf32> to vector<16x128xf32>
    %564 = arith.mulf %560, %563 : vector<16x128xf32>
    %c1_131 = arith.constant 1 : index
    %c0_132 = arith.constant 0 : index
    %c0_133 = arith.constant 0 : index
    %565 = vector.load %arg14[%c1_131, %c0_132, %c0_133] : memref<2x1x128xf32, #tpu.memory_space<vmem>>, vector<1x1x128xf32>
    %566 = vector.shape_cast %565 : vector<1x1x128xf32> to vector<1x128xf32>
    %567 = vector.broadcast %566 : vector<1x128xf32> to vector<16x128xf32>
    %568 = arith.addf %564, %567 : vector<16x128xf32>
    %569 = arith.truncf %568 : vector<16x128xf32> to vector<16x128xbf16>
    %c0_134 = arith.constant 0 : index
    %c0_135 = arith.constant 0 : index
    %570 = vector.load %arg16[%c0_134, %c0_135] : memref<128x128xbf16, #tpu.memory_space<vmem>>, vector<128x128xbf16>
    %cst_136 = arith.constant dense<0.000000e+00> : vector<16x128xf32>
    %571 = tpu.matmul %569, %570, %cst_136 {dimension_numbers = #tpu.dot_dimension_numbers<[1], [0], [0], [1], [0, 0, 1, 1], [], []>} : vector<16x128xbf16>, vector<128x128xbf16>, vector<16x128xf32> -> vector<16x128xf32>
    %c0_137 = arith.constant 0 : index
    %c0_138 = arith.constant 0 : index
    %572 = vector.load %arg17[%c0_137, %c0_138] : memref<1x128xf32, #tpu.memory_space<vmem>>, vector<1x128xf32>
    %573 = vector.broadcast %572 : vector<1x128xf32> to vector<16x128xf32>
    %574 = arith.addf %571, %573 : vector<16x128xf32>
    %c0_139 = arith.constant 0 : index
    %c0_140 = arith.constant 0 : index
    %c0_141 = arith.constant 0 : index
    %575 = vector.load %arg18[%c0_139, %c0_140, %c0_141] : memref<1x16x128xf32, #tpu.memory_space<vmem>>, vector<1x16x128xf32>
    %576 = vector.shape_cast %575 : vector<1x16x128xf32> to vector<16x128xf32>
    %577 = vector.shape_cast %574 : vector<16x128xf32> to vector<1x16x128xf32>
    tpu.vector_store %arg18[%c0_139, %c0_140, %c0_141], %577 {strides = array<i32>} : memref<1x16x128xf32, #tpu.memory_space<vmem>>, vector<1x16x128xf32>,
    return
  }
  func.func @transform_0(%arg0: i32) -> (i32, i32, i32) {
    %c0_i32 = arith.constant 0 : i32
    %c0_i32_0 = arith.constant 0 : i32
    %c0_i32_1 = arith.constant 0 : i32
    return %arg0, %c0_i32, %c0_i32_0 : i32, i32, i32
  }
  func.func @transform_1(%arg0: i32) -> (i32, i32, i32) {
    %c0_i32 = arith.constant 0 : i32
    %c0_i32_0 = arith.constant 0 : i32
    %c0_i32_1 = arith.constant 0 : i32
    return %arg0, %c0_i32, %c0_i32_0 : i32, i32, i32
  }
  func.func @transform_2(%arg0: i32) -> (i32, i32, i32) {
    %c0_i32 = arith.constant 0 : i32
    %c0_i32_0 = arith.constant 0 : i32
    %c0_i32_1 = arith.constant 0 : i32
    %c0_i32_2 = arith.constant 0 : i32
    return %c0_i32, %c0_i32_0, %c0_i32_1 : i32, i32, i32
  }
  func.func @transform_3(%arg0: i32) -> (i32, i32, i32) {
    %c0_i32 = arith.constant 0 : i32
    %c0_i32_0 = arith.constant 0 : i32
    %c0_i32_1 = arith.constant 0 : i32
    %c0_i32_2 = arith.constant 0 : i32
    return %c0_i32, %c0_i32_0, %c0_i32_1 : i32, i32, i32
  }
  func.func @transform_4(%arg0: i32) -> (i32, i32, i32) {
    %c0_i32 = arith.constant 0 : i32
    %c0_i32_0 = arith.constant 0 : i32
    %c0_i32_1 = arith.constant 0 : i32
    %c0_i32_2 = arith.constant 0 : i32
    return %c0_i32, %c0_i32_0, %c0_i32_1 : i32, i32, i32
  }
  func.func @transform_5(%arg0: i32) -> (i32, i32, i32) {
    %c0_i32 = arith.constant 0 : i32
    %c0_i32_0 = arith.constant 0 : i32
    %c0_i32_1 = arith.constant 0 : i32
    %c0_i32_2 = arith.constant 0 : i32
    return %c0_i32, %c0_i32_0, %c0_i32_1 : i32, i32, i32
  }
  func.func @transform_6(%arg0: i32) -> (i32, i32, i32) {
    %c0_i32 = arith.constant 0 : i32
    %c0_i32_0 = arith.constant 0 : i32
    %c0_i32_1 = arith.constant 0 : i32
    %c0_i32_2 = arith.constant 0 : i32
    return %c0_i32, %c0_i32_0, %c0_i32_1 : i32, i32, i32
  }
  func.func @transform_7(%arg0: i32) -> (i32, i32, i32) {
    %c0_i32 = arith.constant 0 : i32
    %c0_i32_0 = arith.constant 0 : i32
    %c0_i32_1 = arith.constant 0 : i32
    %c0_i32_2 = arith.constant 0 : i32
    return %c0_i32, %c0_i32_0, %c0_i32_1 : i32, i32, i32
  }
  func.func @transform_8(%arg0: i32) -> (i32, i32, i32) {
    %c0_i32 = arith.constant 0 : i32
    %c0_i32_0 = arith.constant 0 : i32
    %c0_i32_1 = arith.constant 0 : i32
    %c0_i32_2 = arith.constant 0 : i32
    return %c0_i32, %c0_i32_0, %c0_i32_1 : i32, i32, i32
  }
  func.func @transform_9(%arg0: i32) -> (i32, i32, i32) {
    %c0_i32 = arith.constant 0 : i32
    %c0_i32_0 = arith.constant 0 : i32
    %c0_i32_1 = arith.constant 0 : i32
    %c0_i32_2 = arith.constant 0 : i32
    return %c0_i32, %c0_i32_0, %c0_i32_1 : i32, i32, i32
  }
  func.func @transform_10(%arg0: i32) -> (i32, i32, i32) {
    %c0_i32 = arith.constant 0 : i32
    %c0_i32_0 = arith.constant 0 : i32
    %c0_i32_1 = arith.constant 0 : i32
    %c0_i32_2 = arith.constant 0 : i32
    return %c0_i32, %c0_i32_0, %c0_i32_1 : i32, i32, i32
  }
  func.func @transform_11(%arg0: i32) -> (i32, i32, i32) {
    %c0_i32 = arith.constant 0 : i32
    %c0_i32_0 = arith.constant 0 : i32
    %c0_i32_1 = arith.constant 0 : i32
    %c0_i32_2 = arith.constant 0 : i32
    return %c0_i32, %c0_i32_0, %c0_i32_1 : i32, i32, i32
  }
  func.func @transform_12(%arg0: i32) -> (i32, i32, i32) {
    %c0_i32 = arith.constant 0 : i32
    %c0_i32_0 = arith.constant 0 : i32
    %c0_i32_1 = arith.constant 0 : i32
    %c0_i32_2 = arith.constant 0 : i32
    return %c0_i32, %c0_i32_0, %c0_i32_1 : i32, i32, i32
  }
  func.func @transform_13(%arg0: i32) -> (i32, i32, i32) {
    %c0_i32 = arith.constant 0 : i32
    %c0_i32_0 = arith.constant 0 : i32
    %c0_i32_1 = arith.constant 0 : i32
    %c0_i32_2 = arith.constant 0 : i32
    return %c0_i32, %c0_i32_0, %c0_i32_1 : i32, i32, i32
  }
  func.func @transform_14(%arg0: i32) -> (i32, i32) {
    %c0_i32 = arith.constant 0 : i32
    %c0_i32_0 = arith.constant 0 : i32
    %c0_i32_1 = arith.constant 0 : i32
    return %c0_i32, %c0_i32_0 : i32, i32
  }
  func.func @transform_15(%arg0: i32) -> (i32, i32) {
    %c0_i32 = arith.constant 0 : i32
    %c0_i32_0 = arith.constant 0 : i32
    %c0_i32_1 = arith.constant 0 : i32
    return %c0_i32, %c0_i32_0 : i32, i32
  }
  func.func @transform_16(%arg0: i32) -> (i32, i32) {
    %c0_i32 = arith.constant 0 : i32
    %c0_i32_0 = arith.constant 0 : i32
    %c0_i32_1 = arith.constant 0 : i32
    return %c0_i32, %c0_i32_0 : i32, i32
  }
  func.func @transform_17(%arg0: i32) -> (i32, i32, i32) {
    %c0_i32 = arith.constant 0 : i32
    %c0_i32_0 = arith.constant 0 : i32
    %c0_i32_1 = arith.constant 0 : i32
    return %arg0, %c0_i32, %c0_i32_0 : i32, i32, i32
  }
  func.func @transform_18(%arg0: i32) -> (i32, i32, i32, i32) {
    %c0_i32 = arith.constant 0 : i32
    %c0_i32_0 = arith.constant 0 : i32
    %c0_i32_1 = arith.constant 0 : i32
    %c0_i32_2 = arith.constant 0 : i32
    return %arg0, %c0_i32, %c0_i32_0, %c0_i32_1 : i32, i32, i32, i32
  }
  func.func @transform_19(%arg0: i32) -> (i32, i32, i32, i32) {
    %c0_i32 = arith.constant 0 : i32
    %c0_i32_0 = arith.constant 0 : i32
    %c0_i32_1 = arith.constant 0 : i32
    %c0_i32_2 = arith.constant 0 : i32
    return %arg0, %c0_i32, %c0_i32_0, %c0_i32_1 : i32, i32, i32, i32
  }
}

</mosaic_0001>

<llo_original>
// kernel: tpu_custom_call.1
$region0: #{tpu_custom_call.1}
  #allocation0 [shape = 'u32[]', space=smem, size = 0x4, offset = 0x4, fixed_abs, tag = 'smem constant byte address 0x4 - core index']
  #allocation1 [shape = 'u32[144,128]{1,0:T(1,128)}', space=vmem, size = 0x12000, scoped, tag = 'internal scratch']
  %s0 = inlined_call_operand.hbm [shape: s32[2,1,16], index: 0, kind: input, shape index: {}]
  %s1 = inlined_call_operand.hbm [shape: f32[2,16,128], index: 1, kind: input, shape index: {}]
  %s2 = inlined_call_operand.hbm [shape: bf16[2,128,384], index: 2, kind: input, shape index: {}]
  %s3 = inlined_call_operand.hbm [shape: f32[2,1,384], index: 3, kind: input, shape index: {}]
  %s4 = inlined_call_operand.vmem [shape: bf16[2,128,128], index: 4, kind: input, shape index: {}]
  %s5 = inlined_call_operand.hbm [shape: f32[2,1,128], index: 5, kind: input, shape index: {}]
  %s6 = inlined_call_operand.vmem [shape: bf16[2,128,64], index: 6, kind: input, shape index: {}]
  %s7 = inlined_call_operand.hbm [shape: f32[2,1,64], index: 7, kind: input, shape index: {}]
  %s8 = inlined_call_operand.vmem [shape: bf16[2,64,128], index: 8, kind: input, shape index: {}]
  %s9 = inlined_call_operand.hbm [shape: f32[2,1,128], index: 9, kind: input, shape index: {}]
  %s10 = inlined_call_operand.hbm [shape: f32[2,1,128], index: 10, kind: input, shape index: {}]
  %s11 = inlined_call_operand.hbm [shape: f32[2,1,128], index: 11, kind: input, shape index: {}]
  %s12 = inlined_call_operand.hbm [shape: f32[2,1,128], index: 12, kind: input, shape index: {}]
  %s13 = inlined_call_operand.hbm [shape: f32[2,1,128], index: 13, kind: input, shape index: {}]
  %s14 = inlined_call_operand.vmem [shape: bf16[64,16], index: 14, kind: input, shape index: {}]
  %s15 = inlined_call_operand.vmem [shape: bf16[128,128], index: 15, kind: input, shape index: {}]
  %s16 = inlined_call_operand.vmem [shape: f32[1,128], index: 16, kind: input, shape index: {}]
  %s17 = inlined_call_operand.hbm [shape: f32[2,16,128], index: 17, kind: output, shape index: {0}]
  %s18 = inlined_call_operand.hbm [shape: f32[2,2,16,16], index: 18, kind: output, shape index: {1}]
  %s19 = inlined_call_operand.hbm [shape: f32[2,2,16,16], index: 19, kind: output, shape index: {2}]
  %20 = xla_tuple %s17, %s18, %s19
  %s21 = sld [smem:[#allocation0]]
  $region161: #{tpu_custom_call.1} parent=0
    _
  %s23 = ssub.s32 1, %s21
  %s24 = scalar_select 0, %s23, %s21
  $region1: #{tpu_custom_call.1} parent=0
    #allocation2 [shape = 'u8[1024]{0}', space=vmem, size = 0x400, scoped, tag = 'input window, operand 0']
    #allocation3 [shape = 's32[2]{0}', space=sflag, size = 0x8, scoped, tag = 'scoped memory for tpu_custom_call.1']
    #allocation4 [shape = 's32[2]{0}', space=sflag, size = 0x8, scoped, tag = 'scoped memory for tpu_custom_call.1']
    #allocation5 [shape = 'u8[16384]{0}', space=vmem, size = 0x4000, scoped, tag = 'input window, operand 1']
    #allocation6 [shape = 's32[2]{0}', space=sflag, size = 0x8, scoped, tag = 'scoped memory for tpu_custom_call.1']
    #allocation7 [shape = 'u8[196608]{0}', space=vmem, size = 0x30000, scoped, tag = 'input window, operand 2, single buffered']
    #allocation8 [shape = 'u8[3072]{0}', space=vmem, size = 0xc00, scoped, tag = 'input window, operand 3, single buffered']
    #allocation9 [shape = 's32[1]{0}', space=sflag, size = 0x4, scoped, tag = 'scoped memory for tpu_custom_call.1']
    #allocation10 [shape = 'u8[1024]{0}', space=vmem, size = 0x400, scoped, tag = 'input window, operand 5, single buffered']
    #allocation11 [shape = 'u8[1024]{0}', space=vmem, size = 0x400, scoped, tag = 'input window, operand 7, single buffered']
    #allocation12 [shape = 's32[1]{0}', space=sflag, size = 0x4, scoped, tag = 'scoped memory for tpu_custom_call.1']
    #allocation13 [shape = 'u8[1024]{0}', space=vmem, size = 0x400, scoped, tag = 'input window, operand 9, single buffered']
    #allocation14 [shape = 'u8[1024]{0}', space=vmem, size = 0x400, scoped, tag = 'input window, operand 10, single buffered']
    #allocation15 [shape = 's32[1]{0}', space=sflag, size = 0x4, scoped, tag = 'scoped memory for tpu_custom_call.1']
    #allocation16 [shape = 'u8[1024]{0}', space=vmem, size = 0x400, scoped, tag = 'input window, operand 11, single buffered']
    #allocation17 [shape = 'u8[1024]{0}', space=vmem, size = 0x400, scoped, tag = 'input window, operand 12, single buffered']
    #allocation18 [shape = 's32[1]{0}', space=sflag, size = 0x4, scoped, tag = 'scoped memory for tpu_custom_call.1']
    #allocation19 [shape = 'u8[1024]{0}', space=vmem, size = 0x400, scoped, tag = 'input window, operand 13, single buffered']
    #allocation20 [shape = 'u8[16384]{0}', space=vmem, size = 0x4000, scoped, tag = 'output window, operand 0']
    #allocation21 [shape = 'u8[32768]{0}', space=vmem, size = 0x8000, scoped, tag = 'output window, operand 1']
    #allocation22 [shape = 's32[2]{0}', space=sflag, size = 0x8, scoped, tag = 'scoped memory for tpu_custom_call.1']
    #allocation23 [shape = 'u8[32768]{0}', space=vmem, size = 0x8000, scoped, tag = 'output window, operand 2']
    %25 = vsyncpa [#allocation3], 0
    %s26 = scalar_lea.sflag [#allocation3], 1
    %27 = vsyncpa %s26, 0
    %28 = vsyncpa [#allocation6], 0
    %s29 = scalar_lea.sflag [#allocation6], 1
    %30 = vsyncpa %s29, 0
    %31 = vsyncpa [#allocation9], 0
    %32 = vsyncpa [#allocation12], 0
    %33 = vsyncpa [#allocation15], 0
    %34 = vsyncpa [#allocation18], 0
    %35 = vsyncpa [#allocation4], 0
    %s36 = scalar_lea.sflag [#allocation4], 1
    %37 = vsyncpa %s36, 0
    %38 = vsyncpa [#allocation22], 0
    %s39 = scalar_lea.sflag [#allocation22], 1
    %40 = vsyncpa %s39, 0
    loop: start=0, step=1, limit=4
    $region2: #{tpu_custom_call.1} parent=1 // loop_pre_header
      _
    $region3: #{tpu_custom_call.1} parent=1 // loop_header
      %s42 = sphi 0, %s46
      %p43 = scmp.ge.s32.totalorder %s42, 4
      %s52 = sphi 0, %s54
      %s55 = sphi 0, %s52
      %s56 = sphi 0, %s55
      %s72 = sphi 0, %s56
      %s78 = sphi 0, %s80
      %s81 = sphi 0, %s78
      %s82 = sphi 0, %s81
      %s98 = sphi 0, %s82
      %s102 = sphi 0, %s102
      %s104 = sphi 0, %s102
      %s105 = sphi 0, %s104
      %s119 = sphi 0, %s105
      %s123 = sphi 0, %s123
      %s125 = sphi 0, %s123
      %s126 = sphi 0, %s125
      %s140 = sphi 0, %s126
      %s144 = sphi 0, %s144
      %s146 = sphi 0, %s144
      %s147 = sphi 0, %s146
      %s161 = sphi 0, %s147
      %s165 = sphi 0, %s165
      %s167 = sphi 0, %s165
      %s168 = sphi 0, %s167
      %s182 = sphi 0, %s168
      %s186 = sphi 0, %s186
      %s188 = sphi 0, %s186
      %s189 = sphi 0, %s188
      %s203 = sphi 0, %s189
      %s207 = sphi 0, %s207
      %s209 = sphi 0, %s207
      %s210 = sphi 0, %s209
      %s224 = sphi 0, %s210
      %s228 = sphi 0, %s228
      %s230 = sphi 0, %s228
      %s231 = sphi 0, %s230
      %s245 = sphi 0, %s231
      %s249 = sphi 0, %s249
      %s251 = sphi 0, %s249
      %s252 = sphi 0, %s251
      %s266 = sphi 0, %s252
      %s270 = sphi 0, %s270
      %s272 = sphi 0, %s270
      %s273 = sphi 0, %s272
      %s287 = sphi 0, %s273
      %s291 = sphi 0, %s291
      %s293 = sphi 0, %s291
      %s294 = sphi 0, %s293
      %s308 = sphi 0, %s294
      %s312 = sphi 0, %s312
      %s314 = sphi 0, %s312
      %s315 = sphi 0, %s314
      %s329 = sphi 0, %s315
      %s333 = sphi 0, %s333
      %s335 = sphi 0, %s333
      %s336 = sphi 0, %s335
      %s350 = sphi 0, %s336
      %s354 = sphi 0, %s354
      %s356 = sphi 0, %s354
      %s357 = sphi 0, %s356
      %s371 = sphi 0, %s357
      %s375 = sphi 0, %s375
      %s377 = sphi 0, %s375
      %s378 = sphi 0, %s377
      %s392 = sphi 0, %s378
      %s396 = sphi 0, %s396
      %s398 = sphi 0, %s396
      %s399 = sphi 0, %s398
      %s413 = sphi 0, %s399
      %s419 = sphi 0, %s421
      %s422 = sphi 0, %s419
      %s423 = sphi 0, %s422
      %s439 = sphi 0, %s423
      %s445 = sphi 0, %s447
      %s448 = sphi 0, %s445
      %s449 = sphi 0, %s448
      %s465 = sphi 0, %s449
      %s471 = sphi 0, %s473
      %s474 = sphi 0, %s471
      %s475 = sphi 0, %s474
      %s491 = sphi 0, %s475
    $region4: #{tpu_custom_call.1} parent=1 // loop_header_branch
      %45 = sbr.rel (%p43) target = $region8
    $region5: #{tpu_custom_call.1} parent=1 // loop_body
      %s47 = ssub.s32 %s42, 1
      %s48 = ssub.s32 %s42, 2
      %s49 = sadd.s32 %s42, 1
      %s50 = ssub.s32 %s42, %s49
      %p51 = scmp.eq.s32.totalorder %s50, 0
      %s53 = sadd.s32 %s52, 1
      %s54 = scalar_select %p51, %s52, %s53
      %p57 = pneg %p51
      %p58 = scmp.eq.s32.totalorder %s42, 1
      %p59 = por %p57, %p58
      %p60 = scmp.ne.s32.totalorder %s52, %s55
      %p61 = scmp.eq.s32.totalorder %s42, 0
      %p62 = por %p60, %p61
      %p63 = scmp.ne.s32.totalorder %s52, %s55
      %p64 = scmp.eq.s32.totalorder %s47, 1
      %p65 = por %p63, %p64
      %p66 = scmp.ne.s32.totalorder %s55, %s56
      %p67 = scmp.eq.s32.totalorder %s47, 0
      %p68 = por %p66, %p67
      %p69 = scmp.ne.s32.totalorder %s55, %s56
      %p70 = scmp.eq.s32.totalorder %s48, 1
      %p71 = por %p69, %p70
      %p73 = scmp.ne.s32.totalorder %s56, %s72
      %p74 = scmp.eq.s32.totalorder %s48, 0
      %p75 = por %p73, %p74
      %s76 = ssub.s32 %s42, %s49
      %p77 = scmp.eq.s32.totalorder %s76, 0
      %s79 = sadd.s32 %s78, 1
      %s80 = scalar_select %p77, %s78, %s79
      %p83 = pneg %p77
      %p84 = scmp.eq.s32.totalorder %s42, 1
      %p85 = por %p83, %p84
      %p86 = scmp.ne.s32.totalorder %s78, %s81
      %p87 = scmp.eq.s32.totalorder %s42, 0
      %p88 = por %p86, %p87
      %p89 = scmp.ne.s32.totalorder %s78, %s81
      %p90 = scmp.eq.s32.totalorder %s47, 1
      %p91 = por %p89, %p90
      %p92 = scmp.ne.s32.totalorder %s81, %s82
      %p93 = scmp.eq.s32.totalorder %s47, 0
      %p94 = por %p92, %p93
      %p95 = scmp.ne.s32.totalorder %s81, %s82
      %p96 = scmp.eq.s32.totalorder %s48, 1
      %p97 = por %p95, %p96
      %p99 = scmp.ne.s32.totalorder %s82, %s98
      %p100 = scmp.eq.s32.totalorder %s48, 0
      %p101 = por %p99, %p100
      %s103 = sadd.s32 %s102, 1
      %p106 = scmp.eq.s32.totalorder %s42, 1
      %p107 = scmp.ne.s32.totalorder %s102, %s104
      %p108 = scmp.eq.s32.totalorder %s42, 0
      %p109 = por %p107, %p108
      %p110 = scmp.ne.s32.totalorder %s102, %s104
      %p111 = scmp.eq.s32.totalorder %s47, 1
      %p112 = por %p110, %p111
      %p113 = scmp.ne.s32.totalorder %s104, %s105
      %p114 = scmp.eq.s32.totalorder %s47, 0
      %p115 = por %p113, %p114
      %p116 = scmp.ne.s32.totalorder %s104, %s105
      %p117 = scmp.eq.s32.totalorder %s48, 1
      %p118 = por %p116, %p117
      %p120 = scmp.ne.s32.totalorder %s105, %s119
      %p121 = scmp.eq.s32.totalorder %s48, 0
      %p122 = por %p120, %p121
      %s124 = sadd.s32 %s123, 1
      %p127 = scmp.eq.s32.totalorder %s42, 1
      %p128 = scmp.ne.s32.totalorder %s123, %s125
      %p129 = scmp.eq.s32.totalorder %s42, 0
      %p130 = por %p128, %p129
      %p131 = scmp.ne.s32.totalorder %s123, %s125
      %p132 = scmp.eq.s32.totalorder %s47, 1
      %p133 = por %p131, %p132
      %p134 = scmp.ne.s32.totalorder %s125, %s126
      %p135 = scmp.eq.s32.totalorder %s47, 0
      %p136 = por %p134, %p135
      %p137 = scmp.ne.s32.totalorder %s125, %s126
      %p138 = scmp.eq.s32.totalorder %s48, 1
      %p139 = por %p137, %p138
      %p141 = scmp.ne.s32.totalorder %s126, %s140
      %p142 = scmp.eq.s32.totalorder %s48, 0
      %p143 = por %p141, %p142
      %s145 = sadd.s32 %s144, 1
      %p148 = scmp.eq.s32.totalorder %s42, 1
      %p149 = scmp.ne.s32.totalorder %s144, %s146
      %p150 = scmp.eq.s32.totalorder %s42, 0
      %p151 = por %p149, %p150
      %p152 = scmp.ne.s32.totalorder %s144, %s146
      %p153 = scmp.eq.s32.totalorder %s47, 1
      %p154 = por %p152, %p153
      %p155 = scmp.ne.s32.totalorder %s146, %s147
      %p156 = scmp.eq.s32.totalorder %s47, 0
      %p157 = por %p155, %p156
      %p158 = scmp.ne.s32.totalorder %s146, %s147
      %p159 = scmp.eq.s32.totalorder %s48, 1
      %p160 = por %p158, %p159
      %p162 = scmp.ne.s32.totalorder %s147, %s161
      %p163 = scmp.eq.s32.totalorder %s48, 0
      %p164 = por %p162, %p163
      %s166 = sadd.s32 %s165, 1
      %p169 = scmp.eq.s32.totalorder %s42, 1
      %p170 = scmp.ne.s32.totalorder %s165, %s167
      %p171 = scmp.eq.s32.totalorder %s42, 0
      %p172 = por %p170, %p171
      %p173 = scmp.ne.s32.totalorder %s165, %s167
      %p174 = scmp.eq.s32.totalorder %s47, 1
      %p175 = por %p173, %p174
      %p176 = scmp.ne.s32.totalorder %s167, %s168
      %p177 = scmp.eq.s32.totalorder %s47, 0
      %p178 = por %p176, %p177
      %p179 = scmp.ne.s32.totalorder %s167, %s168
      %p180 = scmp.eq.s32.totalorder %s48, 1
      %p181 = por %p179, %p180
      %p183 = scmp.ne.s32.totalorder %s168, %s182
      %p184 = scmp.eq.s32.totalorder %s48, 0
      %p185 = por %p183, %p184
      %s187 = sadd.s32 %s186, 1
      %p190 = scmp.eq.s32.totalorder %s42, 1
      %p191 = scmp.ne.s32.totalorder %s186, %s188
      %p192 = scmp.eq.s32.totalorder %s42, 0
      %p193 = por %p191, %p192
      %p194 = scmp.ne.s32.totalorder %s186, %s188
      %p195 = scmp.eq.s32.totalorder %s47, 1
      %p196 = por %p194, %p195
      %p197 = scmp.ne.s32.totalorder %s188, %s189
      %p198 = scmp.eq.s32.totalorder %s47, 0
      %p199 = por %p197, %p198
      %p200 = scmp.ne.s32.totalorder %s188, %s189
      %p201 = scmp.eq.s32.totalorder %s48, 1
      %p202 = por %p200, %p201
      %p204 = scmp.ne.s32.totalorder %s189, %s203
      %p205 = scmp.eq.s32.totalorder %s48, 0
      %p206 = por %p204, %p205
      %s208 = sadd.s32 %s207, 1
      %p211 = scmp.eq.s32.totalorder %s42, 1
      %p212 = scmp.ne.s32.totalorder %s207, %s209
      %p213 = scmp.eq.s32.totalorder %s42, 0
      %p214 = por %p212, %p213
      %p215 = scmp.ne.s32.totalorder %s207, %s209
      %p216 = scmp.eq.s32.totalorder %s47, 1
      %p217 = por %p215, %p216
      %p218 = scmp.ne.s32.totalorder %s209, %s210
      %p219 = scmp.eq.s32.totalorder %s47, 0
      %p220 = por %p218, %p219
      %p221 = scmp.ne.s32.totalorder %s209, %s210
      %p222 = scmp.eq.s32.totalorder %s48, 1
      %p223 = por %p221, %p222
      %p225 = scmp.ne.s32.totalorder %s210, %s224
      %p226 = scmp.eq.s32.totalorder %s48, 0
      %p227 = por %p225, %p226
      %s229 = sadd.s32 %s228, 1
      %p232 = scmp.eq.s32.totalorder %s42, 1
      %p233 = scmp.ne.s32.totalorder %s228, %s230
      %p234 = scmp.eq.s32.totalorder %s42, 0
      %p235 = por %p233, %p234
      %p236 = scmp.ne.s32.totalorder %s228, %s230
      %p237 = scmp.eq.s32.totalorder %s47, 1
      %p238 = por %p236, %p237
      %p239 = scmp.ne.s32.totalorder %s230, %s231
      %p240 = scmp.eq.s32.totalorder %s47, 0
      %p241 = por %p239, %p240
      %p242 = scmp.ne.s32.totalorder %s230, %s231
      %p243 = scmp.eq.s32.totalorder %s48, 1
      %p244 = por %p242, %p243
      %p246 = scmp.ne.s32.totalorder %s231, %s245
      %p247 = scmp.eq.s32.totalorder %s48, 0
      %p248 = por %p246, %p247
      %s250 = sadd.s32 %s249, 1
      %p253 = scmp.eq.s32.totalorder %s42, 1
      %p254 = scmp.ne.s32.totalorder %s249, %s251
      %p255 = scmp.eq.s32.totalorder %s42, 0
      %p256 = por %p254, %p255
      %p257 = scmp.ne.s32.totalorder %s249, %s251
      %p258 = scmp.eq.s32.totalorder %s47, 1
      %p259 = por %p257, %p258
      %p260 = scmp.ne.s32.totalorder %s251, %s252
      %p261 = scmp.eq.s32.totalorder %s47, 0
      %p262 = por %p260, %p261
      %p263 = scmp.ne.s32.totalorder %s251, %s252
      %p264 = scmp.eq.s32.totalorder %s48, 1
      %p265 = por %p263, %p264
      %p267 = scmp.ne.s32.totalorder %s252, %s266
      %p268 = scmp.eq.s32.totalorder %s48, 0
      %p269 = por %p267, %p268
      %s271 = sadd.s32 %s270, 1
      %p274 = scmp.eq.s32.totalorder %s42, 1
      %p275 = scmp.ne.s32.totalorder %s270, %s272
      %p276 = scmp.eq.s32.totalorder %s42, 0
      %p277 = por %p275, %p276
      %p278 = scmp.ne.s32.totalorder %s270, %s272
      %p279 = scmp.eq.s32.totalorder %s47, 1
      %p280 = por %p278, %p279
      %p281 = scmp.ne.s32.totalorder %s272, %s273
      %p282 = scmp.eq.s32.totalorder %s47, 0
      %p283 = por %p281, %p282
      %p284 = scmp.ne.s32.totalorder %s272, %s273
      %p285 = scmp.eq.s32.totalorder %s48, 1
      %p286 = por %p284, %p285
      %p288 = scmp.ne.s32.totalorder %s273, %s287
      %p289 = scmp.eq.s32.totalorder %s48, 0
      %p290 = por %p288, %p289
      %s292 = sadd.s32 %s291, 1
      %p295 = scmp.eq.s32.totalorder %s42, 1
      %p296 = scmp.ne.s32.totalorder %s291, %s293
      %p297 = scmp.eq.s32.totalorder %s42, 0
      %p298 = por %p296, %p297
      %p299 = scmp.ne.s32.totalorder %s291, %s293
      %p300 = scmp.eq.s32.totalorder %s47, 1
      %p301 = por %p299, %p300
      %p302 = scmp.ne.s32.totalorder %s293, %s294
      %p303 = scmp.eq.s32.totalorder %s47, 0
      %p304 = por %p302, %p303
      %p305 = scmp.ne.s32.totalorder %s293, %s294
      %p306 = scmp.eq.s32.totalorder %s48, 1
      %p307 = por %p305, %p306
      %p309 = scmp.ne.s32.totalorder %s294, %s308
      %p310 = scmp.eq.s32.totalorder %s48, 0
      %p311 = por %p309, %p310
      %s313 = sadd.s32 %s312, 1
      %p316 = scmp.eq.s32.totalorder %s42, 1
      %p317 = scmp.ne.s32.totalorder %s312, %s314
      %p318 = scmp.eq.s32.totalorder %s42, 0
      %p319 = por %p317, %p318
      %p320 = scmp.ne.s32.totalorder %s312, %s314
      %p321 = scmp.eq.s32.totalorder %s47, 1
      %p322 = por %p320, %p321
      %p323 = scmp.ne.s32.totalorder %s314, %s315
      %p324 = scmp.eq.s32.totalorder %s47, 0
      %p325 = por %p323, %p324
      %p326 = scmp.ne.s32.totalorder %s314, %s315
      %p327 = scmp.eq.s32.totalorder %s48, 1
      %p328 = por %p326, %p327
      %p330 = scmp.ne.s32.totalorder %s315, %s329
      %p331 = scmp.eq.s32.totalorder %s48, 0
      %p332 = por %p330, %p331
      %s334 = sadd.s32 %s333, 1
      %p337 = scmp.eq.s32.totalorder %s42, 1
      %p338 = scmp.ne.s32.totalorder %s333, %s335
      %p339 = scmp.eq.s32.totalorder %s42, 0
      %p340 = por %p338, %p339
      %p341 = scmp.ne.s32.totalorder %s333, %s335
      %p342 = scmp.eq.s32.totalorder %s47, 1
      %p343 = por %p341, %p342
      %p344 = scmp.ne.s32.totalorder %s335, %s336
      %p345 = scmp.eq.s32.totalorder %s47, 0
      %p346 = por %p344, %p345
      %p347 = scmp.ne.s32.totalorder %s335, %s336
      %p348 = scmp.eq.s32.totalorder %s48, 1
      %p349 = por %p347, %p348
      %p351 = scmp.ne.s32.totalorder %s336, %s350
      %p352 = scmp.eq.s32.totalorder %s48, 0
      %p353 = por %p351, %p352
      %s355 = sadd.s32 %s354, 1
      %p358 = scmp.eq.s32.totalorder %s42, 1
      %p359 = scmp.ne.s32.totalorder %s354, %s356
      %p360 = scmp.eq.s32.totalorder %s42, 0
      %p361 = por %p359, %p360
      %p362 = scmp.ne.s32.totalorder %s354, %s356
      %p363 = scmp.eq.s32.totalorder %s47, 1
      %p364 = por %p362, %p363
      %p365 = scmp.ne.s32.totalorder %s356, %s357
      %p366 = scmp.eq.s32.totalorder %s47, 0
      %p367 = por %p365, %p366
      %p368 = scmp.ne.s32.totalorder %s356, %s357
      %p369 = scmp.eq.s32.totalorder %s48, 1
      %p370 = por %p368, %p369
      %p372 = scmp.ne.s32.totalorder %s357, %s371
      %p373 = scmp.eq.s32.totalorder %s48, 0
      %p374 = por %p372, %p373
      %s376 = sadd.s32 %s375, 1
      %p379 = scmp.eq.s32.totalorder %s42, 1
      %p380 = scmp.ne.s32.totalorder %s375, %s377
      %p381 = scmp.eq.s32.totalorder %s42, 0
      %p382 = por %p380, %p381
      %p383 = scmp.ne.s32.totalorder %s375, %s377
      %p384 = scmp.eq.s32.totalorder %s47, 1
      %p385 = por %p383, %p384
      %p386 = scmp.ne.s32.totalorder %s377, %s378
      %p387 = scmp.eq.s32.totalorder %s47, 0
      %p388 = por %p386, %p387
      %p389 = scmp.ne.s32.totalorder %s377, %s378
      %p390 = scmp.eq.s32.totalorder %s48, 1
      %p391 = por %p389, %p390
      %p393 = scmp.ne.s32.totalorder %s378, %s392
      %p394 = scmp.eq.s32.totalorder %s48, 0
      %p395 = por %p393, %p394
      %s397 = sadd.s32 %s396, 1
      %p400 = scmp.eq.s32.totalorder %s42, 1
      %p401 = scmp.ne.s32.totalorder %s396, %s398
      %p402 = scmp.eq.s32.totalorder %s42, 0
      %p403 = por %p401, %p402
      %p404 = scmp.ne.s32.totalorder %s396, %s398
      %p405 = scmp.eq.s32.totalorder %s47, 1
      %p406 = por %p404, %p405
      %p407 = scmp.ne.s32.totalorder %s398, %s399
      %p408 = scmp.eq.s32.totalorder %s47, 0
      %p409 = por %p407, %p408
      %p410 = scmp.ne.s32.totalorder %s398, %s399
      %p411 = scmp.eq.s32.totalorder %s48, 1
      %p412 = por %p410, %p411
      %p414 = scmp.ne.s32.totalorder %s399, %s413
      %p415 = scmp.eq.s32.totalorder %s48, 0
      %p416 = por %p414, %p415
      %s417 = ssub.s32 %s42, %s49
      %p418 = scmp.eq.s32.totalorder %s417, 0
      %s420 = sadd.s32 %s419, 1
      %s421 = scalar_select %p418, %s419, %s420
      %p424 = pneg %p418
      %p425 = scmp.eq.s32.totalorder %s42, 1
      %p426 = por %p424, %p425
      %p427 = scmp.ne.s32.totalorder %s419, %s422
      %p428 = scmp.eq.s32.totalorder %s42, 0
      %p429 = por %p427, %p428
      %p430 = scmp.ne.s32.totalorder %s419, %s422
      %p431 = scmp.eq.s32.totalorder %s47, 1
      %p432 = por %p430, %p431
      %p433 = scmp.ne.s32.totalorder %s422, %s423
      %p434 = scmp.eq.s32.totalorder %s47, 0
      %p435 = por %p433, %p434
      %p436 = scmp.ne.s32.totalorder %s422, %s423
      %p437 = scmp.eq.s32.totalorder %s48, 1
      %p438 = por %p436, %p437
      %p440 = scmp.ne.s32.totalorder %s423, %s439
      %p441 = scmp.eq.s32.totalorder %s48, 0
      %p442 = por %p440, %p441
      %s443 = ssub.s32 %s42, %s49
      %p444 = scmp.eq.s32.totalorder %s443, 0
      %s446 = sadd.s32 %s445, 1
      %s447 = scalar_select %p444, %s445, %s446
      %p450 = pneg %p444
      %p451 = scmp.eq.s32.totalorder %s42, 1
      %p452 = por %p450, %p451
      %p453 = scmp.ne.s32.totalorder %s445, %s448
      %p454 = scmp.eq.s32.totalorder %s42, 0
      %p455 = por %p453, %p454
      %p456 = scmp.ne.s32.totalorder %s445, %s448
      %p457 = scmp.eq.s32.totalorder %s47, 1
      %p458 = por %p456, %p457
      %p459 = scmp.ne.s32.totalorder %s448, %s449
      %p460 = scmp.eq.s32.totalorder %s47, 0
      %p461 = por %p459, %p460
      %p462 = scmp.ne.s32.totalorder %s448, %s449
      %p463 = scmp.eq.s32.totalorder %s48, 1
      %p464 = por %p462, %p463
      %p466 = scmp.ne.s32.totalorder %s449, %s465
      %p467 = scmp.eq.s32.totalorder %s48, 0
      %p468 = por %p466, %p467
      %s469 = ssub.s32 %s42, %s49
      %p470 = scmp.eq.s32.totalorder %s469, 0
      %s472 = sadd.s32 %s471, 1
      %s473 = scalar_select %p470, %s471, %s472
      %p476 = pneg %p470
      %p477 = scmp.eq.s32.totalorder %s42, 1
      %p478 = por %p476, %p477
      %p479 = scmp.ne.s32.totalorder %s471, %s474
      %p480 = scmp.eq.s32.totalorder %s42, 0
      %p481 = por %p479, %p480
      %p482 = scmp.ne.s32.totalorder %s471, %s474
      %p483 = scmp.eq.s32.totalorder %s47, 1
      %p484 = por %p482, %p483
      %p485 = scmp.ne.s32.totalorder %s474, %s475
      %p486 = scmp.eq.s32.totalorder %s47, 0
      %p487 = por %p485, %p486
      %p488 = scmp.ne.s32.totalorder %s474, %s475
      %p489 = scmp.eq.s32.totalorder %s48, 1
      %p490 = por %p488, %p489
      %p492 = scmp.ne.s32.totalorder %s475, %s491
      %p493 = scmp.eq.s32.totalorder %s48, 0
      %p494 = por %p492, %p493
      %p495 = scmp.le.s32.totalorder 1, %s42
      %p496 = scmp.lt.s32.totalorder %s42, 3
      %p497 = pnand %p495, %p496
      %p498 = pneg %p497
      // Predicated region
      $region9: #{tpu_custom_call.1} parent=5 // pred_check
        _
      $region10: #{tpu_custom_call.1} parent=5 // pred_check_branch
        %500 = sbr.rel (%p497) target = $region12
      $region11: #{tpu_custom_call.1} parent=5 // pred_region
        %s501 = ssub.s32 %s42, 1
        // Predicated region
        $region13: #{tpu_custom_call.1} parent=11 // pred_check
          %p502 = pneg %p115
        $region14: #{tpu_custom_call.1} parent=11 // pred_check_branch
          %504 = sbr.rel (%p502) target = $region16
        $region15: #{tpu_custom_call.1} parent=11 // pred_region
          %s506 = ssub.s32 6144, 6144
          %507 = vsyncadd [#allocation6], %s506
          %s508 = sshll.u32 [#allocation7], 4
          %s509 = int_to_ptr.vmem [resolvable:$true] %s508
          %514 = dma.hbm_to_vmem [thread:$0]  %s2, 6144, %s509, [#allocation6], 192, 192, 12
        $region16: #{tpu_custom_call.1} parent=11 // pred_fallthru
          _
        // Predicated region
        $region17: #{tpu_custom_call.1} parent=11 // pred_check
          %p515 = pneg %p136
        $region18: #{tpu_custom_call.1} parent=11 // pred_check_branch
          %517 = sbr.rel (%p515) target = $region20
        $region19: #{tpu_custom_call.1} parent=11 // pred_region
          %s519 = ssub.s32 96, 96
          %520 = vsyncadd [#allocation9], %s519
          %s521 = sshll.u32 [#allocation8], 4
          %s522 = int_to_ptr.vmem [resolvable:$true] %s521
          %527 = dma.hbm_to_vmem [thread:$0]  %s3, 96, %s522, [#allocation9], 48, 48, 3
        $region20: #{tpu_custom_call.1} parent=11 // pred_fallthru
          _
        // Predicated region
        $region21: #{tpu_custom_call.1} parent=11 // pred_check
          %p528 = pneg %p157
        $region22: #{tpu_custom_call.1} parent=11 // pred_check_branch
          %530 = sbr.rel (%p528) target = $region24
        $region23: #{tpu_custom_call.1} parent=11 // pred_region
          _
        $region24: #{tpu_custom_call.1} parent=11 // pred_fallthru
          _
        // Predicated region
        $region25: #{tpu_custom_call.1} parent=11 // pred_check
          %p531 = pneg %p178
        $region26: #{tpu_custom_call.1} parent=11 // pred_check_branch
          %533 = sbr.rel (%p531) target = $region28
        $region27: #{tpu_custom_call.1} parent=11 // pred_region
          %s535 = ssub.s32 32, 32
          %536 = vsyncadd [#allocation9], %s535
          %s537 = sshll.u32 [#allocation10], 4
          %s538 = int_to_ptr.vmem [resolvable:$true] %s537
          %543 = dma.hbm_to_vmem [thread:$0]  %s5, 32, %s538, [#allocation9], 16, 16, 1
        $region28: #{tpu_custom_call.1} parent=11 // pred_fallthru
          _
        // Predicated region
        $region29: #{tpu_custom_call.1} parent=11 // pred_check
          %p544 = pneg %p199
        $region30: #{tpu_custom_call.1} parent=11 // pred_check_branch
          %546 = sbr.rel (%p544) target = $region32
        $region31: #{tpu_custom_call.1} parent=11 // pred_region
          _
        $region32: #{tpu_custom_call.1} parent=11 // pred_fallthru
          _
        // Predicated region
        $region33: #{tpu_custom_call.1} parent=11 // pred_check
          %p547 = pneg %p220
        $region34: #{tpu_custom_call.1} parent=11 // pred_check_branch
          %549 = sbr.rel (%p547) target = $region36
        $region35: #{tpu_custom_call.1} parent=11 // pred_region
          %s551 = ssub.s32 32, 32
          %552 = vsyncadd [#allocation12], %s551
          %s553 = sshll.u32 [#allocation11], 4
          %s554 = int_to_ptr.vmem [resolvable:$true] %s553
          %559 = dma.hbm_to_vmem [thread:$0]  %s7, 32, %s554, [#allocation12], 16, 16, 1
        $region36: #{tpu_custom_call.1} parent=11 // pred_fallthru
          _
        // Predicated region
        $region37: #{tpu_custom_call.1} parent=11 // pred_check
          %p560 = pneg %p241
        $region38: #{tpu_custom_call.1} parent=11 // pred_check_branch
          %562 = sbr.rel (%p560) target = $region40
        $region39: #{tpu_custom_call.1} parent=11 // pred_region
          _
        $region40: #{tpu_custom_call.1} parent=11 // pred_fallthru
          _
        // Predicated region
        $region41: #{tpu_custom_call.1} parent=11 // pred_check
          %p563 = pneg %p262
        $region42: #{tpu_custom_call.1} parent=11 // pred_check_branch
          %565 = sbr.rel (%p563) target = $region44
        $region43: #{tpu_custom_call.1} parent=11 // pred_region
          %s567 = ssub.s32 32, 32
          %568 = vsyncadd [#allocation12], %s567
          %s569 = sshll.u32 [#allocation13], 4
          %s570 = int_to_ptr.vmem [resolvable:$true] %s569
          %575 = dma.hbm_to_vmem [thread:$0]  %s9, 32, %s570, [#allocation12], 16, 16, 1
        $region44: #{tpu_custom_call.1} parent=11 // pred_fallthru
          _
        // Predicated region
        $region45: #{tpu_custom_call.1} parent=11 // pred_check
          %p576 = pneg %p283
        $region46: #{tpu_custom_call.1} parent=11 // pred_check_branch
          %578 = sbr.rel (%p576) target = $region48
        $region47: #{tpu_custom_call.1} parent=11 // pred_region
          %s580 = ssub.s32 32, 32
          %581 = vsyncadd [#allocation15], %s580
          %s582 = sshll.u32 [#allocation14], 4
          %s583 = int_to_ptr.vmem [resolvable:$true] %s582
          %588 = dma.hbm_to_vmem [thread:$0]  %s10, 32, %s583, [#allocation15], 16, 16, 1
        $region48: #{tpu_custom_call.1} parent=11 // pred_fallthru
          _
        // Predicated region
        $region49: #{tpu_custom_call.1} parent=11 // pred_check
          %p589 = pneg %p304
        $region50: #{tpu_custom_call.1} parent=11 // pred_check_branch
          %591 = sbr.rel (%p589) target = $region52
        $region51: #{tpu_custom_call.1} parent=11 // pred_region
          %s593 = ssub.s32 32, 32
          %594 = vsyncadd [#allocation15], %s593
          %s595 = sshll.u32 [#allocation16], 4
          %s596 = int_to_ptr.vmem [resolvable:$true] %s595
          %601 = dma.hbm_to_vmem [thread:$0]  %s11, 32, %s596, [#allocation15], 16, 16, 1
        $region52: #{tpu_custom_call.1} parent=11 // pred_fallthru
          _
        // Predicated region
        $region53: #{tpu_custom_call.1} parent=11 // pred_check
          %p602 = pneg %p325
        $region54: #{tpu_custom_call.1} parent=11 // pred_check_branch
          %604 = sbr.rel (%p602) target = $region56
        $region55: #{tpu_custom_call.1} parent=11 // pred_region
          %s606 = ssub.s32 32, 32
          %607 = vsyncadd [#allocation18], %s606
          %s608 = sshll.u32 [#allocation17], 4
          %s609 = int_to_ptr.vmem [resolvable:$true] %s608
          %614 = dma.hbm_to_vmem [thread:$0]  %s12, 32, %s609, [#allocation18], 16, 16, 1
        $region56: #{tpu_custom_call.1} parent=11 // pred_fallthru
          _
        // Predicated region
        $region57: #{tpu_custom_call.1} parent=11 // pred_check
          %p615 = pneg %p346
        $region58: #{tpu_custom_call.1} parent=11 // pred_check_branch
          %617 = sbr.rel (%p615) target = $region60
        $region59: #{tpu_custom_call.1} parent=11 // pred_region
          %s619 = ssub.s32 32, 32
          %620 = vsyncadd [#allocation18], %s619
          %s621 = sshll.u32 [#allocation19], 4
          %s622 = int_to_ptr.vmem [resolvable:$true] %s621
          %627 = dma.hbm_to_vmem [thread:$0]  %s13, 32, %s622, [#allocation18], 16, 16, 1
        $region60: #{tpu_custom_call.1} parent=11 // pred_fallthru
          _
        // Predicated region
        $region61: #{tpu_custom_call.1} parent=11 // pred_check
          %p628 = pneg %p367
        $region62: #{tpu_custom_call.1} parent=11 // pred_check_branch
          %630 = sbr.rel (%p628) target = $region64
        $region63: #{tpu_custom_call.1} parent=11 // pred_region
          _
        $region64: #{tpu_custom_call.1} parent=11 // pred_fallthru
          _
        // Predicated region
        $region65: #{tpu_custom_call.1} parent=11 // pred_check
          %p631 = pneg %p388
        $region66: #{tpu_custom_call.1} parent=11 // pred_check_branch
          %633 = sbr.rel (%p631) target = $region68
        $region67: #{tpu_custom_call.1} parent=11 // pred_region
          _
        $region68: #{tpu_custom_call.1} parent=11 // pred_fallthru
          _
        // Predicated region
        $region69: #{tpu_custom_call.1} parent=11 // pred_check
          %p634 = pneg %p409
        $region70: #{tpu_custom_call.1} parent=11 // pred_check_branch
          %636 = sbr.rel (%p634) target = $region72
        $region71: #{tpu_custom_call.1} parent=11 // pred_region
          _
        $region72: #{tpu_custom_call.1} parent=11 // pred_fallthru
          _
      $region12: #{tpu_custom_call.1} parent=5 // pred_fallthru
        _
      %p637 = scmp.lt.s32.totalorder %s42, 2
      // Predicated region
      $region73: #{tpu_custom_call.1} parent=5 // pred_check
        %p638 = pneg %p637
      $region74: #{tpu_custom_call.1} parent=5 // pred_check_branch
        %640 = sbr.rel (%p638) target = $region76
      $region75: #{tpu_custom_call.1} parent=5 // pred_region
        // Predicated region
        $region77: #{tpu_custom_call.1} parent=75 // pred_check
          %p641 = pneg %p62
        $region78: #{tpu_custom_call.1} parent=75 // pred_check_branch
          %643 = sbr.rel (%p641) target = $region80
        $region79: #{tpu_custom_call.1} parent=75 // pred_region
          %s644 = sand.u32 %s52, 1
          %s645 = scalar_lea.sflag [#allocation3], %s644
          %s646 = sand.u32 %s52, 1
          %s647 = scalar_lea.vmem [#allocation2], %s646
          %s649 = ssub.s32 16, 16
          %650 = vsyncadd %s645, %s649
          %s651 = smul.addr %s42, 16
          %s652 = scalar_lea.hbm %s0, %s651
          %s654 = sshll.u32 %s647, 4
          %s655 = int_to_ptr.vmem [resolvable:$true] %s654
          %657 = dma.hbm_to_vmem [thread:$0]  %s652, 16, %s655, %s645
        $region80: #{tpu_custom_call.1} parent=75 // pred_fallthru
          _
        // Predicated region
        $region81: #{tpu_custom_call.1} parent=75 // pred_check
          %p658 = pneg %p88
        $region82: #{tpu_custom_call.1} parent=75 // pred_check_branch
          %660 = sbr.rel (%p658) target = $region84
        $region83: #{tpu_custom_call.1} parent=75 // pred_region
          %s661 = sand.u32 %s42, 1
          %s662 = scalar_lea.sflag [#allocation6], %s661
          %s663 = sand.u32 %s78, 1
          %s664 = smul.addr %s663, 16
          %s665 = scalar_lea.vmem [#allocation5], %s664
          %s667 = ssub.s32 256, 256
          %668 = vsyncadd %s662, %s667
          %s669 = smul.addr %s42, 2
          %s670 = smul.addr %s669, 128
          %s671 = scalar_lea.hbm %s1, %s670
          %s672 = sshll.u32 %s665, 4
          %s673 = int_to_ptr.vmem [resolvable:$true] %s672
          %678 = dma.hbm_to_vmem [thread:$0]  %s671, 256, %s673, %s662, 128, 128, 8
        $region84: #{tpu_custom_call.1} parent=75 // pred_fallthru
          _
      $region76: #{tpu_custom_call.1} parent=5 // pred_fallthru
        _
      %p679 = scmp.le.s32.totalorder 1, %s42
      %p680 = scmp.lt.s32.totalorder %s42, 3
      %p681 = pnand %p679, %p680
      %p682 = pneg %p681
      // Predicated region
      $region85: #{tpu_custom_call.1} parent=5 // pred_check
        _
      $region86: #{tpu_custom_call.1} parent=5 // pred_check_branch
        %684 = sbr.rel (%p681) target = $region88
      $region87: #{tpu_custom_call.1} parent=5 // pred_region
        %s685 = ssub.s32 %s42, 1
        %s686 = sand.u32 %s55, 1
        %s687 = scalar_lea.sflag [#allocation3], %s686
        %s688 = sand.u32 %s55, 1
        %s689 = scalar_lea.vmem [#allocation2], %s688
        // Predicated region
        $region89: #{tpu_custom_call.1} parent=87 // pred_check
          %p690 = pneg %p68
        $region90: #{tpu_custom_call.1} parent=87 // pred_check_branch
          %692 = sbr.rel (%p690) target = $region92
        $region91: #{tpu_custom_call.1} parent=87 // pred_region
          %693 = dma.done %s687, 16
        $region92: #{tpu_custom_call.1} parent=87 // pred_fallthru
          _
        %s694 = sand.u32 %s47, 1
        %s695 = scalar_lea.sflag [#allocation6], %s694
        %s696 = sand.u32 %s81, 1
        %s697 = smul.addr %s696, 16
        %s698 = scalar_lea.vmem [#allocation5], %s697
        // Predicated region
        $region93: #{tpu_custom_call.1} parent=87 // pred_check
          %p699 = pneg %p94
        $region94: #{tpu_custom_call.1} parent=87 // pred_check_branch
          %701 = sbr.rel (%p699) target = $region96
        $region95: #{tpu_custom_call.1} parent=87 // pred_region
          %702 = dma.done %s695, 256
        $region96: #{tpu_custom_call.1} parent=87 // pred_fallthru
          _
        // Predicated region
        $region97: #{tpu_custom_call.1} parent=87 // pred_check
          %p703 = pneg %p115
        $region98: #{tpu_custom_call.1} parent=87 // pred_check_branch
          %705 = sbr.rel (%p703) target = $region100
        $region99: #{tpu_custom_call.1} parent=87 // pred_region
          %706 = dma.done [#allocation6], 6144
        $region100: #{tpu_custom_call.1} parent=87 // pred_fallthru
          _
        // Predicated region
        $region101: #{tpu_custom_call.1} parent=87 // pred_check
          %p707 = pneg %p136
        $region102: #{tpu_custom_call.1} parent=87 // pred_check_branch
          %709 = sbr.rel (%p707) target = $region104
        $region103: #{tpu_custom_call.1} parent=87 // pred_region
          %710 = dma.done [#allocation9], 96
        $region104: #{tpu_custom_call.1} parent=87 // pred_fallthru
          _
        // Predicated region
        $region105: #{tpu_custom_call.1} parent=87 // pred_check
          %p711 = pneg %p178
        $region106: #{tpu_custom_call.1} parent=87 // pred_check_branch
          %713 = sbr.rel (%p711) target = $region108
        $region107: #{tpu_custom_call.1} parent=87 // pred_region
          %714 = dma.done [#allocation9], 32
        $region108: #{tpu_custom_call.1} parent=87 // pred_fallthru
          _
        // Predicated region
        $region109: #{tpu_custom_call.1} parent=87 // pred_check
          %p715 = pneg %p220
        $region110: #{tpu_custom_call.1} parent=87 // pred_check_branch
          %717 = sbr.rel (%p715) target = $region112
        $region111: #{tpu_custom_call.1} parent=87 // pred_region
          %718 = dma.done [#allocation12], 32
        $region112: #{tpu_custom_call.1} parent=87 // pred_fallthru
          _
        // Predicated region
        $region113: #{tpu_custom_call.1} parent=87 // pred_check
          %p719 = pneg %p262
        $region114: #{tpu_custom_call.1} parent=87 // pred_check_branch
          %721 = sbr.rel (%p719) target = $region116
        $region115: #{tpu_custom_call.1} parent=87 // pred_region
          %722 = dma.done [#allocation12], 32
        $region116: #{tpu_custom_call.1} parent=87 // pred_fallthru
          _
        // Predicated region
        $region117: #{tpu_custom_call.1} parent=87 // pred_check
          %p723 = pneg %p283
        $region118: #{tpu_custom_call.1} parent=87 // pred_check_branch
          %725 = sbr.rel (%p723) target = $region120
        $region119: #{tpu_custom_call.1} parent=87 // pred_region
          %726 = dma.done [#allocation15], 32
        $region120: #{tpu_custom_call.1} parent=87 // pred_fallthru
          _
        // Predicated region
        $region121: #{tpu_custom_call.1} parent=87 // pred_check
          %p727 = pneg %p304
        $region122: #{tpu_custom_call.1} parent=87 // pred_check_branch
          %729 = sbr.rel (%p727) target = $region124
        $region123: #{tpu_custom_call.1} parent=87 // pred_region
          %730 = dma.done [#allocation15], 32
        $region124: #{tpu_custom_call.1} parent=87 // pred_fallthru
          _
        // Predicated region
        $region125: #{tpu_custom_call.1} parent=87 // pred_check
          %p731 = pneg %p325
        $region126: #{tpu_custom_call.1} parent=87 // pred_check_branch
          %733 = sbr.rel (%p731) target = $region128
        $region127: #{tpu_custom_call.1} parent=87 // pred_region
          %734 = dma.done [#allocation18], 32
        $region128: #{tpu_custom_call.1} parent=87 // pred_fallthru
          _
        // Predicated region
        $region129: #{tpu_custom_call.1} parent=87 // pred_check
          %p735 = pneg %p346
        $region130: #{tpu_custom_call.1} parent=87 // pred_check_branch
          %737 = sbr.rel (%p735) target = $region132
        $region131: #{tpu_custom_call.1} parent=87 // pred_region
          %738 = dma.done [#allocation18], 32
        $region132: #{tpu_custom_call.1} parent=87 // pred_fallthru
          _
        %s739 = sand.u32 %s55, 1
        %s740 = scalar_lea.sflag [#allocation3], %s739
        %s741 = sand.u32 %s55, 1
        %s742 = scalar_lea.vmem [#allocation2], %s741
        %p743 = pneg %p68
        %p744 = pneg %p65
        %s745 = sand.u32 %s47, 1
        %s746 = scalar_lea.sflag [#allocation6], %s745
        %s747 = sand.u32 %s81, 1
        %s748 = smul.addr %s747, 16
        %s749 = scalar_lea.vmem [#allocation5], %s748
        %p750 = pneg %p94
        %p751 = pneg %p91
        %p752 = pneg %p115
        %p753 = pneg %p112
        %p754 = pneg %p136
        %p755 = pneg %p133
        %p756 = pneg %p157
        %p757 = pneg %p154
        %p758 = pneg %p178
        %p759 = pneg %p175
        %p760 = pneg %p199
        %p761 = pneg %p196
        %p762 = pneg %p220
        %p763 = pneg %p217
        %p764 = pneg %p241
        %p765 = pneg %p238
        %p766 = pneg %p262
        %p767 = pneg %p259
        %p768 = pneg %p283
        %p769 = pneg %p280
        %p770 = pneg %p304
        %p771 = pneg %p301
        %p772 = pneg %p325
        %p773 = pneg %p322
        %p774 = pneg %p346
        %p775 = pneg %p343
        %p776 = pneg %p367
        %p777 = pneg %p364
        %p778 = pneg %p388
        %p779 = pneg %p385
        %p780 = pneg %p409
        %p781 = pneg %p406
        %p782 = pneg %p435
        %p783 = pneg %p432
        %s784 = sand.u32 %s422, 1
        %s785 = scalar_lea.sflag [#allocation4], %s784
        %s786 = sand.u32 %s422, 1
        %s787 = smul.addr %s786, 16
        %s788 = scalar_lea.vmem [#allocation20], %s787
        %p789 = pneg %p461
        %p790 = pneg %p458
        %s791 = sand.u32 %s47, 1
        %s792 = scalar_lea.sflag [#allocation22], %s791
        %s793 = sand.u32 %s448, 1
        %s794 = smul.addr %s793, 32
        %s795 = scalar_lea.vmem [#allocation21], %s794
        %p796 = pneg %p487
        %p797 = pneg %p484
        %s798 = sand.u32 %s47, 1
        %s799 = scalar_lea.sflag [#allocation22], %s798
        %s800 = sand.u32 %s474, 1
        %s801 = smul.addr %s800, 32
        %s802 = scalar_lea.vmem [#allocation23], %s801
        %v804 = vld [vmem:[%s698] sm:$0xff]
        %v805 = vld [vmem:[%s698 + $0x8] sm:$0xff]
        %v806 = vld [vmem:[%s689] sm:$0x1]
        %v807 = vlaneseq
        %v808 = vshrl.u32 %v807, 7
        %v809 = vadd.s32 %v808, 8
        %v810 = vlaneseq
        %v811 = vand.u32 %v810, 127
        %vm812 = vcmp.gt.s32.totalorder %v811, %v808
        %vm813 = vcmp.gt.s32.totalorder %v811, %v809
        %v814 = vsel %vm812, 1, 0
        %v815 = vsel %vm813, 1, 0
        %v816 = vcvt.s32.f32 %v814
        %v817 = vcvt.s32.f32 %v815
        %vm818 = vcmp.eq.s32.totalorder %v806, 39
        %v819 = vsel %vm818, 1, 0
        %v820 = vcvt.s32.f32 %v819
        %v822 = vlaneseq
        %v823 = vshrl.u32 %v822, 7
        %v824 = vsub.s32 0, %v823
        %v825 = vrot.slane %v820, %v824
        %v827 = vmax.f32 %v816, %v825
        %v828 = vmax.f32 %v817, %v825
        %v829 = vmul.f32 %v827, -1e+09
        %v830 = vmul.f32 %v828, -1e+09
        %v831 = vsub.s32 %v808, %v811
        %v832 = vsub.s32 %v809, %v811
        %vm833 = vcmp.eq.s32.totalorder %v831, 0
        %vm834 = vcmp.eq.s32.totalorder %v832, 0
        %v835 = vsel %vm833, 1, 0
        %v836 = vsel %vm834, 1, 0
        %v837 = vcvt.s32.f32 %v835
        %v838 = vcvt.s32.f32 %v836
        %vm839 = vcmp.eq.s32.totalorder %v831, 1
        %vm840 = vcmp.eq.s32.totalorder %v832, 1
        %v841 = vsel %vm839, 1, 0
        %v842 = vsel %vm840, 1, 0
        %v843 = vcvt.s32.f32 %v841
        %v844 = vcvt.s32.f32 %v842
        %vm845 = vcmp.eq.s32.totalorder %v831, 2
        %vm846 = vcmp.eq.s32.totalorder %v832, 2
        %v847 = vsel %vm845, 1, 0
        %v848 = vsel %vm846, 1, 0
        %v849 = vcvt.s32.f32 %v847
        %v850 = vcvt.s32.f32 %v848
        %vm851 = vcmp.eq.s32.totalorder %v831, 3
        %vm852 = vcmp.eq.s32.totalorder %v832, 3
        %v853 = vsel %vm851, 1, 0
        %v854 = vsel %vm852, 1, 0
        %v855 = vcvt.s32.f32 %v853
        %v856 = vcvt.s32.f32 %v854
        %vm857 = vcmp.eq.s32.totalorder %v831, 4
        %vm858 = vcmp.eq.s32.totalorder %v832, 4
        %v859 = vsel %vm857, 1, 0
        %v860 = vsel %vm858, 1, 0
        %v861 = vcvt.s32.f32 %v859
        %v862 = vcvt.s32.f32 %v860
        %vm863 = vcmp.eq.s32.totalorder %v831, 5
        %vm864 = vcmp.eq.s32.totalorder %v832, 5
        %v865 = vsel %vm863, 1, 0
        %v866 = vsel %vm864, 1, 0
        %v867 = vcvt.s32.f32 %v865
        %v868 = vcvt.s32.f32 %v866
        %vm869 = vcmp.eq.s32.totalorder %v831, 6
        %vm870 = vcmp.eq.s32.totalorder %v832, 6
        %v871 = vsel %vm869, 1, 0
        %v872 = vsel %vm870, 1, 0
        %v873 = vcvt.s32.f32 %v871
        %v874 = vcvt.s32.f32 %v872
        %vm875 = vcmp.eq.s32.totalorder %v831, 7
        %vm876 = vcmp.eq.s32.totalorder %v832, 7
        %v877 = vsel %vm875, 1, 0
        %v878 = vsel %vm876, 1, 0
        %v879 = vcvt.s32.f32 %v877
        %v880 = vcvt.s32.f32 %v878
        %vm881 = vcmp.eq.s32.totalorder %v831, 8
        %vm882 = vcmp.eq.s32.totalorder %v832, 8
        %v883 = vsel %vm881, 1, 0
        %v884 = vsel %vm882, 1, 0
        %v885 = vcvt.s32.f32 %v883
        %v886 = vcvt.s32.f32 %v884
        %vm887 = vcmp.eq.s32.totalorder %v831, 9
        %vm888 = vcmp.eq.s32.totalorder %v832, 9
        %v889 = vsel %vm887, 1, 0
        %v890 = vsel %vm888, 1, 0
        %v891 = vcvt.s32.f32 %v889
        %v892 = vcvt.s32.f32 %v890
        %vm893 = vcmp.eq.s32.totalorder %v831, 10
        %vm894 = vcmp.eq.s32.totalorder %v832, 10
        %v895 = vsel %vm893, 1, 0
        %v896 = vsel %vm894, 1, 0
        %v897 = vcvt.s32.f32 %v895
        %v898 = vcvt.s32.f32 %v896
        %vm899 = vcmp.eq.s32.totalorder %v831, 11
        %vm900 = vcmp.eq.s32.totalorder %v832, 11
        %v901 = vsel %vm899, 1, 0
        %v902 = vsel %vm900, 1, 0
        %v903 = vcvt.s32.f32 %v901
        %v904 = vcvt.s32.f32 %v902
        %vm905 = vcmp.eq.s32.totalorder %v831, 12
        %vm906 = vcmp.eq.s32.totalorder %v832, 12
        %v907 = vsel %vm905, 1, 0
        %v908 = vsel %vm906, 1, 0
        %v909 = vcvt.s32.f32 %v907
        %v910 = vcvt.s32.f32 %v908
        %vm911 = vcmp.eq.s32.totalorder %v831, 13
        %vm912 = vcmp.eq.s32.totalorder %v832, 13
        %v913 = vsel %vm911, 1, 0
        %v914 = vsel %vm912, 1, 0
        %v915 = vcvt.s32.f32 %v913
        %v916 = vcvt.s32.f32 %v914
        %vm917 = vcmp.eq.s32.totalorder %v831, 14
        %vm918 = vcmp.eq.s32.totalorder %v832, 14
        %v919 = vsel %vm917, 1, 0
        %v920 = vsel %vm918, 1, 0
        %v921 = vcvt.s32.f32 %v919
        %v922 = vcvt.s32.f32 %v920
        %vm923 = vcmp.eq.s32.totalorder %v831, 15
        %vm924 = vcmp.eq.s32.totalorder %v832, 15
        %v925 = vsel %vm923, 1, 0
        %v926 = vsel %vm924, 1, 0
        %v927 = vcvt.s32.f32 %v925
        %v928 = vcvt.s32.f32 %v926
        %v929 = vld [vmem:[%s14] sm:$0xf]
        %v930 = vld [vmem:[%s14 + $0x4] sm:$0xf]
        %v931 = vld [vmem:[%s14 + $0x8] sm:$0xf]
        %v932 = vld [vmem:[%s14 + $0xc] sm:$0xf]
        %v933 = vld [vmem:[%s14 + $0x10] sm:$0xf]
        %v934 = vld [vmem:[%s14 + $0x14] sm:$0xf]
        %v935 = vld [vmem:[%s14 + $0x18] sm:$0xf]
        %v936 = vld [vmem:[%s14 + $0x1c] sm:$0xf]
        %v937 = vpack.c.bf16 %v805, %v804
        %v938 = vld [vmem:[#allocation7] sm:$0xff]
        %v939 = vld [vmem:[#allocation7 + $0x8] sm:$0xf]
        %v940 = vld [vmem:[#allocation7 + $0xc] sm:$0xff]
        %v941 = vld [vmem:[#allocation7 + $0x14] sm:$0xf]
        %v942 = vld [vmem:[#allocation7 + $0x18] sm:$0xff]
        %v943 = vld [vmem:[#allocation7 + $0x20] sm:$0xf]
        %v944 = vld [vmem:[#allocation7 + $0x24] sm:$0xff]
        %v945 = vld [vmem:[#allocation7 + $0x2c] sm:$0xf]
        %v946 = vld [vmem:[#allocation7 + $0x30] sm:$0xff]
        %v947 = vld [vmem:[#allocation7 + $0x38] sm:$0xf]
        %v948 = vld [vmem:[#allocation7 + $0x3c] sm:$0xff]
        %v949 = vld [vmem:[#allocation7 + $0x44] sm:$0xf]
        %v950 = vld [vmem:[#allocation7 + $0x48] sm:$0xff]
        %v951 = vld [vmem:[#allocation7 + $0x50] sm:$0xf]
        %v952 = vld [vmem:[#allocation7 + $0x54] sm:$0xff]
        %v953 = vld [vmem:[#allocation7 + $0x5c] sm:$0xf]
        %v954 = vld [vmem:[#allocation7 + $0x60] sm:$0xff]
        %v955 = vld [vmem:[#allocation7 + $0x68] sm:$0xf]
        %v956 = vld [vmem:[#allocation7 + $0x6c] sm:$0xff]
        %v957 = vld [vmem:[#allocation7 + $0x74] sm:$0xf]
        %v958 = vld [vmem:[#allocation7 + $0x78] sm:$0xff]
        %v959 = vld [vmem:[#allocation7 + $0x80] sm:$0xf]
        %v960 = vld [vmem:[#allocation7 + $0x84] sm:$0xff]
        %v961 = vld [vmem:[#allocation7 + $0x8c] sm:$0xf]
        %v962 = vld [vmem:[#allocation7 + $0x90] sm:$0xff]
        %v963 = vld [vmem:[#allocation7 + $0x98] sm:$0xf]
        %v964 = vld [vmem:[#allocation7 + $0x9c] sm:$0xff]
        %v965 = vld [vmem:[#allocation7 + $0xa4] sm:$0xf]
        %v966 = vld [vmem:[#allocation7 + $0xa8] sm:$0xff]
        %v967 = vld [vmem:[#allocation7 + $0xb0] sm:$0xf]
        %v968 = vld [vmem:[#allocation7 + $0xb4] sm:$0xff]
        %v969 = vld [vmem:[#allocation7 + $0xbc] sm:$0xf]
        %v970 = vld [vmem:[#allocation8] sm:$0x7]
        %v972 = vlaneseq
        %v973 = vshrl.u32 %v972, 7
        %v974 = vsub.s32 0, %v973
        %v975 = vrot.slane %v970, %v974
        %v976 = vlaneseq
        %v977 = vshrl.u32 %v976, 7
        %v978 = vsub.s32 1, %v977
        %v979 = vrot.slane %v970, %v978
        %v980 = vlaneseq
        %v981 = vshrl.u32 %v980, 7
        %v982 = vsub.s32 2, %v981
        %v983 = vrot.slane %v970, %v982
        %v1019 = vunpack.c.l.b16 %v938
        %v1020 = vunpack.c.h.b16 %v938
        %v1021 = vunpack.c.l.b16 %v939
        %v1022 = vunpack.c.l.b16 %v940
        %v1023 = vunpack.c.h.b16 %v940
        %v1024 = vunpack.c.l.b16 %v941
        %v1025 = vunpack.c.l.b16 %v942
        %v1026 = vunpack.c.h.b16 %v942
        %v1027 = vunpack.c.l.b16 %v943
        %v1028 = vunpack.c.l.b16 %v944
        %v1029 = vunpack.c.h.b16 %v944
        %v1030 = vunpack.c.l.b16 %v945
        %v1031 = vunpack.c.l.b16 %v946
        %v1032 = vunpack.c.h.b16 %v946
        %v1033 = vunpack.c.l.b16 %v947
        %v1034 = vunpack.c.l.b16 %v948
        %v1035 = vunpack.c.h.b16 %v948
        %v1036 = vunpack.c.l.b16 %v949
        %v1037 = vunpack.c.l.b16 %v950
        %v1038 = vunpack.c.h.b16 %v950
        %v1039 = vunpack.c.l.b16 %v951
        %v1040 = vunpack.c.l.b16 %v952
        %v1041 = vunpack.c.h.b16 %v952
        %v1042 = vunpack.c.l.b16 %v953
        %v1043 = vunpack.c.l.b16 %v954
        %v1044 = vunpack.c.h.b16 %v954
        %v1045 = vunpack.c.l.b16 %v955
        %v1046 = vunpack.c.l.b16 %v956
        %v1047 = vunpack.c.h.b16 %v956
        %v1048 = vunpack.c.l.b16 %v957
        %v1049 = vunpack.c.l.b16 %v958
        %v1050 = vunpack.c.h.b16 %v958
        %v1051 = vunpack.c.l.b16 %v959
        %v1052 = vunpack.c.l.b16 %v960
        %v1053 = vunpack.c.h.b16 %v960
        %v1054 = vunpack.c.l.b16 %v961
        %v1055 = vunpack.c.l.b16 %v962
        %v1056 = vunpack.c.h.b16 %v962
        %v1057 = vunpack.c.l.b16 %v963
        %v1058 = vunpack.c.l.b16 %v964
        %v1059 = vunpack.c.h.b16 %v964
        %v1060 = vunpack.c.l.b16 %v965
        %v1061 = vunpack.c.l.b16 %v966
        %v1062 = vunpack.c.h.b16 %v966
        %v1063 = vunpack.c.l.b16 %v967
        %v1064 = vunpack.c.l.b16 %v968
        %v1065 = vunpack.c.h.b16 %v968
        %v1066 = vunpack.c.l.b16 %v969
        %v1067 = vpack.c.b16 %v1022, %v1019
        %v1068 = vpack.c.b16 %v1023, %v1020
        %v1069 = vpack.c.b16 %v1024, %v1021
        %v1070 = vpack.c.b16 %v1028, %v1025
        %v1071 = vpack.c.b16 %v1029, %v1026
        %v1072 = vpack.c.b16 %v1030, %v1027
        %v1073 = vpack.c.b16 %v1034, %v1031
        %v1074 = vpack.c.b16 %v1035, %v1032
        %v1075 = vpack.c.b16 %v1036, %v1033
        %v1076 = vpack.c.b16 %v1040, %v1037
        %v1077 = vpack.c.b16 %v1041, %v1038
        %v1078 = vpack.c.b16 %v1042, %v1039
        %v1079 = vpack.c.b16 %v1046, %v1043
        %v1080 = vpack.c.b16 %v1047, %v1044
        %v1081 = vpack.c.b16 %v1048, %v1045
        %v1082 = vpack.c.b16 %v1052, %v1049
        %v1083 = vpack.c.b16 %v1053, %v1050
        %v1084 = vpack.c.b16 %v1054, %v1051
        %v1085 = vpack.c.b16 %v1058, %v1055
        %v1086 = vpack.c.b16 %v1059, %v1056
        %v1087 = vpack.c.b16 %v1060, %v1057
        %v1088 = vpack.c.b16 %v1064, %v1061
        %v1089 = vpack.c.b16 %v1065, %v1062
        %v1090 = vpack.c.b16 %v1066, %v1063
        %1115 = vmatprep.subr.bf16.mxu0 %v1089
        %1116 = vmatpush1.bf16.msra.mxu0 %v1088
        %1117 = vmatprep.subr.bf16.mxu0 %v1086
        %1118 = vmatpush1.bf16.msra.mxu0 %v1085
        %1119 = vmatprep.subr.bf16.mxu0 %v1083
        %1120 = vmatpush1.bf16.msra.mxu0 %v1082
        %1121 = vmatprep.subr.bf16.mxu0 %v1080
        %1122 = vmatpush1.bf16.msra.mxu0 %v1079
        %1123 = vmatprep.subr.bf16.mxu0 %v1077
        %1124 = vmatpush1.bf16.msra.mxu0 %v1076
        %1125 = vmatprep.subr.bf16.mxu0 %v1074
        %1126 = vmatpush1.bf16.msra.mxu0 %v1073
        %1127 = vmatprep.subr.bf16.mxu0 %v1071
        %1128 = vmatpush1.bf16.msra.mxu0 %v1070
        %1129 = vmatprep.subr.bf16.mxu0 %v1068
        %1130 = vmatpush1.bf16.msra.mxu0 %v1067
        %1131 = vmatprep.subr.bf16.mxu0 0
        %1132 = vmatpush2.bf16.msra.mxu0 0
        %1133 = vmatprep.subr.bf16.mxu0 0
        %1134 = vmatpush2.bf16.msra.mxu0 0
        %1135 = vmatprep.subr.bf16.mxu0 0
        %1136 = vmatpush2.bf16.msra.mxu0 0
        %1137 = vmatprep.subr.bf16.mxu0 0
        %1138 = vmatpush2.bf16.msra.mxu0 0
        %1139 = vmatprep.subr.bf16.mxu0 0
        %1140 = vmatpush2.bf16.msra.mxu0 0
        %1141 = vmatprep.subr.bf16.mxu0 0
        %1142 = vmatpush2.bf16.msra.mxu0 0
        %1143 = vmatprep.subr.bf16.mxu0 0
        %1144 = vmatpush2.bf16.msra.mxu0 0
        %1145 = vmatprep.subr.bf16.mxu0 0
        %1146 = vmatpush2.bf16.msra.mxu0 0
        %1147 = vmatprep.mubr.bf16.mxu0 0
        %1148 = vmatmul.mubr.bf16.gmra.mxu0 %v937
        %v1149 = vpop.f32.mrf.mxu0
        %v1150 = vadd.f32 %v975, %v1149
        %v1151 = vpop.f32.mrf.mxu0
        %v1152 = vadd.f32 %v979, %v1151
        %v1153 = vpop.f32.mrf.mxu0
        %v1154 = vadd.f32 %v975, %v1153
        %v1155 = vpop.f32.mrf.mxu0
        %v1156 = vadd.f32 %v979, %v1155
        %1157 = vdwg.mxu0
        %1158 = vmatprep.subr.bf16.mxu0 0
        %1159 = vmatpush1.bf16.msra.mxu0 %v1090
        %1160 = vmatprep.subr.bf16.mxu0 0
        %1161 = vmatpush1.bf16.msra.mxu0 %v1087
        %1162 = vmatprep.subr.bf16.mxu0 0
        %1163 = vmatpush1.bf16.msra.mxu0 %v1084
        %1164 = vmatprep.subr.bf16.mxu0 0
        %1165 = vmatpush1.bf16.msra.mxu0 %v1081
        %1166 = vmatprep.subr.bf16.mxu0 0
        %1167 = vmatpush1.bf16.msra.mxu0 %v1078
        %1168 = vmatprep.subr.bf16.mxu0 0
        %1169 = vmatpush1.bf16.msra.mxu0 %v1075
        %1170 = vmatprep.subr.bf16.mxu0 0
        %1171 = vmatpush1.bf16.msra.mxu0 %v1072
        %1172 = vmatprep.subr.bf16.mxu0 0
        %1173 = vmatpush1.bf16.msra.mxu0 %v1069
        %1174 = vmatprep.subr.bf16.mxu0 0
        %1175 = vmatpush2.bf16.msra.mxu0 0
        %1176 = vmatprep.subr.bf16.mxu0 0
        %1177 = vmatpush2.bf16.msra.mxu0 0
        %1178 = vmatprep.subr.bf16.mxu0 0
        %1179 = vmatpush2.bf16.msra.mxu0 0
        %1180 = vmatprep.subr.bf16.mxu0 0
        %1181 = vmatpush2.bf16.msra.mxu0 0
        %1182 = vmatprep.subr.bf16.mxu0 0
        %1183 = vmatpush2.bf16.msra.mxu0 0
        %1184 = vmatprep.subr.bf16.mxu0 0
        %1185 = vmatpush2.bf16.msra.mxu0 0
        %1186 = vmatprep.subr.bf16.mxu0 0
        %1187 = vmatpush2.bf16.msra.mxu0 0
        %1188 = vmatprep.subr.bf16.mxu0 0
        %1189 = vmatpush2.bf16.msra.mxu0 0
        %1190 = vmatprep.mubr.bf16.mxu0 0
        %1191 = vmatmul.mubr.bf16.gmra.mxu0 %v937
        %v1192 = vpop.f32.mrf.mxu0
        %v1193 = vadd.f32 %v983, %v1192
        %v1194 = vpop.f32.mrf.mxu0
        %v1195 = vpop.f32.mrf.mxu0
        %v1196 = vadd.f32 %v983, %v1195
        %v1197 = vpop.f32.mrf.mxu0
        %1198 = vdwg.mxu0
        %1201 = vrot.lane.b32.xlu0 %v1150, 64
        %v1202 = vpop.permute.xlu0 %1201
        %1203 = vrot.lane.b32.xlu0 %v1154, 64
        %v1204 = vpop.permute.xlu0 %1203
        %v1207 = vpack.c.bf16 %v1154, %v1150
        %v1208 = vpack.c.bf16 %v1204, %v1202
        %1211 = vrot.lane.b32.xlu0 %v1152, 64
        %v1212 = vpop.permute.xlu0 %1211
        %1213 = vrot.lane.b32.xlu0 %v1156, 64
        %v1214 = vpop.permute.xlu0 %1213
        %v1217 = vpack.c.bf16 %v1156, %v1152
        %v1218 = vpack.c.bf16 %v1214, %v1212
        %1221 = vrot.lane.b32.xlu0 %v1193, 64
        %v1222 = vpop.permute.xlu0 %1221
        %1223 = vrot.lane.b32.xlu0 %v1196, 64
        %v1224 = vpop.permute.xlu0 %1223
        %v1227 = vpack.c.bf16 %v1196, %v1193
        %v1228 = vpack.c.bf16 %v1224, %v1222
        %v1237 = vunpack.c.l.b16 %v929
        %v1238 = vunpack.c.l.b16 %v930
        %v1239 = vunpack.c.l.b16 %v931
        %v1240 = vunpack.c.l.b16 %v932
        %v1241 = vunpack.c.l.b16 %v933
        %v1242 = vunpack.c.l.b16 %v934
        %v1243 = vunpack.c.l.b16 %v935
        %v1244 = vunpack.c.l.b16 %v936
        %v1245 = vpack.c.b16 %v1238, %v1237
        %v1246 = vpack.c.b16 %v1240, %v1239
        %v1247 = vpack.c.b16 %v1242, %v1241
        %v1248 = vpack.c.b16 %v1244, %v1243
        %vm1253 = vcmask 523264
        %v1255 = vsel %vm1253, %v1207, 0
        %1257 = vmatprep.subr.bf16.mxu0 0
        %1258 = vmatpush1.bf16.msra.mxu0 0
        %1259 = vmatprep.subr.bf16.mxu0 0
        %1260 = vmatpush1.bf16.msra.mxu0 0
        %1261 = vmatprep.subr.bf16.mxu0 0
        %1262 = vmatpush1.bf16.msra.mxu0 0
        %1263 = vmatprep.subr.bf16.mxu0 0
        %1264 = vmatpush1.bf16.msra.mxu0 0
        %1265 = vmatprep.subr.bf16.mxu0 0
        %1266 = vmatpush1.bf16.msra.mxu0 %v1248
        %1267 = vmatprep.subr.bf16.mxu0 0
        %1268 = vmatpush1.bf16.msra.mxu0 %v1247
        %1269 = vmatprep.subr.bf16.mxu0 0
        %1270 = vmatpush1.bf16.msra.mxu0 %v1246
        %1271 = vmatprep.subr.bf16.mxu0 0
        %1272 = vmatpush1.bf16.msra.mxu0 %v1245
        %1273 = vmatprep.subr.bf16.mxu0 0
        %1274 = vmatpush2.bf16.msra.mxu0 0
        %1275 = vmatprep.subr.bf16.mxu0 0
        %1276 = vmatpush2.bf16.msra.mxu0 0
        %1277 = vmatprep.subr.bf16.mxu0 0
        %1278 = vmatpush2.bf16.msra.mxu0 0
        %1279 = vmatprep.subr.bf16.mxu0 0
        %1280 = vmatpush2.bf16.msra.mxu0 0
        %1281 = vmatprep.subr.bf16.mxu0 0
        %1282 = vmatpush2.bf16.msra.mxu0 0
        %1283 = vmatprep.subr.bf16.mxu0 0
        %1284 = vmatpush2.bf16.msra.mxu0 0
        %1285 = vmatprep.subr.bf16.mxu0 0
        %1286 = vmatpush2.bf16.msra.mxu0 0
        %1287 = vmatprep.subr.bf16.mxu0 0
        %1288 = vmatpush2.bf16.msra.mxu0 0
        %1289 = vmatprep.mubr.bf16.mxu0 0
        %1290 = vmatmul.mubr.bf16.gmra.mxu0 %v1255
        %v1291 = vpop.f32.mrf.mxu0
        %v1292 = vadd.f32 0.0, %v1291
        %v1293 = vpop.f32.mrf.mxu0
        %v1294 = vpop.f32.mrf.mxu0
        %v1295 = vadd.f32 0.0, %v1294
        %v1296 = vpop.f32.mrf.mxu0
        %1297 = vdwg.mxu0
        %v1299 = vsel %vm1253, %v1208, 0
        %1301 = vmatprep.subr.bf16.mxu0 0
        %1302 = vmatpush1.bf16.msra.mxu0 0
        %1303 = vmatprep.subr.bf16.mxu0 0
        %1304 = vmatpush1.bf16.msra.mxu0 0
        %1305 = vmatprep.subr.bf16.mxu0 0
        %1306 = vmatpush1.bf16.msra.mxu0 0
        %1307 = vmatprep.subr.bf16.mxu0 0
        %1308 = vmatpush1.bf16.msra.mxu0 0
        %1309 = vmatprep.subr.bf16.mxu0 0
        %1310 = vmatpush1.bf16.msra.mxu0 %v1248
        %1311 = vmatprep.subr.bf16.mxu0 0
        %1312 = vmatpush1.bf16.msra.mxu0 %v1247
        %1313 = vmatprep.subr.bf16.mxu0 0
        %1314 = vmatpush1.bf16.msra.mxu0 %v1246
        %1315 = vmatprep.subr.bf16.mxu0 0
        %1316 = vmatpush1.bf16.msra.mxu0 %v1245
        %1317 = vmatprep.subr.bf16.mxu0 0
        %1318 = vmatpush2.bf16.msra.mxu0 0
        %1319 = vmatprep.subr.bf16.mxu0 0
        %1320 = vmatpush2.bf16.msra.mxu0 0
        %1321 = vmatprep.subr.bf16.mxu0 0
        %1322 = vmatpush2.bf16.msra.mxu0 0
        %1323 = vmatprep.subr.bf16.mxu0 0
        %1324 = vmatpush2.bf16.msra.mxu0 0
        %1325 = vmatprep.subr.bf16.mxu0 0
        %1326 = vmatpush2.bf16.msra.mxu0 0
        %1327 = vmatprep.subr.bf16.mxu0 0
        %1328 = vmatpush2.bf16.msra.mxu0 0
        %1329 = vmatprep.subr.bf16.mxu0 0
        %1330 = vmatpush2.bf16.msra.mxu0 0
        %1331 = vmatprep.subr.bf16.mxu0 0
        %1332 = vmatpush2.bf16.msra.mxu0 0
        %1333 = vmatprep.mubr.bf16.mxu0 0
        %1334 = vmatmul.mubr.bf16.gmra.mxu0 %v1299
        %v1335 = vpop.f32.mrf.mxu0
        %v1336 = vadd.f32 0.0, %v1335
        %v1337 = vpop.f32.mrf.mxu0
        %v1338 = vpop.f32.mrf.mxu0
        %v1339 = vadd.f32 0.0, %v1338
        %v1340 = vpop.f32.mrf.mxu0
        %1341 = vdwg.mxu0
        %1343 = vset.pattern.permute.xlu0 0
        %1344 = vperm.xlu0 %1343, %v1292
        %v1345 = vpop.permute.xlu0 %1344
        %1348 = vset.pattern.permute.xlu0 0
        %1349 = vperm.xlu0 %1348, %v1295
        %v1350 = vpop.permute.xlu0 %1349
        %1353 = vset.pattern.permute.xlu0 0
        %1354 = vperm.xlu0 %1353, %v1336
        %v1355 = vpop.permute.xlu0 %1354
        %1358 = vset.pattern.permute.xlu0 0
        %1359 = vperm.xlu0 %1358, %v1339
        %v1360 = vpop.permute.xlu0 %1359
        %v1362 = vmul.f32 %v1345, %v837
        %v1363 = vmul.f32 %v1350, %v838
        %v1364 = vmul.f32 %v1355, %v837
        %v1365 = vmul.f32 %v1360, %v838
        %v1366 = vadd.f32 %v1362, 0.0
        %v1367 = vadd.f32 %v1363, 0.0
        %v1368 = vadd.f32 %v1364, 0.0
        %v1369 = vadd.f32 %v1365, 0.0
        %1370 = vset.pattern.permute.xlu0 1
        %1371 = vperm.xlu0 %1370, %v1292
        %v1372 = vpop.permute.xlu0 %1371
        %1374 = vset.pattern.permute.xlu0 1
        %1375 = vperm.xlu0 %1374, %v1295
        %v1376 = vpop.permute.xlu0 %1375
        %1378 = vset.pattern.permute.xlu0 1
        %1379 = vperm.xlu0 %1378, %v1336
        %v1380 = vpop.permute.xlu0 %1379
        %1382 = vset.pattern.permute.xlu0 1
        %1383 = vperm.xlu0 %1382, %v1339
        %v1384 = vpop.permute.xlu0 %1383
        %v1386 = vmul.f32 %v1372, %v843
        %v1387 = vmul.f32 %v1376, %v844
        %v1388 = vmul.f32 %v1380, %v843
        %v1389 = vmul.f32 %v1384, %v844
        %v1390 = vadd.f32 %v1366, %v1386
        %v1391 = vadd.f32 %v1367, %v1387
        %v1392 = vadd.f32 %v1368, %v1388
        %v1393 = vadd.f32 %v1369, %v1389
        %1394 = vset.pattern.permute.xlu0 2
        %1395 = vperm.xlu0 %1394, %v1292
        %v1396 = vpop.permute.xlu0 %1395
        %1398 = vset.pattern.permute.xlu0 2
        %1399 = vperm.xlu0 %1398, %v1295
        %v1400 = vpop.permute.xlu0 %1399
        %1402 = vset.pattern.permute.xlu0 2
        %1403 = vperm.xlu0 %1402, %v1336
        %v1404 = vpop.permute.xlu0 %1403
        %1406 = vset.pattern.permute.xlu0 2
        %1407 = vperm.xlu0 %1406, %v1339
        %v1408 = vpop.permute.xlu0 %1407
        %v1410 = vmul.f32 %v1396, %v849
        %v1411 = vmul.f32 %v1400, %v850
        %v1412 = vmul.f32 %v1404, %v849
        %v1413 = vmul.f32 %v1408, %v850
        %v1414 = vadd.f32 %v1390, %v1410
        %v1415 = vadd.f32 %v1391, %v1411
        %v1416 = vadd.f32 %v1392, %v1412
        %v1417 = vadd.f32 %v1393, %v1413
        %1418 = vset.pattern.permute.xlu0 3
        %1419 = vperm.xlu0 %1418, %v1292
        %v1420 = vpop.permute.xlu0 %1419
        %1422 = vset.pattern.permute.xlu0 3
        %1423 = vperm.xlu0 %1422, %v1295
        %v1424 = vpop.permute.xlu0 %1423
        %1426 = vset.pattern.permute.xlu0 3
        %1427 = vperm.xlu0 %1426, %v1336
        %v1428 = vpop.permute.xlu0 %1427
        %1430 = vset.pattern.permute.xlu0 3
        %1431 = vperm.xlu0 %1430, %v1339
        %v1432 = vpop.permute.xlu0 %1431
        %v1434 = vmul.f32 %v1420, %v855
        %v1435 = vmul.f32 %v1424, %v856
        %v1436 = vmul.f32 %v1428, %v855
        %v1437 = vmul.f32 %v1432, %v856
        %v1438 = vadd.f32 %v1414, %v1434
        %v1439 = vadd.f32 %v1415, %v1435
        %v1440 = vadd.f32 %v1416, %v1436
        %v1441 = vadd.f32 %v1417, %v1437
        %1442 = vset.pattern.permute.xlu0 4
        %1443 = vperm.xlu0 %1442, %v1292
        %v1444 = vpop.permute.xlu0 %1443
        %1446 = vset.pattern.permute.xlu0 4
        %1447 = vperm.xlu0 %1446, %v1295
        %v1448 = vpop.permute.xlu0 %1447
        %1450 = vset.pattern.permute.xlu0 4
        %1451 = vperm.xlu0 %1450, %v1336
        %v1452 = vpop.permute.xlu0 %1451
        %1454 = vset.pattern.permute.xlu0 4
        %1455 = vperm.xlu0 %1454, %v1339
        %v1456 = vpop.permute.xlu0 %1455
        %v1458 = vmul.f32 %v1444, %v861
        %v1459 = vmul.f32 %v1448, %v862
        %v1460 = vmul.f32 %v1452, %v861
        %v1461 = vmul.f32 %v1456, %v862
        %v1462 = vadd.f32 %v1438, %v1458
        %v1463 = vadd.f32 %v1439, %v1459
        %v1464 = vadd.f32 %v1440, %v1460
        %v1465 = vadd.f32 %v1441, %v1461
        %1466 = vset.pattern.permute.xlu0 5
        %1467 = vperm.xlu0 %1466, %v1292
        %v1468 = vpop.permute.xlu0 %1467
        %1470 = vset.pattern.permute.xlu0 5
        %1471 = vperm.xlu0 %1470, %v1295
        %v1472 = vpop.permute.xlu0 %1471
        %1474 = vset.pattern.permute.xlu0 5
        %1475 = vperm.xlu0 %1474, %v1336
        %v1476 = vpop.permute.xlu0 %1475
        %1478 = vset.pattern.permute.xlu0 5
        %1479 = vperm.xlu0 %1478, %v1339
        %v1480 = vpop.permute.xlu0 %1479
        %v1482 = vmul.f32 %v1468, %v867
        %v1483 = vmul.f32 %v1472, %v868
        %v1484 = vmul.f32 %v1476, %v867
        %v1485 = vmul.f32 %v1480, %v868
        %v1486 = vadd.f32 %v1462, %v1482
        %v1487 = vadd.f32 %v1463, %v1483
        %v1488 = vadd.f32 %v1464, %v1484
        %v1489 = vadd.f32 %v1465, %v1485
        %1490 = vset.pattern.permute.xlu0 6
        %1491 = vperm.xlu0 %1490, %v1292
        %v1492 = vpop.permute.xlu0 %1491
        %1494 = vset.pattern.permute.xlu0 6
        %1495 = vperm.xlu0 %1494, %v1295
        %v1496 = vpop.permute.xlu0 %1495
        %1498 = vset.pattern.permute.xlu0 6
        %1499 = vperm.xlu0 %1498, %v1336
        %v1500 = vpop.permute.xlu0 %1499
        %1502 = vset.pattern.permute.xlu0 6
        %1503 = vperm.xlu0 %1502, %v1339
        %v1504 = vpop.permute.xlu0 %1503
        %v1506 = vmul.f32 %v1492, %v873
        %v1507 = vmul.f32 %v1496, %v874
        %v1508 = vmul.f32 %v1500, %v873
        %v1509 = vmul.f32 %v1504, %v874
        %v1510 = vadd.f32 %v1486, %v1506
        %v1511 = vadd.f32 %v1487, %v1507
        %v1512 = vadd.f32 %v1488, %v1508
        %v1513 = vadd.f32 %v1489, %v1509
        %1514 = vset.pattern.permute.xlu0 7
        %1515 = vperm.xlu0 %1514, %v1292
        %v1516 = vpop.permute.xlu0 %1515
        %1518 = vset.pattern.permute.xlu0 7
        %1519 = vperm.xlu0 %1518, %v1295
        %v1520 = vpop.permute.xlu0 %1519
        %1522 = vset.pattern.permute.xlu0 7
        %1523 = vperm.xlu0 %1522, %v1336
        %v1524 = vpop.permute.xlu0 %1523
        %1526 = vset.pattern.permute.xlu0 7
        %1527 = vperm.xlu0 %1526, %v1339
        %v1528 = vpop.permute.xlu0 %1527
        %v1530 = vmul.f32 %v1516, %v879
        %v1531 = vmul.f32 %v1520, %v880
        %v1532 = vmul.f32 %v1524, %v879
        %v1533 = vmul.f32 %v1528, %v880
        %v1534 = vadd.f32 %v1510, %v1530
        %v1535 = vadd.f32 %v1511, %v1531
        %v1536 = vadd.f32 %v1512, %v1532
        %v1537 = vadd.f32 %v1513, %v1533
        %1538 = vset.pattern.permute.xlu0 8
        %1539 = vperm.xlu0 %1538, %v1292
        %v1540 = vpop.permute.xlu0 %1539
        %1542 = vset.pattern.permute.xlu0 8
        %1543 = vperm.xlu0 %1542, %v1295
        %v1544 = vpop.permute.xlu0 %1543
        %1546 = vset.pattern.permute.xlu0 8
        %1547 = vperm.xlu0 %1546, %v1336
        %v1548 = vpop.permute.xlu0 %1547
        %1550 = vset.pattern.permute.xlu0 8
        %1551 = vperm.xlu0 %1550, %v1339
        %v1552 = vpop.permute.xlu0 %1551
        %v1554 = vmul.f32 %v1540, %v885
        %v1555 = vmul.f32 %v1544, %v886
        %v1556 = vmul.f32 %v1548, %v885
        %v1557 = vmul.f32 %v1552, %v886
        %v1558 = vadd.f32 %v1534, %v1554
        %v1559 = vadd.f32 %v1535, %v1555
        %v1560 = vadd.f32 %v1536, %v1556
        %v1561 = vadd.f32 %v1537, %v1557
        %1562 = vset.pattern.permute.xlu0 9
        %1563 = vperm.xlu0 %1562, %v1292
        %v1564 = vpop.permute.xlu0 %1563
        %1566 = vset.pattern.permute.xlu0 9
        %1567 = vperm.xlu0 %1566, %v1295
        %v1568 = vpop.permute.xlu0 %1567
        %1570 = vset.pattern.permute.xlu0 9
        %1571 = vperm.xlu0 %1570, %v1336
        %v1572 = vpop.permute.xlu0 %1571
        %1574 = vset.pattern.permute.xlu0 9
        %1575 = vperm.xlu0 %1574, %v1339
        %v1576 = vpop.permute.xlu0 %1575
        %v1578 = vmul.f32 %v1564, %v891
        %v1579 = vmul.f32 %v1568, %v892
        %v1580 = vmul.f32 %v1572, %v891
        %v1581 = vmul.f32 %v1576, %v892
        %v1582 = vadd.f32 %v1558, %v1578
        %v1583 = vadd.f32 %v1559, %v1579
        %v1584 = vadd.f32 %v1560, %v1580
        %v1585 = vadd.f32 %v1561, %v1581
        %1586 = vset.pattern.permute.xlu0 10
        %1587 = vperm.xlu0 %1586, %v1292
        %v1588 = vpop.permute.xlu0 %1587
        %1590 = vset.pattern.permute.xlu0 10
        %1591 = vperm.xlu0 %1590, %v1295
        %v1592 = vpop.permute.xlu0 %1591
        %1594 = vset.pattern.permute.xlu0 10
        %1595 = vperm.xlu0 %1594, %v1336
        %v1596 = vpop.permute.xlu0 %1595
        %1598 = vset.pattern.permute.xlu0 10
        %1599 = vperm.xlu0 %1598, %v1339
        %v1600 = vpop.permute.xlu0 %1599
        %v1602 = vmul.f32 %v1588, %v897
        %v1603 = vmul.f32 %v1592, %v898
        %v1604 = vmul.f32 %v1596, %v897
        %v1605 = vmul.f32 %v1600, %v898
        %v1606 = vadd.f32 %v1582, %v1602
        %v1607 = vadd.f32 %v1583, %v1603
        %v1608 = vadd.f32 %v1584, %v1604
        %v1609 = vadd.f32 %v1585, %v1605
        %1610 = vset.pattern.permute.xlu0 11
        %1611 = vperm.xlu0 %1610, %v1292
        %v1612 = vpop.permute.xlu0 %1611
        %1614 = vset.pattern.permute.xlu0 11
        %1615 = vperm.xlu0 %1614, %v1295
        %v1616 = vpop.permute.xlu0 %1615
        %1618 = vset.pattern.permute.xlu0 11
        %1619 = vperm.xlu0 %1618, %v1336
        %v1620 = vpop.permute.xlu0 %1619
        %1622 = vset.pattern.permute.xlu0 11
        %1623 = vperm.xlu0 %1622, %v1339
        %v1624 = vpop.permute.xlu0 %1623
        %v1626 = vmul.f32 %v1612, %v903
        %v1627 = vmul.f32 %v1616, %v904
        %v1628 = vmul.f32 %v1620, %v903
        %v1629 = vmul.f32 %v1624, %v904
        %v1630 = vadd.f32 %v1606, %v1626
        %v1631 = vadd.f32 %v1607, %v1627
        %v1632 = vadd.f32 %v1608, %v1628
        %v1633 = vadd.f32 %v1609, %v1629
        %1634 = vset.pattern.permute.xlu0 12
        %1635 = vperm.xlu0 %1634, %v1292
        %v1636 = vpop.permute.xlu0 %1635
        %1638 = vset.pattern.permute.xlu0 12
        %1639 = vperm.xlu0 %1638, %v1295
        %v1640 = vpop.permute.xlu0 %1639
        %1642 = vset.pattern.permute.xlu0 12
        %1643 = vperm.xlu0 %1642, %v1336
        %v1644 = vpop.permute.xlu0 %1643
        %1646 = vset.pattern.permute.xlu0 12
        %1647 = vperm.xlu0 %1646, %v1339
        %v1648 = vpop.permute.xlu0 %1647
        %v1650 = vmul.f32 %v1636, %v909
        %v1651 = vmul.f32 %v1640, %v910
        %v1652 = vmul.f32 %v1644, %v909
        %v1653 = vmul.f32 %v1648, %v910
        %v1654 = vadd.f32 %v1630, %v1650
        %v1655 = vadd.f32 %v1631, %v1651
        %v1656 = vadd.f32 %v1632, %v1652
        %v1657 = vadd.f32 %v1633, %v1653
        %1658 = vset.pattern.permute.xlu0 13
        %1659 = vperm.xlu0 %1658, %v1292
        %v1660 = vpop.permute.xlu0 %1659
        %1662 = vset.pattern.permute.xlu0 13
        %1663 = vperm.xlu0 %1662, %v1295
        %v1664 = vpop.permute.xlu0 %1663
        %1666 = vset.pattern.permute.xlu0 13
        %1667 = vperm.xlu0 %1666, %v1336
        %v1668 = vpop.permute.xlu0 %1667
        %1670 = vset.pattern.permute.xlu0 13
        %1671 = vperm.xlu0 %1670, %v1339
        %v1672 = vpop.permute.xlu0 %1671
        %v1674 = vmul.f32 %v1660, %v915
        %v1675 = vmul.f32 %v1664, %v916
        %v1676 = vmul.f32 %v1668, %v915
        %v1677 = vmul.f32 %v1672, %v916
        %v1678 = vadd.f32 %v1654, %v1674
        %v1679 = vadd.f32 %v1655, %v1675
        %v1680 = vadd.f32 %v1656, %v1676
        %v1681 = vadd.f32 %v1657, %v1677
        %1682 = vset.pattern.permute.xlu0 14
        %1683 = vperm.xlu0 %1682, %v1292
        %v1684 = vpop.permute.xlu0 %1683
        %1686 = vset.pattern.permute.xlu0 14
        %1687 = vperm.xlu0 %1686, %v1295
        %v1688 = vpop.permute.xlu0 %1687
        %1690 = vset.pattern.permute.xlu0 14
        %1691 = vperm.xlu0 %1690, %v1336
        %v1692 = vpop.permute.xlu0 %1691
        %1694 = vset.pattern.permute.xlu0 14
        %1695 = vperm.xlu0 %1694, %v1339
        %v1696 = vpop.permute.xlu0 %1695
        %v1698 = vmul.f32 %v1684, %v921
        %v1699 = vmul.f32 %v1688, %v922
        %v1700 = vmul.f32 %v1692, %v921
        %v1701 = vmul.f32 %v1696, %v922
        %v1702 = vadd.f32 %v1678, %v1698
        %v1703 = vadd.f32 %v1679, %v1699
        %v1704 = vadd.f32 %v1680, %v1700
        %v1705 = vadd.f32 %v1681, %v1701
        %1706 = vset.pattern.permute.xlu0 15
        %1707 = vperm.xlu0 %1706, %v1292
        %v1708 = vpop.permute.xlu0 %1707
        %1710 = vset.pattern.permute.xlu0 15
        %1711 = vperm.xlu0 %1710, %v1295
        %v1712 = vpop.permute.xlu0 %1711
        %1714 = vset.pattern.permute.xlu0 15
        %1715 = vperm.xlu0 %1714, %v1336
        %v1716 = vpop.permute.xlu0 %1715
        %1718 = vset.pattern.permute.xlu0 15
        %1719 = vperm.xlu0 %1718, %v1339
        %v1720 = vpop.permute.xlu0 %1719
        %v1722 = vmul.f32 %v1708, %v927
        %v1723 = vmul.f32 %v1712, %v928
        %v1724 = vmul.f32 %v1716, %v927
        %v1725 = vmul.f32 %v1720, %v928
        %v1726 = vadd.f32 %v1702, %v1722
        %v1727 = vadd.f32 %v1703, %v1723
        %v1728 = vadd.f32 %v1704, %v1724
        %v1729 = vadd.f32 %v1705, %v1725
        %v1731 = vsel %vm1253, %v1217, 0
        %1733 = vmatprep.subr.bf16.mxu0 0
        %1734 = vmatpush1.bf16.xpose.msra.mxu0 0
        %1735 = vmatprep.subr.bf16.mxu0 0
        %1736 = vmatpush1.bf16.xpose.msra.mxu0 0
        %1737 = vmatprep.subr.bf16.mxu0 0
        %1738 = vmatpush1.bf16.xpose.msra.mxu0 0
        %1739 = vmatprep.subr.bf16.mxu0 0
        %1740 = vmatpush1.bf16.xpose.msra.mxu0 0
        %1741 = vmatprep.subr.bf16.mxu0 0
        %1742 = vmatpush1.bf16.xpose.msra.mxu0 0
        %1743 = vmatprep.subr.bf16.mxu0 0
        %1744 = vmatpush1.bf16.xpose.msra.mxu0 0
        %1745 = vmatprep.subr.bf16.mxu0 0
        %1746 = vmatpush1.bf16.xpose.msra.mxu0 0
        %1747 = vmatprep.subr.bf16.mxu0 0
        %1748 = vmatpush1.bf16.xpose.msra.mxu0 %v1731
        %1749 = vmatprep.subr.bf16.mxu0 0
        %1750 = vmatpush2.bf16.xpose.msra.mxu0 0
        %1751 = vmatprep.subr.bf16.mxu0 0
        %1752 = vmatpush2.bf16.xpose.msra.mxu0 0
        %1753 = vmatprep.subr.bf16.mxu0 0
        %1754 = vmatpush2.bf16.xpose.msra.mxu0 0
        %1755 = vmatprep.subr.bf16.mxu0 0
        %1756 = vmatpush2.bf16.xpose.msra.mxu0 0
        %1757 = vmatprep.subr.bf16.mxu0 0
        %1758 = vmatpush2.bf16.xpose.msra.mxu0 0
        %1759 = vmatprep.subr.bf16.mxu0 0
        %1760 = vmatpush2.bf16.xpose.msra.mxu0 0
        %1761 = vmatprep.subr.bf16.mxu0 0
        %1762 = vmatpush2.bf16.xpose.msra.mxu0 0
        %1763 = vmatprep.subr.bf16.mxu0 0
        %1764 = vmatpush2.bf16.xpose.msra.mxu0 0
        %1765 = vmatprep.mubr.bf16.mxu0 0
        %1766 = vmatmul.mubr.bf16.gmra.mxu0 %v1255
        %v1767 = vpop.f32.mrf.mxu0
        %v1768 = vadd.f32 %v1726, %v1767
        %v1769 = vpop.f32.mrf.mxu0
        %v1770 = vpop.f32.mrf.mxu0
        %v1771 = vadd.f32 %v1727, %v1770
        %v1772 = vpop.f32.mrf.mxu0
        %1773 = vdwg.mxu0
        %v1775 = vsel %vm1253, %v1218, 0
        %1777 = vmatprep.subr.bf16.mxu0 0
        %1778 = vmatpush1.bf16.xpose.msra.mxu0 0
        %1779 = vmatprep.subr.bf16.mxu0 0
        %1780 = vmatpush1.bf16.xpose.msra.mxu0 0
        %1781 = vmatprep.subr.bf16.mxu0 0
        %1782 = vmatpush1.bf16.xpose.msra.mxu0 0
        %1783 = vmatprep.subr.bf16.mxu0 0
        %1784 = vmatpush1.bf16.xpose.msra.mxu0 0
        %1785 = vmatprep.subr.bf16.mxu0 0
        %1786 = vmatpush1.bf16.xpose.msra.mxu0 0
        %1787 = vmatprep.subr.bf16.mxu0 0
        %1788 = vmatpush1.bf16.xpose.msra.mxu0 0
        %1789 = vmatprep.subr.bf16.mxu0 0
        %1790 = vmatpush1.bf16.xpose.msra.mxu0 0
        %1791 = vmatprep.subr.bf16.mxu0 0
        %1792 = vmatpush1.bf16.xpose.msra.mxu0 %v1775
        %1793 = vmatprep.subr.bf16.mxu0 0
        %1794 = vmatpush2.bf16.xpose.msra.mxu0 0
        %1795 = vmatprep.subr.bf16.mxu0 0
        %1796 = vmatpush2.bf16.xpose.msra.mxu0 0
        %1797 = vmatprep.subr.bf16.mxu0 0
        %1798 = vmatpush2.bf16.xpose.msra.mxu0 0
        %1799 = vmatprep.subr.bf16.mxu0 0
        %1800 = vmatpush2.bf16.xpose.msra.mxu0 0
        %1801 = vmatprep.subr.bf16.mxu0 0
        %1802 = vmatpush2.bf16.xpose.msra.mxu0 0
        %1803 = vmatprep.subr.bf16.mxu0 0
        %1804 = vmatpush2.bf16.xpose.msra.mxu0 0
        %1805 = vmatprep.subr.bf16.mxu0 0
        %1806 = vmatpush2.bf16.xpose.msra.mxu0 0
        %1807 = vmatprep.subr.bf16.mxu0 0
        %1808 = vmatpush2.bf16.xpose.msra.mxu0 0
        %1809 = vmatprep.mubr.bf16.mxu0 0
        %1810 = vmatmul.mubr.bf16.gmra.mxu0 %v1299
        %v1811 = vpop.f32.mrf.mxu0
        %v1812 = vadd.f32 %v1728, %v1811
        %v1813 = vpop.f32.mrf.mxu0
        %v1814 = vpop.f32.mrf.mxu0
        %v1815 = vadd.f32 %v1729, %v1814
        %v1816 = vpop.f32.mrf.mxu0
        %1817 = vdwg.mxu0
        %v1818 = vmul.f32 %v1768, 0.125
        %v1819 = vmul.f32 %v1771, 0.125
        %v1820 = vmul.f32 %v1812, 0.125
        %v1821 = vmul.f32 %v1815, 0.125
        %v1822 = vadd.f32 %v1818, %v829
        %v1823 = vadd.f32 %v1819, %v830
        %v1824 = vadd.f32 %v1820, %v829
        %v1825 = vadd.f32 %v1821, %v830
        %vm1826 = vcmask 130048
        %v1827 = vsel %vm1826, %v1822, -inf
        %1828 = vmax.xlane.f32.xlu0 %v1827
        %v1829 = vpop.xlane.xlu0 %1828
        %v1830 = vsel %vm1826, %v1823, -inf
        %1831 = vmax.xlane.f32.xlu0 %v1830
        %v1832 = vpop.xlane.xlu0 %1831
        %v1833 = vsel %vm1826, %v1824, -inf
        %1834 = vmax.xlane.f32.xlu0 %v1833
        %v1835 = vpop.xlane.xlu0 %1834
        %v1836 = vsel %vm1826, %v1825, -inf
        %1837 = vmax.xlane.f32.xlu0 %v1836
        %v1838 = vpop.xlane.xlu0 %1837
        %v1839 = vsub.f32 %v1822, %v1829
        %v1840 = vsub.f32 %v1823, %v1832
        %v1841 = vsub.f32 %v1824, %v1835
        %v1842 = vsub.f32 %v1825, %v1838
        %v1843 = vmul.f32 %v1839, 1.442695
        %v1844 = vpow.pop %v1843
        %v1845 = vmul.f32 %v1840, 1.442695
        %v1846 = vpow.pop %v1845
        %v1847 = vmul.f32 %v1841, 1.442695
        %v1848 = vpow.pop %v1847
        %v1849 = vmul.f32 %v1842, 1.442695
        %v1850 = vpow.pop %v1849
        %v1851 = vsel %vm1826, %v1844, 0.0
        %1852 = vadd.xlane.f32.xlu0 %v1851
        %v1853 = vpop.xlane.xlu0 %1852
        %v1854 = vsel %vm1826, %v1846, 0.0
        %1855 = vadd.xlane.f32.xlu0 %v1854
        %v1856 = vpop.xlane.xlu0 %1855
        %v1857 = vsel %vm1826, %v1848, 0.0
        %1858 = vadd.xlane.f32.xlu0 %v1857
        %v1859 = vpop.xlane.xlu0 %1858
        %v1860 = vsel %vm1826, %v1850, 0.0
        %1861 = vadd.xlane.f32.xlu0 %v1860
        %v1862 = vpop.xlane.xlu0 %1861
        %v1863 = vrcp.pop %v1853
        %v1864 = vrcp.pop %v1856
        %v1865 = vrcp.pop %v1859
        %v1866 = vrcp.pop %v1862
        %v1867 = vmul.f32 %v1844, %v1863
        %v1868 = vmul.f32 %v1846, %v1864
        %v1869 = vmul.f32 %v1848, %v1865
        %v1870 = vmul.f32 %v1850, %v1866
        %1871 = vst.msk [vmem:[%s795] sm:$0xff] %vm1826, %v1867
        %1872 = vst.msk [vmem:[%s795 + $0x8] sm:$0xff] %vm1826, %v1868
        %1873 = vst.msk [vmem:[%s795 + $0x10] sm:$0xff] %vm1826, %v1869
        %1874 = vst.msk [vmem:[%s795 + $0x18] sm:$0xff] %vm1826, %v1870
        %v1875 = vpack.c.bf16 %v1868, %v1867
        %v1876 = vpack.c.bf16 %v1870, %v1869
        %v1878 = vsel %vm1826, %v1875, 0
        %1880 = vmatprep.subr.bf16.mxu0 0
        %1881 = vmatpush1.bf16.msra.mxu0 0
        %1882 = vmatprep.subr.bf16.mxu0 0
        %1883 = vmatpush1.bf16.msra.mxu0 0
        %1884 = vmatprep.subr.bf16.mxu0 0
        %1885 = vmatpush1.bf16.msra.mxu0 0
        %1886 = vmatprep.subr.bf16.mxu0 0
        %1887 = vmatpush1.bf16.msra.mxu0 0
        %1888 = vmatprep.subr.bf16.mxu0 0
        %1889 = vmatpush1.bf16.msra.mxu0 0
        %1890 = vmatprep.subr.bf16.mxu0 0
        %1891 = vmatpush1.bf16.msra.mxu0 0
        %1892 = vmatprep.subr.bf16.mxu0 0
        %1893 = vmatpush1.bf16.msra.mxu0 0
        %1894 = vmatprep.subr.bf16.mxu0 0
        %1895 = vmatpush1.bf16.msra.mxu0 %v1227
        %1896 = vmatprep.subr.bf16.mxu0 0
        %1897 = vmatpush2.bf16.msra.mxu0 0
        %1898 = vmatprep.subr.bf16.mxu0 0
        %1899 = vmatpush2.bf16.msra.mxu0 0
        %1900 = vmatprep.subr.bf16.mxu0 0
        %1901 = vmatpush2.bf16.msra.mxu0 0
        %1902 = vmatprep.subr.bf16.mxu0 0
        %1903 = vmatpush2.bf16.msra.mxu0 0
        %1904 = vmatprep.subr.bf16.mxu0 0
        %1905 = vmatpush2.bf16.msra.mxu0 0
        %1906 = vmatprep.subr.bf16.mxu0 0
        %1907 = vmatpush2.bf16.msra.mxu0 0
        %1908 = vmatprep.subr.bf16.mxu0 0
        %1909 = vmatpush2.bf16.msra.mxu0 0
        %1910 = vmatprep.subr.bf16.mxu0 0
        %1911 = vmatpush2.bf16.msra.mxu0 0
        %1912 = vmatprep.mubr.bf16.mxu0 0
        %1913 = vmatmul.mubr.bf16.gmra.mxu0 %v1878
        %v1914 = vpop.f32.mrf.mxu0
        %v1915 = vadd.f32 0.0, %v1914
        %v1916 = vpop.f32.mrf.mxu0
        %v1917 = vpop.f32.mrf.mxu0
        %v1918 = vadd.f32 0.0, %v1917
        %v1919 = vpop.f32.mrf.mxu0
        %1920 = vdwg.mxu0
        %v1922 = vsel %vm1826, %v1876, 0
        %1924 = vmatprep.subr.bf16.mxu0 0
        %1925 = vmatpush1.bf16.msra.mxu0 0
        %1926 = vmatprep.subr.bf16.mxu0 0
        %1927 = vmatpush1.bf16.msra.mxu0 0
        %1928 = vmatprep.subr.bf16.mxu0 0
        %1929 = vmatpush1.bf16.msra.mxu0 0
        %1930 = vmatprep.subr.bf16.mxu0 0
        %1931 = vmatpush1.bf16.msra.mxu0 0
        %1932 = vmatprep.subr.bf16.mxu0 0
        %1933 = vmatpush1.bf16.msra.mxu0 0
        %1934 = vmatprep.subr.bf16.mxu0 0
        %1935 = vmatpush1.bf16.msra.mxu0 0
        %1936 = vmatprep.subr.bf16.mxu0 0
        %1937 = vmatpush1.bf16.msra.mxu0 0
        %1938 = vmatprep.subr.bf16.mxu0 0
        %1939 = vmatpush1.bf16.msra.mxu0 %v1228
        %1940 = vmatprep.subr.bf16.mxu0 0
        %1941 = vmatpush2.bf16.msra.mxu0 0
        %1942 = vmatprep.subr.bf16.mxu0 0
        %1943 = vmatpush2.bf16.msra.mxu0 0
        %1944 = vmatprep.subr.bf16.mxu0 0
        %1945 = vmatpush2.bf16.msra.mxu0 0
        %1946 = vmatprep.subr.bf16.mxu0 0
        %1947 = vmatpush2.bf16.msra.mxu0 0
        %1948 = vmatprep.subr.bf16.mxu0 0
        %1949 = vmatpush2.bf16.msra.mxu0 0
        %1950 = vmatprep.subr.bf16.mxu0 0
        %1951 = vmatpush2.bf16.msra.mxu0 0
        %1952 = vmatprep.subr.bf16.mxu0 0
        %1953 = vmatpush2.bf16.msra.mxu0 0
        %1954 = vmatprep.subr.bf16.mxu0 0
        %1955 = vmatpush2.bf16.msra.mxu0 0
        %1956 = vmatprep.mubr.bf16.mxu0 0
        %1957 = vmatmul.mubr.bf16.gmra.mxu0 %v1922
        %v1958 = vpop.f32.mrf.mxu0
        %v1959 = vadd.f32 0.0, %v1958
        %v1960 = vpop.f32.mrf.mxu0
        %v1961 = vpop.f32.mrf.mxu0
        %v1962 = vadd.f32 0.0, %v1961
        %v1963 = vpop.f32.mrf.mxu0
        %1964 = vdwg.mxu0
        %v1965 = vld [vmem:[%s4] sm:$0xf]
        %v1966 = vld [vmem:[%s4 + $0x4] sm:$0xf]
        %v1967 = vld [vmem:[%s4 + $0x8] sm:$0xf]
        %v1968 = vld [vmem:[%s4 + $0xc] sm:$0xf]
        %v1969 = vld [vmem:[%s4 + $0x10] sm:$0xf]
        %v1970 = vld [vmem:[%s4 + $0x14] sm:$0xf]
        %v1971 = vld [vmem:[%s4 + $0x18] sm:$0xf]
        %v1972 = vld [vmem:[%s4 + $0x1c] sm:$0xf]
        %v1973 = vld [vmem:[%s4 + $0x20] sm:$0xf]
        %v1974 = vld [vmem:[%s4 + $0x24] sm:$0xf]
        %v1975 = vld [vmem:[%s4 + $0x28] sm:$0xf]
        %v1976 = vld [vmem:[%s4 + $0x2c] sm:$0xf]
        %v1977 = vld [vmem:[%s4 + $0x30] sm:$0xf]
        %v1978 = vld [vmem:[%s4 + $0x34] sm:$0xf]
        %v1979 = vld [vmem:[%s4 + $0x38] sm:$0xf]
        %v1980 = vld [vmem:[%s4 + $0x3c] sm:$0xf]
        %v1981 = vld [vmem:[#allocation10] sm:$0x1]
        %v1982 = vpack.c.bf16 %v1918, %v1915
        %v1991 = vunpack.c.l.b16 %v1965
        %v1992 = vunpack.c.l.b16 %v1966
        %v1993 = vunpack.c.l.b16 %v1967
        %v1994 = vunpack.c.l.b16 %v1968
        %v1995 = vunpack.c.l.b16 %v1969
        %v1996 = vunpack.c.l.b16 %v1970
        %v1997 = vunpack.c.l.b16 %v1971
        %v1998 = vunpack.c.l.b16 %v1972
        %v1999 = vpack.c.b16 %v1992, %v1991
        %v2000 = vpack.c.b16 %v1994, %v1993
        %v2001 = vpack.c.b16 %v1996, %v1995
        %v2002 = vpack.c.b16 %v1998, %v1997
        %v2008 = vsel %vm1253, %v1982, 0
        %2010 = vmatprep.subr.bf16.mxu0 0
        %2011 = vmatpush1.bf16.msra.mxu0 0
        %2012 = vmatprep.subr.bf16.mxu0 0
        %2013 = vmatpush1.bf16.msra.mxu0 0
        %2014 = vmatprep.subr.bf16.mxu0 0
        %2015 = vmatpush1.bf16.msra.mxu0 0
        %2016 = vmatprep.subr.bf16.mxu0 0
        %2017 = vmatpush1.bf16.msra.mxu0 0
        %2018 = vmatprep.subr.bf16.mxu0 0
        %2019 = vmatpush1.bf16.msra.mxu0 %v2002
        %2020 = vmatprep.subr.bf16.mxu0 0
        %2021 = vmatpush1.bf16.msra.mxu0 %v2001
        %2022 = vmatprep.subr.bf16.mxu0 0
        %2023 = vmatpush1.bf16.msra.mxu0 %v2000
        %2024 = vmatprep.subr.bf16.mxu0 0
        %2025 = vmatpush1.bf16.msra.mxu0 %v1999
        %2026 = vmatprep.subr.bf16.mxu0 0
        %2027 = vmatpush2.bf16.msra.mxu0 0
        %2028 = vmatprep.subr.bf16.mxu0 0
        %2029 = vmatpush2.bf16.msra.mxu0 0
        %2030 = vmatprep.subr.bf16.mxu0 0
        %2031 = vmatpush2.bf16.msra.mxu0 0
        %2032 = vmatprep.subr.bf16.mxu0 0
        %2033 = vmatpush2.bf16.msra.mxu0 0
        %2034 = vmatprep.subr.bf16.mxu0 0
        %2035 = vmatpush2.bf16.msra.mxu0 0
        %2036 = vmatprep.subr.bf16.mxu0 0
        %2037 = vmatpush2.bf16.msra.mxu0 0
        %2038 = vmatprep.subr.bf16.mxu0 0
        %2039 = vmatpush2.bf16.msra.mxu0 0
        %2040 = vmatprep.subr.bf16.mxu0 0
        %2041 = vmatpush2.bf16.msra.mxu0 0
        %2042 = vmatprep.mubr.bf16.mxu0 0
        %2043 = vmatmul.mubr.bf16.gmra.mxu0 %v2008
        %v2044 = vpop.f32.mrf.mxu0
        %v2045 = vadd.f32 0.0, %v2044
        %v2046 = vpop.f32.mrf.mxu0
        %v2047 = vpop.f32.mrf.mxu0
        %v2048 = vadd.f32 0.0, %v2047
        %v2049 = vpop.f32.mrf.mxu0
        %2050 = vdwg.mxu0
        %v2052 = vlaneseq
        %v2053 = vshrl.u32 %v2052, 7
        %v2054 = vsub.s32 0, %v2053
        %v2055 = vrot.slane %v1981, %v2054
        %v2057 = vadd.f32 %v2055, %v2045
        %v2058 = vadd.f32 %v2055, %v2048
        %v2059 = vpack.c.bf16 %v1962, %v1959
        %v2068 = vunpack.c.l.b16 %v1973
        %v2069 = vunpack.c.l.b16 %v1974
        %v2070 = vunpack.c.l.b16 %v1975
        %v2071 = vunpack.c.l.b16 %v1976
        %v2072 = vunpack.c.l.b16 %v1977
        %v2073 = vunpack.c.l.b16 %v1978
        %v2074 = vunpack.c.l.b16 %v1979
        %v2075 = vunpack.c.l.b16 %v1980
        %v2076 = vpack.c.b16 %v2069, %v2068
        %v2077 = vpack.c.b16 %v2071, %v2070
        %v2078 = vpack.c.b16 %v2073, %v2072
        %v2079 = vpack.c.b16 %v2075, %v2074
        %v2085 = vsel %vm1253, %v2059, 0
        %2087 = vmatprep.subr.bf16.mxu0 0
        %2088 = vmatpush1.bf16.msra.mxu0 0
        %2089 = vmatprep.subr.bf16.mxu0 0
        %2090 = vmatpush1.bf16.msra.mxu0 0
        %2091 = vmatprep.subr.bf16.mxu0 0
        %2092 = vmatpush1.bf16.msra.mxu0 0
        %2093 = vmatprep.subr.bf16.mxu0 0
        %2094 = vmatpush1.bf16.msra.mxu0 0
        %2095 = vmatprep.subr.bf16.mxu0 0
        %2096 = vmatpush1.bf16.msra.mxu0 %v2079
        %2097 = vmatprep.subr.bf16.mxu0 0
        %2098 = vmatpush1.bf16.msra.mxu0 %v2078
        %2099 = vmatprep.subr.bf16.mxu0 0
        %2100 = vmatpush1.bf16.msra.mxu0 %v2077
        %2101 = vmatprep.subr.bf16.mxu0 0
        %2102 = vmatpush1.bf16.msra.mxu0 %v2076
        %2103 = vmatprep.subr.bf16.mxu0 0
        %2104 = vmatpush2.bf16.msra.mxu0 0
        %2105 = vmatprep.subr.bf16.mxu0 0
        %2106 = vmatpush2.bf16.msra.mxu0 0
        %2107 = vmatprep.subr.bf16.mxu0 0
        %2108 = vmatpush2.bf16.msra.mxu0 0
        %2109 = vmatprep.subr.bf16.mxu0 0
        %2110 = vmatpush2.bf16.msra.mxu0 0
        %2111 = vmatprep.subr.bf16.mxu0 0
        %2112 = vmatpush2.bf16.msra.mxu0 0
        %2113 = vmatprep.subr.bf16.mxu0 0
        %2114 = vmatpush2.bf16.msra.mxu0 0
        %2115 = vmatprep.subr.bf16.mxu0 0
        %2116 = vmatpush2.bf16.msra.mxu0 0
        %2117 = vmatprep.subr.bf16.mxu0 0
        %2118 = vmatpush2.bf16.msra.mxu0 0
        %2119 = vmatprep.mubr.bf16.mxu0 0
        %2120 = vmatmul.mubr.bf16.gmra.mxu0 %v2085
        %v2121 = vpop.f32.mrf.mxu0
        %v2122 = vadd.f32 0.0, %v2121
        %v2123 = vpop.f32.mrf.mxu0
        %v2124 = vpop.f32.mrf.mxu0
        %v2125 = vadd.f32 0.0, %v2124
        %v2126 = vpop.f32.mrf.mxu0
        %2127 = vdwg.mxu0
        %v2128 = vadd.f32 %v2057, %v2122
        %v2129 = vadd.f32 %v2058, %v2125
        %v2130 = vadd.f32 %v2128, %v804
        %v2131 = vadd.f32 %v2129, %v805
        %2132 = vadd.xlane.f32.xlu0 %v2130
        %v2133 = vpop.xlane.xlu0 %2132
        %2134 = vadd.xlane.f32.xlu0 %v2131
        %v2135 = vpop.xlane.xlu0 %2134
        %v2136 = vrcp.pop 128.0
        %v2137 = vmul.f32 %v2133, %v2136
        %v2138 = vmul.f32 %v2135, %v2136
        %v2139 = vsub.f32 %v2130, %v2137
        %v2140 = vsub.f32 %v2131, %v2138
        %v2141 = vmul.f32 %v2139, %v2139
        %v2142 = vmul.f32 %v2140, %v2140
        %2143 = vadd.xlane.f32.xlu0 %v2141
        %v2144 = vpop.xlane.xlu0 %2143
        %2145 = vadd.xlane.f32.xlu0 %v2142
        %v2146 = vpop.xlane.xlu0 %2145
        %v2147 = vmul.f32 %v2144, %v2136
        %v2148 = vmul.f32 %v2146, %v2136
        %v2149 = vadd.f32 %v2147, 1e-06
        %v2150 = vadd.f32 %v2148, 1e-06
        %v2151 = vrsqrt.pop %v2149
        %v2152 = vrsqrt.pop %v2150
        %v2153 = vmul.f32 %v2139, %v2151
        %v2154 = vmul.f32 %v2140, %v2152
        %v2155 = vld [vmem:[#allocation14] sm:$0x1]
        %v2157 = vlaneseq
        %v2158 = vshrl.u32 %v2157, 7
        %v2159 = vsub.s32 0, %v2158
        %v2160 = vrot.slane %v2155, %v2159
        %v2162 = vmul.f32 %v2153, %v2160
        %v2163 = vmul.f32 %v2154, %v2160
        %v2164 = vld [vmem:[#allocation16] sm:$0x1]
        %v2166 = vlaneseq
        %v2167 = vshrl.u32 %v2166, 7
        %v2168 = vsub.s32 0, %v2167
        %v2169 = vrot.slane %v2164, %v2168
        %v2171 = vadd.f32 %v2162, %v2169
        %v2172 = vadd.f32 %v2163, %v2169
        %v2173 = vpack.c.bf16 %v2172, %v2171
        %v2174 = vld [vmem:[%s6] sm:$0xf]
        %v2175 = vld [vmem:[%s6 + $0x4] sm:$0xf]
        %v2176 = vld [vmem:[%s6 + $0x8] sm:$0xf]
        %v2177 = vld [vmem:[%s6 + $0xc] sm:$0xf]
        %v2178 = vld [vmem:[%s6 + $0x10] sm:$0xf]
        %v2179 = vld [vmem:[%s6 + $0x14] sm:$0xf]
        %v2180 = vld [vmem:[%s6 + $0x18] sm:$0xf]
        %v2181 = vld [vmem:[%s6 + $0x1c] sm:$0xf]
        %v2182 = vld [vmem:[%s6 + $0x20] sm:$0xf]
        %v2183 = vld [vmem:[%s6 + $0x24] sm:$0xf]
        %v2184 = vld [vmem:[%s6 + $0x28] sm:$0xf]
        %v2185 = vld [vmem:[%s6 + $0x2c] sm:$0xf]
        %v2186 = vld [vmem:[%s6 + $0x30] sm:$0xf]
        %v2187 = vld [vmem:[%s6 + $0x34] sm:$0xf]
        %v2188 = vld [vmem:[%s6 + $0x38] sm:$0xf]
        %v2189 = vld [vmem:[%s6 + $0x3c] sm:$0xf]
        %v2190 = vld [vmem:[#allocation11] sm:$0x1]
        %v2192 = vlaneseq
        %v2193 = vshrl.u32 %v2192, 7
        %v2194 = vsub.s32 0, %v2193
        %v2195 = vrot.slane %v2190, %v2194
        %v2213 = vunpack.c.l.b16 %v2174
        %v2214 = vunpack.c.l.b16 %v2175
        %v2215 = vunpack.c.l.b16 %v2176
        %v2216 = vunpack.c.l.b16 %v2177
        %v2217 = vunpack.c.l.b16 %v2178
        %v2218 = vunpack.c.l.b16 %v2179
        %v2219 = vunpack.c.l.b16 %v2180
        %v2220 = vunpack.c.l.b16 %v2181
        %v2221 = vunpack.c.l.b16 %v2182
        %v2222 = vunpack.c.l.b16 %v2183
        %v2223 = vunpack.c.l.b16 %v2184
        %v2224 = vunpack.c.l.b16 %v2185
        %v2225 = vunpack.c.l.b16 %v2186
        %v2226 = vunpack.c.l.b16 %v2187
        %v2227 = vunpack.c.l.b16 %v2188
        %v2228 = vunpack.c.l.b16 %v2189
        %v2229 = vpack.c.b16 %v2214, %v2213
        %v2230 = vpack.c.b16 %v2216, %v2215
        %v2231 = vpack.c.b16 %v2218, %v2217
        %v2232 = vpack.c.b16 %v2220, %v2219
        %v2233 = vpack.c.b16 %v2222, %v2221
        %v2234 = vpack.c.b16 %v2224, %v2223
        %v2235 = vpack.c.b16 %v2226, %v2225
        %v2236 = vpack.c.b16 %v2228, %v2227
        %2245 = vmatprep.subr.bf16.mxu0 0
        %2246 = vmatpush1.bf16.msra.mxu0 %v2236
        %2247 = vmatprep.subr.bf16.mxu0 0
        %2248 = vmatpush1.bf16.msra.mxu0 %v2235
        %2249 = vmatprep.subr.bf16.mxu0 0
        %2250 = vmatpush1.bf16.msra.mxu0 %v2234
        %2251 = vmatprep.subr.bf16.mxu0 0
        %2252 = vmatpush1.bf16.msra.mxu0 %v2233
        %2253 = vmatprep.subr.bf16.mxu0 0
        %2254 = vmatpush1.bf16.msra.mxu0 %v2232
        %2255 = vmatprep.subr.bf16.mxu0 0
        %2256 = vmatpush1.bf16.msra.mxu0 %v2231
        %2257 = vmatprep.subr.bf16.mxu0 0
        %2258 = vmatpush1.bf16.msra.mxu0 %v2230
        %2259 = vmatprep.subr.bf16.mxu0 0
        %2260 = vmatpush1.bf16.msra.mxu0 %v2229
        %2261 = vmatprep.subr.bf16.mxu0 0
        %2262 = vmatpush2.bf16.msra.mxu0 0
        %2263 = vmatprep.subr.bf16.mxu0 0
        %2264 = vmatpush2.bf16.msra.mxu0 0
        %2265 = vmatprep.subr.bf16.mxu0 0
        %2266 = vmatpush2.bf16.msra.mxu0 0
        %2267 = vmatprep.subr.bf16.mxu0 0
        %2268 = vmatpush2.bf16.msra.mxu0 0
        %2269 = vmatprep.subr.bf16.mxu0 0
        %2270 = vmatpush2.bf16.msra.mxu0 0
        %2271 = vmatprep.subr.bf16.mxu0 0
        %2272 = vmatpush2.bf16.msra.mxu0 0
        %2273 = vmatprep.subr.bf16.mxu0 0
        %2274 = vmatpush2.bf16.msra.mxu0 0
        %2275 = vmatprep.subr.bf16.mxu0 0
        %2276 = vmatpush2.bf16.msra.mxu0 0
        %2277 = vmatprep.mubr.bf16.mxu0 0
        %2278 = vmatmul.mubr.bf16.gmra.mxu0 %v2173
        %v2279 = vpop.f32.mrf.mxu0
        %v2280 = vadd.f32 %v2195, %v2279
        %v2281 = vpop.f32.mrf.mxu0
        %v2282 = vpop.f32.mrf.mxu0
        %v2283 = vadd.f32 %v2195, %v2282
        %v2284 = vpop.f32.mrf.mxu0
        %2285 = vdwg.mxu0
        %v2286 = vmax.f32 %v2280, 0.0
        %v2287 = vmax.f32 %v2283, 0.0
        %v2288 = vpack.c.bf16 %v2287, %v2286
        %v2289 = vld [vmem:[%s8] sm:$0xf]
        %v2290 = vld [vmem:[%s8 + $0x4] sm:$0xf]
        %v2291 = vld [vmem:[%s8 + $0x8] sm:$0xf]
        %v2292 = vld [vmem:[%s8 + $0xc] sm:$0xf]
        %v2293 = vld [vmem:[%s8 + $0x10] sm:$0xf]
        %v2294 = vld [vmem:[%s8 + $0x14] sm:$0xf]
        %v2295 = vld [vmem:[%s8 + $0x18] sm:$0xf]
        %v2296 = vld [vmem:[%s8 + $0x1c] sm:$0xf]
        %v2297 = vld [vmem:[#allocation13] sm:$0x1]
        %v2299 = vlaneseq
        %v2300 = vshrl.u32 %v2299, 7
        %v2301 = vsub.s32 0, %v2300
        %v2302 = vrot.slane %v2297, %v2301
        %v2312 = vunpack.c.l.b16 %v2289
        %v2313 = vunpack.c.l.b16 %v2290
        %v2314 = vunpack.c.l.b16 %v2291
        %v2315 = vunpack.c.l.b16 %v2292
        %v2316 = vunpack.c.l.b16 %v2293
        %v2317 = vunpack.c.l.b16 %v2294
        %v2318 = vunpack.c.l.b16 %v2295
        %v2319 = vunpack.c.l.b16 %v2296
        %v2320 = vpack.c.b16 %v2313, %v2312
        %v2321 = vpack.c.b16 %v2315, %v2314
        %v2322 = vpack.c.b16 %v2317, %v2316
        %v2323 = vpack.c.b16 %v2319, %v2318
        %v2329 = vsel %vm1253, %v2288, 0
        %2331 = vmatprep.subr.bf16.mxu0 0
        %2332 = vmatpush1.bf16.msra.mxu0 0
        %2333 = vmatprep.subr.bf16.mxu0 0
        %2334 = vmatpush1.bf16.msra.mxu0 0
        %2335 = vmatprep.subr.bf16.mxu0 0
        %2336 = vmatpush1.bf16.msra.mxu0 0
        %2337 = vmatprep.subr.bf16.mxu0 0
        %2338 = vmatpush1.bf16.msra.mxu0 0
        %2339 = vmatprep.subr.bf16.mxu0 0
        %2340 = vmatpush1.bf16.msra.mxu0 %v2323
        %2341 = vmatprep.subr.bf16.mxu0 0
        %2342 = vmatpush1.bf16.msra.mxu0 %v2322
        %2343 = vmatprep.subr.bf16.mxu0 0
        %2344 = vmatpush1.bf16.msra.mxu0 %v2321
        %2345 = vmatprep.subr.bf16.mxu0 0
        %2346 = vmatpush1.bf16.msra.mxu0 %v2320
        %2347 = vmatprep.subr.bf16.mxu0 0
        %2348 = vmatpush2.bf16.msra.mxu0 0
        %2349 = vmatprep.subr.bf16.mxu0 0
        %2350 = vmatpush2.bf16.msra.mxu0 0
        %2351 = vmatprep.subr.bf16.mxu0 0
        %2352 = vmatpush2.bf16.msra.mxu0 0
        %2353 = vmatprep.subr.bf16.mxu0 0
        %2354 = vmatpush2.bf16.msra.mxu0 0
        %2355 = vmatprep.subr.bf16.mxu0 0
        %2356 = vmatpush2.bf16.msra.mxu0 0
        %2357 = vmatprep.subr.bf16.mxu0 0
        %2358 = vmatpush2.bf16.msra.mxu0 0
        %2359 = vmatprep.subr.bf16.mxu0 0
        %2360 = vmatpush2.bf16.msra.mxu0 0
        %2361 = vmatprep.subr.bf16.mxu0 0
        %2362 = vmatpush2.bf16.msra.mxu0 0
        %2363 = vmatprep.mubr.bf16.mxu0 0
        %2364 = vmatmul.mubr.bf16.gmra.mxu0 %v2329
        %v2365 = vpop.f32.mrf.mxu0
        %v2366 = vadd.f32 %v2302, %v2365
        %v2367 = vpop.f32.mrf.mxu0
        %v2368 = vpop.f32.mrf.mxu0
        %v2369 = vadd.f32 %v2302, %v2368
        %v2370 = vpop.f32.mrf.mxu0
        %2371 = vdwg.mxu0
        %v2372 = vadd.f32 %v2171, %v2366
        %v2373 = vadd.f32 %v2172, %v2369
        %2374 = vadd.xlane.f32.xlu0 %v2372
        %v2375 = vpop.xlane.xlu0 %2374
        %2376 = vadd.xlane.f32.xlu0 %v2373
        %v2377 = vpop.xlane.xlu0 %2376
        %v2378 = vmul.f32 %v2375, %v2136
        %v2379 = vmul.f32 %v2377, %v2136
        %v2380 = vsub.f32 %v2372, %v2378
        %v2381 = vsub.f32 %v2373, %v2379
        %v2382 = vmul.f32 %v2380, %v2380
        %v2383 = vmul.f32 %v2381, %v2381
        %2384 = vadd.xlane.f32.xlu0 %v2382
        %v2385 = vpop.xlane.xlu0 %2384
        %2386 = vadd.xlane.f32.xlu0 %v2383
        %v2387 = vpop.xlane.xlu0 %2386
        %v2388 = vmul.f32 %v2385, %v2136
        %v2389 = vmul.f32 %v2387, %v2136
        %v2390 = vadd.f32 %v2388, 1e-06
        %v2391 = vadd.f32 %v2389, 1e-06
        %v2392 = vrsqrt.pop %v2390
        %v2393 = vrsqrt.pop %v2391
        %v2394 = vmul.f32 %v2380, %v2392
        %v2395 = vmul.f32 %v2381, %v2393
        %v2396 = vld [vmem:[#allocation17] sm:$0x1]
        %v2398 = vlaneseq
        %v2399 = vshrl.u32 %v2398, 7
        %v2400 = vsub.s32 0, %v2399
        %v2401 = vrot.slane %v2396, %v2400
        %v2403 = vmul.f32 %v2394, %v2401
        %v2404 = vmul.f32 %v2395, %v2401
        %v2405 = vld [vmem:[#allocation19] sm:$0x1]
        %v2407 = vlaneseq
        %v2408 = vshrl.u32 %v2407, 7
        %v2409 = vsub.s32 0, %v2408
        %v2410 = vrot.slane %v2405, %v2409
        %v2412 = vadd.f32 %v2403, %v2410
        %v2413 = vadd.f32 %v2404, %v2410
        %v2414 = vpack.c.bf16 %v2413, %v2412
        %s2415 = scalar_lea.vmem [#allocation7], 192
        %v2416 = vld [vmem:[%s2415] sm:$0xff]
        %v2417 = vld [vmem:[%s2415 + $0x8] sm:$0xf]
        %v2418 = vld [vmem:[%s2415 + $0xc] sm:$0xff]
        %v2419 = vld [vmem:[%s2415 + $0x14] sm:$0xf]
        %v2420 = vld [vmem:[%s2415 + $0x18] sm:$0xff]
        %v2421 = vld [vmem:[%s2415 + $0x20] sm:$0xf]
        %v2422 = vld [vmem:[%s2415 + $0x24] sm:$0xff]
        %v2423 = vld [vmem:[%s2415 + $0x2c] sm:$0xf]
        %v2424 = vld [vmem:[%s2415 + $0x30] sm:$0xff]
        %v2425 = vld [vmem:[%s2415 + $0x38] sm:$0xf]
        %v2426 = vld [vmem:[%s2415 + $0x3c] sm:$0xff]
        %v2427 = vld [vmem:[%s2415 + $0x44] sm:$0xf]
        %v2428 = vld [vmem:[%s2415 + $0x48] sm:$0xff]
        %v2429 = vld [vmem:[%s2415 + $0x50] sm:$0xf]
        %v2430 = vld [vmem:[%s2415 + $0x54] sm:$0xff]
        %v2431 = vld [vmem:[%s2415 + $0x5c] sm:$0xf]
        %v2432 = vld [vmem:[%s2415 + $0x60] sm:$0xff]
        %v2433 = vld [vmem:[%s2415 + $0x68] sm:$0xf]
        %v2434 = vld [vmem:[%s2415 + $0x6c] sm:$0xff]
        %v2435 = vld [vmem:[%s2415 + $0x74] sm:$0xf]
        %v2436 = vld [vmem:[%s2415 + $0x78] sm:$0xff]
        %v2437 = vld [vmem:[%s2415 + $0x80] sm:$0xf]
        %v2438 = vld [vmem:[%s2415 + $0x84] sm:$0xff]
        %v2439 = vld [vmem:[%s2415 + $0x8c] sm:$0xf]
        %v2440 = vld [vmem:[%s2415 + $0x90] sm:$0xff]
        %v2441 = vld [vmem:[%s2415 + $0x98] sm:$0xf]
        %v2442 = vld [vmem:[%s2415 + $0x9c] sm:$0xff]
        %v2443 = vld [vmem:[%s2415 + $0xa4] sm:$0xf]
        %v2444 = vld [vmem:[%s2415 + $0xa8] sm:$0xff]
        %v2445 = vld [vmem:[%s2415 + $0xb0] sm:$0xf]
        %v2446 = vld [vmem:[%s2415 + $0xb4] sm:$0xff]
        %v2447 = vld [vmem:[%s2415 + $0xbc] sm:$0xf]
        %s2448 = scalar_lea.vmem [#allocation8], 3
        %v2449 = vld [vmem:[%s2448] sm:$0x7]
        %v2451 = vlaneseq
        %v2452 = vshrl.u32 %v2451, 7
        %v2453 = vsub.s32 0, %v2452
        %v2454 = vrot.slane %v2449, %v2453
        %v2455 = vlaneseq
        %v2456 = vshrl.u32 %v2455, 7
        %v2457 = vsub.s32 1, %v2456
        %v2458 = vrot.slane %v2449, %v2457
        %v2459 = vlaneseq
        %v2460 = vshrl.u32 %v2459, 7
        %v2461 = vsub.s32 2, %v2460
        %v2462 = vrot.slane %v2449, %v2461
        %v2498 = vunpack.c.l.b16 %v2416
        %v2499 = vunpack.c.h.b16 %v2416
        %v2500 = vunpack.c.l.b16 %v2417
        %v2501 = vunpack.c.l.b16 %v2418
        %v2502 = vunpack.c.h.b16 %v2418
        %v2503 = vunpack.c.l.b16 %v2419
        %v2504 = vunpack.c.l.b16 %v2420
        %v2505 = vunpack.c.h.b16 %v2420
        %v2506 = vunpack.c.l.b16 %v2421
        %v2507 = vunpack.c.l.b16 %v2422
        %v2508 = vunpack.c.h.b16 %v2422
        %v2509 = vunpack.c.l.b16 %v2423
        %v2510 = vunpack.c.l.b16 %v2424
        %v2511 = vunpack.c.h.b16 %v2424
        %v2512 = vunpack.c.l.b16 %v2425
        %v2513 = vunpack.c.l.b16 %v2426
        %v2514 = vunpack.c.h.b16 %v2426
        %v2515 = vunpack.c.l.b16 %v2427
        %v2516 = vunpack.c.l.b16 %v2428
        %v2517 = vunpack.c.h.b16 %v2428
        %v2518 = vunpack.c.l.b16 %v2429
        %v2519 = vunpack.c.l.b16 %v2430
        %v2520 = vunpack.c.h.b16 %v2430
        %v2521 = vunpack.c.l.b16 %v2431
        %v2522 = vunpack.c.l.b16 %v2432
        %v2523 = vunpack.c.h.b16 %v2432
        %v2524 = vunpack.c.l.b16 %v2433
        %v2525 = vunpack.c.l.b16 %v2434
        %v2526 = vunpack.c.h.b16 %v2434
        %v2527 = vunpack.c.l.b16 %v2435
        %v2528 = vunpack.c.l.b16 %v2436
        %v2529 = vunpack.c.h.b16 %v2436
        %v2530 = vunpack.c.l.b16 %v2437
        %v2531 = vunpack.c.l.b16 %v2438
        %v2532 = vunpack.c.h.b16 %v2438
        %v2533 = vunpack.c.l.b16 %v2439
        %v2534 = vunpack.c.l.b16 %v2440
        %v2535 = vunpack.c.h.b16 %v2440
        %v2536 = vunpack.c.l.b16 %v2441
        %v2537 = vunpack.c.l.b16 %v2442
        %v2538 = vunpack.c.h.b16 %v2442
        %v2539 = vunpack.c.l.b16 %v2443
        %v2540 = vunpack.c.l.b16 %v2444
        %v2541 = vunpack.c.h.b16 %v2444
        %v2542 = vunpack.c.l.b16 %v2445
        %v2543 = vunpack.c.l.b16 %v2446
        %v2544 = vunpack.c.h.b16 %v2446
        %v2545 = vunpack.c.l.b16 %v2447
        %v2546 = vpack.c.b16 %v2501, %v2498
        %v2547 = vpack.c.b16 %v2502, %v2499
        %v2548 = vpack.c.b16 %v2503, %v2500
        %v2549 = vpack.c.b16 %v2507, %v2504
        %v2550 = vpack.c.b16 %v2508, %v2505
        %v2551 = vpack.c.b16 %v2509, %v2506
        %v2552 = vpack.c.b16 %v2513, %v2510
        %v2553 = vpack.c.b16 %v2514, %v2511
        %v2554 = vpack.c.b16 %v2515, %v2512
        %v2555 = vpack.c.b16 %v2519, %v2516
        %v2556 = vpack.c.b16 %v2520, %v2517
        %v2557 = vpack.c.b16 %v2521, %v2518
        %v2558 = vpack.c.b16 %v2525, %v2522
        %v2559 = vpack.c.b16 %v2526, %v2523
        %v2560 = vpack.c.b16 %v2527, %v2524
        %v2561 = vpack.c.b16 %v2531, %v2528
        %v2562 = vpack.c.b16 %v2532, %v2529
        %v2563 = vpack.c.b16 %v2533, %v2530
        %v2564 = vpack.c.b16 %v2537, %v2534
        %v2565 = vpack.c.b16 %v2538, %v2535
        %v2566 = vpack.c.b16 %v2539, %v2536
        %v2567 = vpack.c.b16 %v2543, %v2540
        %v2568 = vpack.c.b16 %v2544, %v2541
        %v2569 = vpack.c.b16 %v2545, %v2542
        %2594 = vmatprep.subr.bf16.mxu0 %v2568
        %2595 = vmatpush1.bf16.msra.mxu0 %v2567
        %2596 = vmatprep.subr.bf16.mxu0 %v2565
        %2597 = vmatpush1.bf16.msra.mxu0 %v2564
        %2598 = vmatprep.subr.bf16.mxu0 %v2562
        %2599 = vmatpush1.bf16.msra.mxu0 %v2561
        %2600 = vmatprep.subr.bf16.mxu0 %v2559
        %2601 = vmatpush1.bf16.msra.mxu0 %v2558
        %2602 = vmatprep.subr.bf16.mxu0 %v2556
        %2603 = vmatpush1.bf16.msra.mxu0 %v2555
        %2604 = vmatprep.subr.bf16.mxu0 %v2553
        %2605 = vmatpush1.bf16.msra.mxu0 %v2552
        %2606 = vmatprep.subr.bf16.mxu0 %v2550
        %2607 = vmatpush1.bf16.msra.mxu0 %v2549
        %2608 = vmatprep.subr.bf16.mxu0 %v2547
        %2609 = vmatpush1.bf16.msra.mxu0 %v2546
        %2610 = vmatprep.subr.bf16.mxu0 0
        %2611 = vmatpush2.bf16.msra.mxu0 0
        %2612 = vmatprep.subr.bf16.mxu0 0
        %2613 = vmatpush2.bf16.msra.mxu0 0
        %2614 = vmatprep.subr.bf16.mxu0 0
        %2615 = vmatpush2.bf16.msra.mxu0 0
        %2616 = vmatprep.subr.bf16.mxu0 0
        %2617 = vmatpush2.bf16.msra.mxu0 0
        %2618 = vmatprep.subr.bf16.mxu0 0
        %2619 = vmatpush2.bf16.msra.mxu0 0
        %2620 = vmatprep.subr.bf16.mxu0 0
        %2621 = vmatpush2.bf16.msra.mxu0 0
        %2622 = vmatprep.subr.bf16.mxu0 0
        %2623 = vmatpush2.bf16.msra.mxu0 0
        %2624 = vmatprep.subr.bf16.mxu0 0
        %2625 = vmatpush2.bf16.msra.mxu0 0
        %2626 = vmatprep.mubr.bf16.mxu0 0
        %2627 = vmatmul.mubr.bf16.gmra.mxu0 %v2414
        %v2628 = vpop.f32.mrf.mxu0
        %v2629 = vadd.f32 %v2454, %v2628
        %v2630 = vpop.f32.mrf.mxu0
        %v2631 = vadd.f32 %v2458, %v2630
        %v2632 = vpop.f32.mrf.mxu0
        %v2633 = vadd.f32 %v2454, %v2632
        %v2634 = vpop.f32.mrf.mxu0
        %v2635 = vadd.f32 %v2458, %v2634
        %2636 = vdwg.mxu0
        %2637 = vmatprep.subr.bf16.mxu0 0
        %2638 = vmatpush1.bf16.msra.mxu0 %v2569
        %2639 = vmatprep.subr.bf16.mxu0 0
        %2640 = vmatpush1.bf16.msra.mxu0 %v2566
        %2641 = vmatprep.subr.bf16.mxu0 0
        %2642 = vmatpush1.bf16.msra.mxu0 %v2563
        %2643 = vmatprep.subr.bf16.mxu0 0
        %2644 = vmatpush1.bf16.msra.mxu0 %v2560
        %2645 = vmatprep.subr.bf16.mxu0 0
        %2646 = vmatpush1.bf16.msra.mxu0 %v2557
        %2647 = vmatprep.subr.bf16.mxu0 0
        %2648 = vmatpush1.bf16.msra.mxu0 %v2554
        %2649 = vmatprep.subr.bf16.mxu0 0
        %2650 = vmatpush1.bf16.msra.mxu0 %v2551
        %2651 = vmatprep.subr.bf16.mxu0 0
        %2652 = vmatpush1.bf16.msra.mxu0 %v2548
        %2653 = vmatprep.subr.bf16.mxu0 0
        %2654 = vmatpush2.bf16.msra.mxu0 0
        %2655 = vmatprep.subr.bf16.mxu0 0
        %2656 = vmatpush2.bf16.msra.mxu0 0
        %2657 = vmatprep.subr.bf16.mxu0 0
        %2658 = vmatpush2.bf16.msra.mxu0 0
        %2659 = vmatprep.subr.bf16.mxu0 0
        %2660 = vmatpush2.bf16.msra.mxu0 0
        %2661 = vmatprep.subr.bf16.mxu0 0
        %2662 = vmatpush2.bf16.msra.mxu0 0
        %2663 = vmatprep.subr.bf16.mxu0 0
        %2664 = vmatpush2.bf16.msra.mxu0 0
        %2665 = vmatprep.subr.bf16.mxu0 0
        %2666 = vmatpush2.bf16.msra.mxu0 0
        %2667 = vmatprep.subr.bf16.mxu0 0
        %2668 = vmatpush2.bf16.msra.mxu0 0
        %2669 = vmatprep.mubr.bf16.mxu0 0
        %2670 = vmatmul.mubr.bf16.gmra.mxu0 %v2414
        %v2671 = vpop.f32.mrf.mxu0
        %v2672 = vadd.f32 %v2462, %v2671
        %v2673 = vpop.f32.mrf.mxu0
        %v2674 = vpop.f32.mrf.mxu0
        %v2675 = vadd.f32 %v2462, %v2674
        %v2676 = vpop.f32.mrf.mxu0
        %2677 = vdwg.mxu0
        %2680 = vrot.lane.b32.xlu0 %v2629, 64
        %v2681 = vpop.permute.xlu0 %2680
        %2682 = vrot.lane.b32.xlu0 %v2633, 64
        %v2683 = vpop.permute.xlu0 %2682
        %v2686 = vpack.c.bf16 %v2633, %v2629
        %v2687 = vpack.c.bf16 %v2683, %v2681
        %2690 = vrot.lane.b32.xlu0 %v2631, 64
        %v2691 = vpop.permute.xlu0 %2690
        %2692 = vrot.lane.b32.xlu0 %v2635, 64
        %v2693 = vpop.permute.xlu0 %2692
        %v2696 = vpack.c.bf16 %v2635, %v2631
        %v2697 = vpack.c.bf16 %v2693, %v2691
        %2700 = vrot.lane.b32.xlu0 %v2672, 64
        %v2701 = vpop.permute.xlu0 %2700
        %2702 = vrot.lane.b32.xlu0 %v2675, 64
        %v2703 = vpop.permute.xlu0 %2702
        %v2706 = vpack.c.bf16 %v2675, %v2672
        %v2707 = vpack.c.bf16 %v2703, %v2701
        %v2709 = vsel %vm1253, %v2686, 0
        %2711 = vmatprep.subr.bf16.mxu0 0
        %2712 = vmatpush1.bf16.msra.mxu0 0
        %2713 = vmatprep.subr.bf16.mxu0 0
        %2714 = vmatpush1.bf16.msra.mxu0 0
        %2715 = vmatprep.subr.bf16.mxu0 0
        %2716 = vmatpush1.bf16.msra.mxu0 0
        %2717 = vmatprep.subr.bf16.mxu0 0
        %2718 = vmatpush1.bf16.msra.mxu0 0
        %2719 = vmatprep.subr.bf16.mxu0 0
        %2720 = vmatpush1.bf16.msra.mxu0 %v1248
        %2721 = vmatprep.subr.bf16.mxu0 0
        %2722 = vmatpush1.bf16.msra.mxu0 %v1247
        %2723 = vmatprep.subr.bf16.mxu0 0
        %2724 = vmatpush1.bf16.msra.mxu0 %v1246
        %2725 = vmatprep.subr.bf16.mxu0 0
        %2726 = vmatpush1.bf16.msra.mxu0 %v1245
        %2727 = vmatprep.subr.bf16.mxu0 0
        %2728 = vmatpush2.bf16.msra.mxu0 0
        %2729 = vmatprep.subr.bf16.mxu0 0
        %2730 = vmatpush2.bf16.msra.mxu0 0
        %2731 = vmatprep.subr.bf16.mxu0 0
        %2732 = vmatpush2.bf16.msra.mxu0 0
        %2733 = vmatprep.subr.bf16.mxu0 0
        %2734 = vmatpush2.bf16.msra.mxu0 0
        %2735 = vmatprep.subr.bf16.mxu0 0
        %2736 = vmatpush2.bf16.msra.mxu0 0
        %2737 = vmatprep.subr.bf16.mxu0 0
        %2738 = vmatpush2.bf16.msra.mxu0 0
        %2739 = vmatprep.subr.bf16.mxu0 0
        %2740 = vmatpush2.bf16.msra.mxu0 0
        %2741 = vmatprep.subr.bf16.mxu0 0
        %2742 = vmatpush2.bf16.msra.mxu0 0
        %2743 = vmatprep.mubr.bf16.mxu0 0
        %2744 = vmatmul.mubr.bf16.gmra.mxu0 %v2709
        %v2745 = vpop.f32.mrf.mxu0
        %v2746 = vadd.f32 0.0, %v2745
        %v2747 = vpop.f32.mrf.mxu0
        %v2748 = vpop.f32.mrf.mxu0
        %v2749 = vadd.f32 0.0, %v2748
        %v2750 = vpop.f32.mrf.mxu0
        %2751 = vdwg.mxu0
        %v2753 = vsel %vm1253, %v2687, 0
        %2755 = vmatprep.subr.bf16.mxu0 0
        %2756 = vmatpush1.bf16.msra.mxu0 0
        %2757 = vmatprep.subr.bf16.mxu0 0
        %2758 = vmatpush1.bf16.msra.mxu0 0
        %2759 = vmatprep.subr.bf16.mxu0 0
        %2760 = vmatpush1.bf16.msra.mxu0 0
        %2761 = vmatprep.subr.bf16.mxu0 0
        %2762 = vmatpush1.bf16.msra.mxu0 0
        %2763 = vmatprep.subr.bf16.mxu0 0
        %2764 = vmatpush1.bf16.msra.mxu0 %v1248
        %2765 = vmatprep.subr.bf16.mxu0 0
        %2766 = vmatpush1.bf16.msra.mxu0 %v1247
        %2767 = vmatprep.subr.bf16.mxu0 0
        %2768 = vmatpush1.bf16.msra.mxu0 %v1246
        %2769 = vmatprep.subr.bf16.mxu0 0
        %2770 = vmatpush1.bf16.msra.mxu0 %v1245
        %2771 = vmatprep.subr.bf16.mxu0 0
        %2772 = vmatpush2.bf16.msra.mxu0 0
        %2773 = vmatprep.subr.bf16.mxu0 0
        %2774 = vmatpush2.bf16.msra.mxu0 0
        %2775 = vmatprep.subr.bf16.mxu0 0
        %2776 = vmatpush2.bf16.msra.mxu0 0
        %2777 = vmatprep.subr.bf16.mxu0 0
        %2778 = vmatpush2.bf16.msra.mxu0 0
        %2779 = vmatprep.subr.bf16.mxu0 0
        %2780 = vmatpush2.bf16.msra.mxu0 0
        %2781 = vmatprep.subr.bf16.mxu0 0
        %2782 = vmatpush2.bf16.msra.mxu0 0
        %2783 = vmatprep.subr.bf16.mxu0 0
        %2784 = vmatpush2.bf16.msra.mxu0 0
        %2785 = vmatprep.subr.bf16.mxu0 0
        %2786 = vmatpush2.bf16.msra.mxu0 0
        %2787 = vmatprep.mubr.bf16.mxu0 0
        %2788 = vmatmul.mubr.bf16.gmra.mxu0 %v2753
        %v2789 = vpop.f32.mrf.mxu0
        %v2790 = vadd.f32 0.0, %v2789
        %v2791 = vpop.f32.mrf.mxu0
        %v2792 = vpop.f32.mrf.mxu0
        %v2793 = vadd.f32 0.0, %v2792
        %v2794 = vpop.f32.mrf.mxu0
        %2795 = vdwg.mxu0
        %2797 = vset.pattern.permute.xlu0 0
        %2798 = vperm.xlu0 %2797, %v2746
        %v2799 = vpop.permute.xlu0 %2798
        %2802 = vset.pattern.permute.xlu0 0
        %2803 = vperm.xlu0 %2802, %v2749
        %v2804 = vpop.permute.xlu0 %2803
        %2807 = vset.pattern.permute.xlu0 0
        %2808 = vperm.xlu0 %2807, %v2790
        %v2809 = vpop.permute.xlu0 %2808
        %2812 = vset.pattern.permute.xlu0 0
        %2813 = vperm.xlu0 %2812, %v2793
        %v2814 = vpop.permute.xlu0 %2813
        %v2816 = vmul.f32 %v2799, %v837
        %v2817 = vmul.f32 %v2804, %v838
        %v2818 = vmul.f32 %v2809, %v837
        %v2819 = vmul.f32 %v2814, %v838
        %v2820 = vadd.f32 %v2816, 0.0
        %v2821 = vadd.f32 %v2817, 0.0
        %v2822 = vadd.f32 %v2818, 0.0
        %v2823 = vadd.f32 %v2819, 0.0
        %2824 = vset.pattern.permute.xlu0 1
        %2825 = vperm.xlu0 %2824, %v2746
        %v2826 = vpop.permute.xlu0 %2825
        %2828 = vset.pattern.permute.xlu0 1
        %2829 = vperm.xlu0 %2828, %v2749
        %v2830 = vpop.permute.xlu0 %2829
        %2832 = vset.pattern.permute.xlu0 1
        %2833 = vperm.xlu0 %2832, %v2790
        %v2834 = vpop.permute.xlu0 %2833
        %2836 = vset.pattern.permute.xlu0 1
        %2837 = vperm.xlu0 %2836, %v2793
        %v2838 = vpop.permute.xlu0 %2837
        %v2840 = vmul.f32 %v2826, %v843
        %v2841 = vmul.f32 %v2830, %v844
        %v2842 = vmul.f32 %v2834, %v843
        %v2843 = vmul.f32 %v2838, %v844
        %v2844 = vadd.f32 %v2820, %v2840
        %v2845 = vadd.f32 %v2821, %v2841
        %v2846 = vadd.f32 %v2822, %v2842
        %v2847 = vadd.f32 %v2823, %v2843
        %2848 = vset.pattern.permute.xlu0 2
        %2849 = vperm.xlu0 %2848, %v2746
        %v2850 = vpop.permute.xlu0 %2849
        %2852 = vset.pattern.permute.xlu0 2
        %2853 = vperm.xlu0 %2852, %v2749
        %v2854 = vpop.permute.xlu0 %2853
        %2856 = vset.pattern.permute.xlu0 2
        %2857 = vperm.xlu0 %2856, %v2790
        %v2858 = vpop.permute.xlu0 %2857
        %2860 = vset.pattern.permute.xlu0 2
        %2861 = vperm.xlu0 %2860, %v2793
        %v2862 = vpop.permute.xlu0 %2861
        %v2864 = vmul.f32 %v2850, %v849
        %v2865 = vmul.f32 %v2854, %v850
        %v2866 = vmul.f32 %v2858, %v849
        %v2867 = vmul.f32 %v2862, %v850
        %v2868 = vadd.f32 %v2844, %v2864
        %v2869 = vadd.f32 %v2845, %v2865
        %v2870 = vadd.f32 %v2846, %v2866
        %v2871 = vadd.f32 %v2847, %v2867
        %2872 = vset.pattern.permute.xlu0 3
        %2873 = vperm.xlu0 %2872, %v2746
        %v2874 = vpop.permute.xlu0 %2873
        %2876 = vset.pattern.permute.xlu0 3
        %2877 = vperm.xlu0 %2876, %v2749
        %v2878 = vpop.permute.xlu0 %2877
        %2880 = vset.pattern.permute.xlu0 3
        %2881 = vperm.xlu0 %2880, %v2790
        %v2882 = vpop.permute.xlu0 %2881
        %2884 = vset.pattern.permute.xlu0 3
        %2885 = vperm.xlu0 %2884, %v2793
        %v2886 = vpop.permute.xlu0 %2885
        %v2888 = vmul.f32 %v2874, %v855
        %v2889 = vmul.f32 %v2878, %v856
        %v2890 = vmul.f32 %v2882, %v855
        %v2891 = vmul.f32 %v2886, %v856
        %v2892 = vadd.f32 %v2868, %v2888
        %v2893 = vadd.f32 %v2869, %v2889
        %v2894 = vadd.f32 %v2870, %v2890
        %v2895 = vadd.f32 %v2871, %v2891
        %2896 = vset.pattern.permute.xlu0 4
        %2897 = vperm.xlu0 %2896, %v2746
        %v2898 = vpop.permute.xlu0 %2897
        %2900 = vset.pattern.permute.xlu0 4
        %2901 = vperm.xlu0 %2900, %v2749
        %v2902 = vpop.permute.xlu0 %2901
        %2904 = vset.pattern.permute.xlu0 4
        %2905 = vperm.xlu0 %2904, %v2790
        %v2906 = vpop.permute.xlu0 %2905
        %2908 = vset.pattern.permute.xlu0 4
        %2909 = vperm.xlu0 %2908, %v2793
        %v2910 = vpop.permute.xlu0 %2909
        %v2912 = vmul.f32 %v2898, %v861
        %v2913 = vmul.f32 %v2902, %v862
        %v2914 = vmul.f32 %v2906, %v861
        %v2915 = vmul.f32 %v2910, %v862
        %v2916 = vadd.f32 %v2892, %v2912
        %v2917 = vadd.f32 %v2893, %v2913
        %v2918 = vadd.f32 %v2894, %v2914
        %v2919 = vadd.f32 %v2895, %v2915
        %2920 = vset.pattern.permute.xlu0 5
        %2921 = vperm.xlu0 %2920, %v2746
        %v2922 = vpop.permute.xlu0 %2921
        %2924 = vset.pattern.permute.xlu0 5
        %2925 = vperm.xlu0 %2924, %v2749
        %v2926 = vpop.permute.xlu0 %2925
        %2928 = vset.pattern.permute.xlu0 5
        %2929 = vperm.xlu0 %2928, %v2790
        %v2930 = vpop.permute.xlu0 %2929
        %2932 = vset.pattern.permute.xlu0 5
        %2933 = vperm.xlu0 %2932, %v2793
        %v2934 = vpop.permute.xlu0 %2933
        %v2936 = vmul.f32 %v2922, %v867
        %v2937 = vmul.f32 %v2926, %v868
        %v2938 = vmul.f32 %v2930, %v867
        %v2939 = vmul.f32 %v2934, %v868
        %v2940 = vadd.f32 %v2916, %v2936
        %v2941 = vadd.f32 %v2917, %v2937
        %v2942 = vadd.f32 %v2918, %v2938
        %v2943 = vadd.f32 %v2919, %v2939
        %2944 = vset.pattern.permute.xlu0 6
        %2945 = vperm.xlu0 %2944, %v2746
        %v2946 = vpop.permute.xlu0 %2945
        %2948 = vset.pattern.permute.xlu0 6
        %2949 = vperm.xlu0 %2948, %v2749
        %v2950 = vpop.permute.xlu0 %2949
        %2952 = vset.pattern.permute.xlu0 6
        %2953 = vperm.xlu0 %2952, %v2790
        %v2954 = vpop.permute.xlu0 %2953
        %2956 = vset.pattern.permute.xlu0 6
        %2957 = vperm.xlu0 %2956, %v2793
        %v2958 = vpop.permute.xlu0 %2957
        %v2960 = vmul.f32 %v2946, %v873
        %v2961 = vmul.f32 %v2950, %v874
        %v2962 = vmul.f32 %v2954, %v873
        %v2963 = vmul.f32 %v2958, %v874
        %v2964 = vadd.f32 %v2940, %v2960
        %v2965 = vadd.f32 %v2941, %v2961
        %v2966 = vadd.f32 %v2942, %v2962
        %v2967 = vadd.f32 %v2943, %v2963
        %2968 = vset.pattern.permute.xlu0 7
        %2969 = vperm.xlu0 %2968, %v2746
        %v2970 = vpop.permute.xlu0 %2969
        %2972 = vset.pattern.permute.xlu0 7
        %2973 = vperm.xlu0 %2972, %v2749
        %v2974 = vpop.permute.xlu0 %2973
        %2976 = vset.pattern.permute.xlu0 7
        %2977 = vperm.xlu0 %2976, %v2790
        %v2978 = vpop.permute.xlu0 %2977
        %2980 = vset.pattern.permute.xlu0 7
        %2981 = vperm.xlu0 %2980, %v2793
        %v2982 = vpop.permute.xlu0 %2981
        %v2984 = vmul.f32 %v2970, %v879
        %v2985 = vmul.f32 %v2974, %v880
        %v2986 = vmul.f32 %v2978, %v879
        %v2987 = vmul.f32 %v2982, %v880
        %v2988 = vadd.f32 %v2964, %v2984
        %v2989 = vadd.f32 %v2965, %v2985
        %v2990 = vadd.f32 %v2966, %v2986
        %v2991 = vadd.f32 %v2967, %v2987
        %2992 = vset.pattern.permute.xlu0 8
        %2993 = vperm.xlu0 %2992, %v2746
        %v2994 = vpop.permute.xlu0 %2993
        %2996 = vset.pattern.permute.xlu0 8
        %2997 = vperm.xlu0 %2996, %v2749
        %v2998 = vpop.permute.xlu0 %2997
        %3000 = vset.pattern.permute.xlu0 8
        %3001 = vperm.xlu0 %3000, %v2790
        %v3002 = vpop.permute.xlu0 %3001
        %3004 = vset.pattern.permute.xlu0 8
        %3005 = vperm.xlu0 %3004, %v2793
        %v3006 = vpop.permute.xlu0 %3005
        %v3008 = vmul.f32 %v2994, %v885
        %v3009 = vmul.f32 %v2998, %v886
        %v3010 = vmul.f32 %v3002, %v885
        %v3011 = vmul.f32 %v3006, %v886
        %v3012 = vadd.f32 %v2988, %v3008
        %v3013 = vadd.f32 %v2989, %v3009
        %v3014 = vadd.f32 %v2990, %v3010
        %v3015 = vadd.f32 %v2991, %v3011
        %3016 = vset.pattern.permute.xlu0 9
        %3017 = vperm.xlu0 %3016, %v2746
        %v3018 = vpop.permute.xlu0 %3017
        %3020 = vset.pattern.permute.xlu0 9
        %3021 = vperm.xlu0 %3020, %v2749
        %v3022 = vpop.permute.xlu0 %3021
        %3024 = vset.pattern.permute.xlu0 9
        %3025 = vperm.xlu0 %3024, %v2790
        %v3026 = vpop.permute.xlu0 %3025
        %3028 = vset.pattern.permute.xlu0 9
        %3029 = vperm.xlu0 %3028, %v2793
        %v3030 = vpop.permute.xlu0 %3029
        %v3032 = vmul.f32 %v3018, %v891
        %v3033 = vmul.f32 %v3022, %v892
        %v3034 = vmul.f32 %v3026, %v891
        %v3035 = vmul.f32 %v3030, %v892
        %v3036 = vadd.f32 %v3012, %v3032
        %v3037 = vadd.f32 %v3013, %v3033
        %v3038 = vadd.f32 %v3014, %v3034
        %v3039 = vadd.f32 %v3015, %v3035
        %3040 = vset.pattern.permute.xlu0 10
        %3041 = vperm.xlu0 %3040, %v2746
        %v3042 = vpop.permute.xlu0 %3041
        %3044 = vset.pattern.permute.xlu0 10
        %3045 = vperm.xlu0 %3044, %v2749
        %v3046 = vpop.permute.xlu0 %3045
        %3048 = vset.pattern.permute.xlu0 10
        %3049 = vperm.xlu0 %3048, %v2790
        %v3050 = vpop.permute.xlu0 %3049
        %3052 = vset.pattern.permute.xlu0 10
        %3053 = vperm.xlu0 %3052, %v2793
        %v3054 = vpop.permute.xlu0 %3053
        %v3056 = vmul.f32 %v3042, %v897
        %v3057 = vmul.f32 %v3046, %v898
        %v3058 = vmul.f32 %v3050, %v897
        %v3059 = vmul.f32 %v3054, %v898
        %v3060 = vadd.f32 %v3036, %v3056
        %v3061 = vadd.f32 %v3037, %v3057
        %v3062 = vadd.f32 %v3038, %v3058
        %v3063 = vadd.f32 %v3039, %v3059
        %3064 = vset.pattern.permute.xlu0 11
        %3065 = vperm.xlu0 %3064, %v2746
        %v3066 = vpop.permute.xlu0 %3065
        %3068 = vset.pattern.permute.xlu0 11
        %3069 = vperm.xlu0 %3068, %v2749
        %v3070 = vpop.permute.xlu0 %3069
        %3072 = vset.pattern.permute.xlu0 11
        %3073 = vperm.xlu0 %3072, %v2790
        %v3074 = vpop.permute.xlu0 %3073
        %3076 = vset.pattern.permute.xlu0 11
        %3077 = vperm.xlu0 %3076, %v2793
        %v3078 = vpop.permute.xlu0 %3077
        %v3080 = vmul.f32 %v3066, %v903
        %v3081 = vmul.f32 %v3070, %v904
        %v3082 = vmul.f32 %v3074, %v903
        %v3083 = vmul.f32 %v3078, %v904
        %v3084 = vadd.f32 %v3060, %v3080
        %v3085 = vadd.f32 %v3061, %v3081
        %v3086 = vadd.f32 %v3062, %v3082
        %v3087 = vadd.f32 %v3063, %v3083
        %3088 = vset.pattern.permute.xlu0 12
        %3089 = vperm.xlu0 %3088, %v2746
        %v3090 = vpop.permute.xlu0 %3089
        %3092 = vset.pattern.permute.xlu0 12
        %3093 = vperm.xlu0 %3092, %v2749
        %v3094 = vpop.permute.xlu0 %3093
        %3096 = vset.pattern.permute.xlu0 12
        %3097 = vperm.xlu0 %3096, %v2790
        %v3098 = vpop.permute.xlu0 %3097
        %3100 = vset.pattern.permute.xlu0 12
        %3101 = vperm.xlu0 %3100, %v2793
        %v3102 = vpop.permute.xlu0 %3101
        %v3104 = vmul.f32 %v3090, %v909
        %v3105 = vmul.f32 %v3094, %v910
        %v3106 = vmul.f32 %v3098, %v909
        %v3107 = vmul.f32 %v3102, %v910
        %v3108 = vadd.f32 %v3084, %v3104
        %v3109 = vadd.f32 %v3085, %v3105
        %v3110 = vadd.f32 %v3086, %v3106
        %v3111 = vadd.f32 %v3087, %v3107
        %3112 = vset.pattern.permute.xlu0 13
        %3113 = vperm.xlu0 %3112, %v2746
        %v3114 = vpop.permute.xlu0 %3113
        %3116 = vset.pattern.permute.xlu0 13
        %3117 = vperm.xlu0 %3116, %v2749
        %v3118 = vpop.permute.xlu0 %3117
        %3120 = vset.pattern.permute.xlu0 13
        %3121 = vperm.xlu0 %3120, %v2790
        %v3122 = vpop.permute.xlu0 %3121
        %3124 = vset.pattern.permute.xlu0 13
        %3125 = vperm.xlu0 %3124, %v2793
        %v3126 = vpop.permute.xlu0 %3125
        %v3128 = vmul.f32 %v3114, %v915
        %v3129 = vmul.f32 %v3118, %v916
        %v3130 = vmul.f32 %v3122, %v915
        %v3131 = vmul.f32 %v3126, %v916
        %v3132 = vadd.f32 %v3108, %v3128
        %v3133 = vadd.f32 %v3109, %v3129
        %v3134 = vadd.f32 %v3110, %v3130
        %v3135 = vadd.f32 %v3111, %v3131
        %3136 = vset.pattern.permute.xlu0 14
        %3137 = vperm.xlu0 %3136, %v2746
        %v3138 = vpop.permute.xlu0 %3137
        %3140 = vset.pattern.permute.xlu0 14
        %3141 = vperm.xlu0 %3140, %v2749
        %v3142 = vpop.permute.xlu0 %3141
        %3144 = vset.pattern.permute.xlu0 14
        %3145 = vperm.xlu0 %3144, %v2790
        %v3146 = vpop.permute.xlu0 %3145
        %3148 = vset.pattern.permute.xlu0 14
        %3149 = vperm.xlu0 %3148, %v2793
        %v3150 = vpop.permute.xlu0 %3149
        %v3152 = vmul.f32 %v3138, %v921
        %v3153 = vmul.f32 %v3142, %v922
        %v3154 = vmul.f32 %v3146, %v921
        %v3155 = vmul.f32 %v3150, %v922
        %v3156 = vadd.f32 %v3132, %v3152
        %v3157 = vadd.f32 %v3133, %v3153
        %v3158 = vadd.f32 %v3134, %v3154
        %v3159 = vadd.f32 %v3135, %v3155
        %3160 = vset.pattern.permute.xlu0 15
        %3161 = vperm.xlu0 %3160, %v2746
        %v3162 = vpop.permute.xlu0 %3161
        %3164 = vset.pattern.permute.xlu0 15
        %3165 = vperm.xlu0 %3164, %v2749
        %v3166 = vpop.permute.xlu0 %3165
        %3168 = vset.pattern.permute.xlu0 15
        %3169 = vperm.xlu0 %3168, %v2790
        %v3170 = vpop.permute.xlu0 %3169
        %3172 = vset.pattern.permute.xlu0 15
        %3173 = vperm.xlu0 %3172, %v2793
        %v3174 = vpop.permute.xlu0 %3173
        %v3176 = vmul.f32 %v3162, %v927
        %v3177 = vmul.f32 %v3166, %v928
        %v3178 = vmul.f32 %v3170, %v927
        %v3179 = vmul.f32 %v3174, %v928
        %v3180 = vadd.f32 %v3156, %v3176
        %v3181 = vadd.f32 %v3157, %v3177
        %v3182 = vadd.f32 %v3158, %v3178
        %v3183 = vadd.f32 %v3159, %v3179
        %v3185 = vsel %vm1253, %v2696, 0
        %3187 = vmatprep.subr.bf16.mxu0 0
        %3188 = vmatpush1.bf16.xpose.msra.mxu0 0
        %3189 = vmatprep.subr.bf16.mxu0 0
        %3190 = vmatpush1.bf16.xpose.msra.mxu0 0
        %3191 = vmatprep.subr.bf16.mxu0 0
        %3192 = vmatpush1.bf16.xpose.msra.mxu0 0
        %3193 = vmatprep.subr.bf16.mxu0 0
        %3194 = vmatpush1.bf16.xpose.msra.mxu0 0
        %3195 = vmatprep.subr.bf16.mxu0 0
        %3196 = vmatpush1.bf16.xpose.msra.mxu0 0
        %3197 = vmatprep.subr.bf16.mxu0 0
        %3198 = vmatpush1.bf16.xpose.msra.mxu0 0
        %3199 = vmatprep.subr.bf16.mxu0 0
        %3200 = vmatpush1.bf16.xpose.msra.mxu0 0
        %3201 = vmatprep.subr.bf16.mxu0 0
        %3202 = vmatpush1.bf16.xpose.msra.mxu0 %v3185
        %3203 = vmatprep.subr.bf16.mxu0 0
        %3204 = vmatpush2.bf16.xpose.msra.mxu0 0
        %3205 = vmatprep.subr.bf16.mxu0 0
        %3206 = vmatpush2.bf16.xpose.msra.mxu0 0
        %3207 = vmatprep.subr.bf16.mxu0 0
        %3208 = vmatpush2.bf16.xpose.msra.mxu0 0
        %3209 = vmatprep.subr.bf16.mxu0 0
        %3210 = vmatpush2.bf16.xpose.msra.mxu0 0
        %3211 = vmatprep.subr.bf16.mxu0 0
        %3212 = vmatpush2.bf16.xpose.msra.mxu0 0
        %3213 = vmatprep.subr.bf16.mxu0 0
        %3214 = vmatpush2.bf16.xpose.msra.mxu0 0
        %3215 = vmatprep.subr.bf16.mxu0 0
        %3216 = vmatpush2.bf16.xpose.msra.mxu0 0
        %3217 = vmatprep.subr.bf16.mxu0 0
        %3218 = vmatpush2.bf16.xpose.msra.mxu0 0
        %3219 = vmatprep.mubr.bf16.mxu0 0
        %3220 = vmatmul.mubr.bf16.gmra.mxu0 %v2709
        %v3221 = vpop.f32.mrf.mxu0
        %v3222 = vadd.f32 %v3180, %v3221
        %v3223 = vpop.f32.mrf.mxu0
        %v3224 = vpop.f32.mrf.mxu0
        %v3225 = vadd.f32 %v3181, %v3224
        %v3226 = vpop.f32.mrf.mxu0
        %3227 = vdwg.mxu0
        %v3229 = vsel %vm1253, %v2697, 0
        %3231 = vmatprep.subr.bf16.mxu0 0
        %3232 = vmatpush1.bf16.xpose.msra.mxu0 0
        %3233 = vmatprep.subr.bf16.mxu0 0
        %3234 = vmatpush1.bf16.xpose.msra.mxu0 0
        %3235 = vmatprep.subr.bf16.mxu0 0
        %3236 = vmatpush1.bf16.xpose.msra.mxu0 0
        %3237 = vmatprep.subr.bf16.mxu0 0
        %3238 = vmatpush1.bf16.xpose.msra.mxu0 0
        %3239 = vmatprep.subr.bf16.mxu0 0
        %3240 = vmatpush1.bf16.xpose.msra.mxu0 0
        %3241 = vmatprep.subr.bf16.mxu0 0
        %3242 = vmatpush1.bf16.xpose.msra.mxu0 0
        %3243 = vmatprep.subr.bf16.mxu0 0
        %3244 = vmatpush1.bf16.xpose.msra.mxu0 0
        %3245 = vmatprep.subr.bf16.mxu0 0
        %3246 = vmatpush1.bf16.xpose.msra.mxu0 %v3229
        %3247 = vmatprep.subr.bf16.mxu0 0
        %3248 = vmatpush2.bf16.xpose.msra.mxu0 0
        %3249 = vmatprep.subr.bf16.mxu0 0
        %3250 = vmatpush2.bf16.xpose.msra.mxu0 0
        %3251 = vmatprep.subr.bf16.mxu0 0
        %3252 = vmatpush2.bf16.xpose.msra.mxu0 0
        %3253 = vmatprep.subr.bf16.mxu0 0
        %3254 = vmatpush2.bf16.xpose.msra.mxu0 0
        %3255 = vmatprep.subr.bf16.mxu0 0
        %3256 = vmatpush2.bf16.xpose.msra.mxu0 0
        %3257 = vmatprep.subr.bf16.mxu0 0
        %3258 = vmatpush2.bf16.xpose.msra.mxu0 0
        %3259 = vmatprep.subr.bf16.mxu0 0
        %3260 = vmatpush2.bf16.xpose.msra.mxu0 0
        %3261 = vmatprep.subr.bf16.mxu0 0
        %3262 = vmatpush2.bf16.xpose.msra.mxu0 0
        %3263 = vmatprep.mubr.bf16.mxu0 0
        %3264 = vmatmul.mubr.bf16.gmra.mxu0 %v2753
        %v3265 = vpop.f32.mrf.mxu0
        %v3266 = vadd.f32 %v3182, %v3265
        %v3267 = vpop.f32.mrf.mxu0
        %v3268 = vpop.f32.mrf.mxu0
        %v3269 = vadd.f32 %v3183, %v3268
        %v3270 = vpop.f32.mrf.mxu0
        %3271 = vdwg.mxu0
        %v3272 = vmul.f32 %v3222, 0.125
        %v3273 = vmul.f32 %v3225, 0.125
        %v3274 = vmul.f32 %v3266, 0.125
        %v3275 = vmul.f32 %v3269, 0.125
        %v3276 = vadd.f32 %v3272, %v829
        %v3277 = vadd.f32 %v3273, %v830
        %v3278 = vadd.f32 %v3274, %v829
        %v3279 = vadd.f32 %v3275, %v830
        %v3280 = vsel %vm1826, %v3276, -inf
        %3281 = vmax.xlane.f32.xlu0 %v3280
        %v3282 = vpop.xlane.xlu0 %3281
        %v3283 = vsel %vm1826, %v3277, -inf
        %3284 = vmax.xlane.f32.xlu0 %v3283
        %v3285 = vpop.xlane.xlu0 %3284
        %v3286 = vsel %vm1826, %v3278, -inf
        %3287 = vmax.xlane.f32.xlu0 %v3286
        %v3288 = vpop.xlane.xlu0 %3287
        %v3289 = vsel %vm1826, %v3279, -inf
        %3290 = vmax.xlane.f32.xlu0 %v3289
        %v3291 = vpop.xlane.xlu0 %3290
        %v3292 = vsub.f32 %v3276, %v3282
        %v3293 = vsub.f32 %v3277, %v3285
        %v3294 = vsub.f32 %v3278, %v3288
        %v3295 = vsub.f32 %v3279, %v3291
        %v3296 = vmul.f32 %v3292, 1.442695
        %v3297 = vpow.pop %v3296
        %v3298 = vmul.f32 %v3293, 1.442695
        %v3299 = vpow.pop %v3298
        %v3300 = vmul.f32 %v3294, 1.442695
        %v3301 = vpow.pop %v3300
        %v3302 = vmul.f32 %v3295, 1.442695
        %v3303 = vpow.pop %v3302
        %v3304 = vsel %vm1826, %v3297, 0.0
        %3305 = vadd.xlane.f32.xlu0 %v3304
        %v3306 = vpop.xlane.xlu0 %3305
        %v3307 = vsel %vm1826, %v3299, 0.0
        %3308 = vadd.xlane.f32.xlu0 %v3307
        %v3309 = vpop.xlane.xlu0 %3308
        %v3310 = vsel %vm1826, %v3301, 0.0
        %3311 = vadd.xlane.f32.xlu0 %v3310
        %v3312 = vpop.xlane.xlu0 %3311
        %v3313 = vsel %vm1826, %v3303, 0.0
        %3314 = vadd.xlane.f32.xlu0 %v3313
        %v3315 = vpop.xlane.xlu0 %3314
        %v3316 = vrcp.pop %v3306
        %v3317 = vrcp.pop %v3309
        %v3318 = vrcp.pop %v3312
        %v3319 = vrcp.pop %v3315
        %v3320 = vmul.f32 %v3297, %v3316
        %v3321 = vmul.f32 %v3299, %v3317
        %v3322 = vmul.f32 %v3301, %v3318
        %v3323 = vmul.f32 %v3303, %v3319
        %3324 = vst.msk [vmem:[%s802] sm:$0xff] %vm1826, %v3320
        %3325 = vst.msk [vmem:[%s802 + $0x8] sm:$0xff] %vm1826, %v3321
        %3326 = vst.msk [vmem:[%s802 + $0x10] sm:$0xff] %vm1826, %v3322
        %3327 = vst.msk [vmem:[%s802 + $0x18] sm:$0xff] %vm1826, %v3323
        %v3328 = vpack.c.bf16 %v3321, %v3320
        %v3329 = vpack.c.bf16 %v3323, %v3322
        %v3331 = vsel %vm1826, %v3328, 0
        %3333 = vmatprep.subr.bf16.mxu0 0
        %3334 = vmatpush1.bf16.msra.mxu0 0
        %3335 = vmatprep.subr.bf16.mxu0 0
        %3336 = vmatpush1.bf16.msra.mxu0 0
        %3337 = vmatprep.subr.bf16.mxu0 0
        %3338 = vmatpush1.bf16.msra.mxu0 0
        %3339 = vmatprep.subr.bf16.mxu0 0
        %3340 = vmatpush1.bf16.msra.mxu0 0
        %3341 = vmatprep.subr.bf16.mxu0 0
        %3342 = vmatpush1.bf16.msra.mxu0 0
        %3343 = vmatprep.subr.bf16.mxu0 0
        %3344 = vmatpush1.bf16.msra.mxu0 0
        %3345 = vmatprep.subr.bf16.mxu0 0
        %3346 = vmatpush1.bf16.msra.mxu0 0
        %3347 = vmatprep.subr.bf16.mxu0 0
        %3348 = vmatpush1.bf16.msra.mxu0 %v2706
        %3349 = vmatprep.subr.bf16.mxu0 0
        %3350 = vmatpush2.bf16.msra.mxu0 0
        %3351 = vmatprep.subr.bf16.mxu0 0
        %3352 = vmatpush2.bf16.msra.mxu0 0
        %3353 = vmatprep.subr.bf16.mxu0 0
        %3354 = vmatpush2.bf16.msra.mxu0 0
        %3355 = vmatprep.subr.bf16.mxu0 0
        %3356 = vmatpush2.bf16.msra.mxu0 0
        %3357 = vmatprep.subr.bf16.mxu0 0
        %3358 = vmatpush2.bf16.msra.mxu0 0
        %3359 = vmatprep.subr.bf16.mxu0 0
        %3360 = vmatpush2.bf16.msra.mxu0 0
        %3361 = vmatprep.subr.bf16.mxu0 0
        %3362 = vmatpush2.bf16.msra.mxu0 0
        %3363 = vmatprep.subr.bf16.mxu0 0
        %3364 = vmatpush2.bf16.msra.mxu0 0
        %3365 = vmatprep.mubr.bf16.mxu0 0
        %3366 = vmatmul.mubr.bf16.gmra.mxu0 %v3331
        %v3367 = vpop.f32.mrf.mxu0
        %v3368 = vadd.f32 0.0, %v3367
        %v3369 = vpop.f32.mrf.mxu0
        %v3370 = vpop.f32.mrf.mxu0
        %v3371 = vadd.f32 0.0, %v3370
        %v3372 = vpop.f32.mrf.mxu0
        %3373 = vdwg.mxu0
        %v3375 = vsel %vm1826, %v3329, 0
        %3377 = vmatprep.subr.bf16.mxu0 0
        %3378 = vmatpush1.bf16.msra.mxu0 0
        %3379 = vmatprep.subr.bf16.mxu0 0
        %3380 = vmatpush1.bf16.msra.mxu0 0
        %3381 = vmatprep.subr.bf16.mxu0 0
        %3382 = vmatpush1.bf16.msra.mxu0 0
        %3383 = vmatprep.subr.bf16.mxu0 0
        %3384 = vmatpush1.bf16.msra.mxu0 0
        %3385 = vmatprep.subr.bf16.mxu0 0
        %3386 = vmatpush1.bf16.msra.mxu0 0
        %3387 = vmatprep.subr.bf16.mxu0 0
        %3388 = vmatpush1.bf16.msra.mxu0 0
        %3389 = vmatprep.subr.bf16.mxu0 0
        %3390 = vmatpush1.bf16.msra.mxu0 0
        %3391 = vmatprep.subr.bf16.mxu0 0
        %3392 = vmatpush1.bf16.msra.mxu0 %v2707
        %3393 = vmatprep.subr.bf16.mxu0 0
        %3394 = vmatpush2.bf16.msra.mxu0 0
        %3395 = vmatprep.subr.bf16.mxu0 0
        %3396 = vmatpush2.bf16.msra.mxu0 0
        %3397 = vmatprep.subr.bf16.mxu0 0
        %3398 = vmatpush2.bf16.msra.mxu0 0
        %3399 = vmatprep.subr.bf16.mxu0 0
        %3400 = vmatpush2.bf16.msra.mxu0 0
        %3401 = vmatprep.subr.bf16.mxu0 0
        %3402 = vmatpush2.bf16.msra.mxu0 0
        %3403 = vmatprep.subr.bf16.mxu0 0
        %3404 = vmatpush2.bf16.msra.mxu0 0
        %3405 = vmatprep.subr.bf16.mxu0 0
        %3406 = vmatpush2.bf16.msra.mxu0 0
        %3407 = vmatprep.subr.bf16.mxu0 0
        %3408 = vmatpush2.bf16.msra.mxu0 0
        %3409 = vmatprep.mubr.bf16.mxu0 0
        %3410 = vmatmul.mubr.bf16.gmra.mxu0 %v3375
        %v3411 = vpop.f32.mrf.mxu0
        %v3412 = vadd.f32 0.0, %v3411
        %v3413 = vpop.f32.mrf.mxu0
        %v3414 = vpop.f32.mrf.mxu0
        %v3415 = vadd.f32 0.0, %v3414
        %v3416 = vpop.f32.mrf.mxu0
        %3417 = vdwg.mxu0
        %s3418 = scalar_lea.vmem %s4, 64
        %v3419 = vld [vmem:[%s3418] sm:$0xf]
        %v3420 = vld [vmem:[%s3418 + $0x4] sm:$0xf]
        %v3421 = vld [vmem:[%s3418 + $0x8] sm:$0xf]
        %v3422 = vld [vmem:[%s3418 + $0xc] sm:$0xf]
        %v3423 = vld [vmem:[%s3418 + $0x10] sm:$0xf]
        %v3424 = vld [vmem:[%s3418 + $0x14] sm:$0xf]
        %v3425 = vld [vmem:[%s3418 + $0x18] sm:$0xf]
        %v3426 = vld [vmem:[%s3418 + $0x1c] sm:$0xf]
        %v3427 = vld [vmem:[%s3418 + $0x20] sm:$0xf]
        %v3428 = vld [vmem:[%s3418 + $0x24] sm:$0xf]
        %v3429 = vld [vmem:[%s3418 + $0x28] sm:$0xf]
        %v3430 = vld [vmem:[%s3418 + $0x2c] sm:$0xf]
        %v3431 = vld [vmem:[%s3418 + $0x30] sm:$0xf]
        %v3432 = vld [vmem:[%s3418 + $0x34] sm:$0xf]
        %v3433 = vld [vmem:[%s3418 + $0x38] sm:$0xf]
        %v3434 = vld [vmem:[%s3418 + $0x3c] sm:$0xf]
        %s3435 = scalar_lea.vmem [#allocation10], 1
        %v3436 = vld [vmem:[%s3435] sm:$0x1]
        %v3437 = vpack.c.bf16 %v3371, %v3368
        %v3446 = vunpack.c.l.b16 %v3419
        %v3447 = vunpack.c.l.b16 %v3420
        %v3448 = vunpack.c.l.b16 %v3421
        %v3449 = vunpack.c.l.b16 %v3422
        %v3450 = vunpack.c.l.b16 %v3423
        %v3451 = vunpack.c.l.b16 %v3424
        %v3452 = vunpack.c.l.b16 %v3425
        %v3453 = vunpack.c.l.b16 %v3426
        %v3454 = vpack.c.b16 %v3447, %v3446
        %v3455 = vpack.c.b16 %v3449, %v3448
        %v3456 = vpack.c.b16 %v3451, %v3450
        %v3457 = vpack.c.b16 %v3453, %v3452
        %v3463 = vsel %vm1253, %v3437, 0
        %3465 = vmatprep.subr.bf16.mxu0 0
        %3466 = vmatpush1.bf16.msra.mxu0 0
        %3467 = vmatprep.subr.bf16.mxu0 0
        %3468 = vmatpush1.bf16.msra.mxu0 0
        %3469 = vmatprep.subr.bf16.mxu0 0
        %3470 = vmatpush1.bf16.msra.mxu0 0
        %3471 = vmatprep.subr.bf16.mxu0 0
        %3472 = vmatpush1.bf16.msra.mxu0 0
        %3473 = vmatprep.subr.bf16.mxu0 0
        %3474 = vmatpush1.bf16.msra.mxu0 %v3457
        %3475 = vmatprep.subr.bf16.mxu0 0
        %3476 = vmatpush1.bf16.msra.mxu0 %v3456
        %3477 = vmatprep.subr.bf16.mxu0 0
        %3478 = vmatpush1.bf16.msra.mxu0 %v3455
        %3479 = vmatprep.subr.bf16.mxu0 0
        %3480 = vmatpush1.bf16.msra.mxu0 %v3454
        %3481 = vmatprep.subr.bf16.mxu0 0
        %3482 = vmatpush2.bf16.msra.mxu0 0
        %3483 = vmatprep.subr.bf16.mxu0 0
        %3484 = vmatpush2.bf16.msra.mxu0 0
        %3485 = vmatprep.subr.bf16.mxu0 0
        %3486 = vmatpush2.bf16.msra.mxu0 0
        %3487 = vmatprep.subr.bf16.mxu0 0
        %3488 = vmatpush2.bf16.msra.mxu0 0
        %3489 = vmatprep.subr.bf16.mxu0 0
        %3490 = vmatpush2.bf16.msra.mxu0 0
        %3491 = vmatprep.subr.bf16.mxu0 0
        %3492 = vmatpush2.bf16.msra.mxu0 0
        %3493 = vmatprep.subr.bf16.mxu0 0
        %3494 = vmatpush2.bf16.msra.mxu0 0
        %3495 = vmatprep.subr.bf16.mxu0 0
        %3496 = vmatpush2.bf16.msra.mxu0 0
        %3497 = vmatprep.mubr.bf16.mxu0 0
        %3498 = vmatmul.mubr.bf16.gmra.mxu0 %v3463
        %v3499 = vpop.f32.mrf.mxu0
        %v3500 = vadd.f32 0.0, %v3499
        %v3501 = vpop.f32.mrf.mxu0
        %v3502 = vpop.f32.mrf.mxu0
        %v3503 = vadd.f32 0.0, %v3502
        %v3504 = vpop.f32.mrf.mxu0
        %3505 = vdwg.mxu0
        %v3507 = vlaneseq
        %v3508 = vshrl.u32 %v3507, 7
        %v3509 = vsub.s32 0, %v3508
        %v3510 = vrot.slane %v3436, %v3509
        %v3512 = vadd.f32 %v3510, %v3500
        %v3513 = vadd.f32 %v3510, %v3503
        %v3514 = vpack.c.bf16 %v3415, %v3412
        %v3523 = vunpack.c.l.b16 %v3427
        %v3524 = vunpack.c.l.b16 %v3428
        %v3525 = vunpack.c.l.b16 %v3429
        %v3526 = vunpack.c.l.b16 %v3430
        %v3527 = vunpack.c.l.b16 %v3431
        %v3528 = vunpack.c.l.b16 %v3432
        %v3529 = vunpack.c.l.b16 %v3433
        %v3530 = vunpack.c.l.b16 %v3434
        %v3531 = vpack.c.b16 %v3524, %v3523
        %v3532 = vpack.c.b16 %v3526, %v3525
        %v3533 = vpack.c.b16 %v3528, %v3527
        %v3534 = vpack.c.b16 %v3530, %v3529
        %v3540 = vsel %vm1253, %v3514, 0
        %3542 = vmatprep.subr.bf16.mxu0 0
        %3543 = vmatpush1.bf16.msra.mxu0 0
        %3544 = vmatprep.subr.bf16.mxu0 0
        %3545 = vmatpush1.bf16.msra.mxu0 0
        %3546 = vmatprep.subr.bf16.mxu0 0
        %3547 = vmatpush1.bf16.msra.mxu0 0
        %3548 = vmatprep.subr.bf16.mxu0 0
        %3549 = vmatpush1.bf16.msra.mxu0 0
        %3550 = vmatprep.subr.bf16.mxu0 0
        %3551 = vmatpush1.bf16.msra.mxu0 %v3534
        %3552 = vmatprep.subr.bf16.mxu0 0
        %3553 = vmatpush1.bf16.msra.mxu0 %v3533
        %3554 = vmatprep.subr.bf16.mxu0 0
        %3555 = vmatpush1.bf16.msra.mxu0 %v3532
        %3556 = vmatprep.subr.bf16.mxu0 0
        %3557 = vmatpush1.bf16.msra.mxu0 %v3531
        %3558 = vmatprep.subr.bf16.mxu0 0
        %3559 = vmatpush2.bf16.msra.mxu0 0
        %3560 = vmatprep.subr.bf16.mxu0 0
        %3561 = vmatpush2.bf16.msra.mxu0 0
        %3562 = vmatprep.subr.bf16.mxu0 0
        %3563 = vmatpush2.bf16.msra.mxu0 0
        %3564 = vmatprep.subr.bf16.mxu0 0
        %3565 = vmatpush2.bf16.msra.mxu0 0
        %3566 = vmatprep.subr.bf16.mxu0 0
        %3567 = vmatpush2.bf16.msra.mxu0 0
        %3568 = vmatprep.subr.bf16.mxu0 0
        %3569 = vmatpush2.bf16.msra.mxu0 0
        %3570 = vmatprep.subr.bf16.mxu0 0
        %3571 = vmatpush2.bf16.msra.mxu0 0
        %3572 = vmatprep.subr.bf16.mxu0 0
        %3573 = vmatpush2.bf16.msra.mxu0 0
        %3574 = vmatprep.mubr.bf16.mxu0 0
        %3575 = vmatmul.mubr.bf16.gmra.mxu0 %v3540
        %v3576 = vpop.f32.mrf.mxu0
        %v3577 = vadd.f32 0.0, %v3576
        %v3578 = vpop.f32.mrf.mxu0
        %v3579 = vpop.f32.mrf.mxu0
        %v3580 = vadd.f32 0.0, %v3579
        %v3581 = vpop.f32.mrf.mxu0
        %3582 = vdwg.mxu0
        %v3583 = vadd.f32 %v3512, %v3577
        %v3584 = vadd.f32 %v3513, %v3580
        %v3585 = vadd.f32 %v3583, %v2412
        %v3586 = vadd.f32 %v3584, %v2413
        %3587 = vadd.xlane.f32.xlu0 %v3585
        %v3588 = vpop.xlane.xlu0 %3587
        %3589 = vadd.xlane.f32.xlu0 %v3586
        %v3590 = vpop.xlane.xlu0 %3589
        %v3591 = vmul.f32 %v3588, %v2136
        %v3592 = vmul.f32 %v3590, %v2136
        %v3593 = vsub.f32 %v3585, %v3591
        %v3594 = vsub.f32 %v3586, %v3592
        %v3595 = vmul.f32 %v3593, %v3593
        %v3596 = vmul.f32 %v3594, %v3594
        %3597 = vadd.xlane.f32.xlu0 %v3595
        %v3598 = vpop.xlane.xlu0 %3597
        %3599 = vadd.xlane.f32.xlu0 %v3596
        %v3600 = vpop.xlane.xlu0 %3599
        %v3601 = vmul.f32 %v3598, %v2136
        %v3602 = vmul.f32 %v3600, %v2136
        %v3603 = vadd.f32 %v3601, 1e-06
        %v3604 = vadd.f32 %v3602, 1e-06
        %v3605 = vrsqrt.pop %v3603
        %v3606 = vrsqrt.pop %v3604
        %v3607 = vmul.f32 %v3593, %v3605
        %v3608 = vmul.f32 %v3594, %v3606
        %s3609 = scalar_lea.vmem [#allocation14], 1
        %v3610 = vld [vmem:[%s3609] sm:$0x1]
        %v3612 = vlaneseq
        %v3613 = vshrl.u32 %v3612, 7
        %v3614 = vsub.s32 0, %v3613
        %v3615 = vrot.slane %v3610, %v3614
        %v3617 = vmul.f32 %v3607, %v3615
        %v3618 = vmul.f32 %v3608, %v3615
        %s3619 = scalar_lea.vmem [#allocation16], 1
        %v3620 = vld [vmem:[%s3619] sm:$0x1]
        %v3622 = vlaneseq
        %v3623 = vshrl.u32 %v3622, 7
        %v3624 = vsub.s32 0, %v3623
        %v3625 = vrot.slane %v3620, %v3624
        %v3627 = vadd.f32 %v3617, %v3625
        %v3628 = vadd.f32 %v3618, %v3625
        %v3629 = vpack.c.bf16 %v3628, %v3627
        %s3630 = scalar_lea.vmem %s6, 64
        %v3631 = vld [vmem:[%s3630] sm:$0xf]
        %v3632 = vld [vmem:[%s3630 + $0x4] sm:$0xf]
        %v3633 = vld [vmem:[%s3630 + $0x8] sm:$0xf]
        %v3634 = vld [vmem:[%s3630 + $0xc] sm:$0xf]
        %v3635 = vld [vmem:[%s3630 + $0x10] sm:$0xf]
        %v3636 = vld [vmem:[%s3630 + $0x14] sm:$0xf]
        %v3637 = vld [vmem:[%s3630 + $0x18] sm:$0xf]
        %v3638 = vld [vmem:[%s3630 + $0x1c] sm:$0xf]
        %v3639 = vld [vmem:[%s3630 + $0x20] sm:$0xf]
        %v3640 = vld [vmem:[%s3630 + $0x24] sm:$0xf]
        %v3641 = vld [vmem:[%s3630 + $0x28] sm:$0xf]
        %v3642 = vld [vmem:[%s3630 + $0x2c] sm:$0xf]
        %v3643 = vld [vmem:[%s3630 + $0x30] sm:$0xf]
        %v3644 = vld [vmem:[%s3630 + $0x34] sm:$0xf]
        %v3645 = vld [vmem:[%s3630 + $0x38] sm:$0xf]
        %v3646 = vld [vmem:[%s3630 + $0x3c] sm:$0xf]
        %s3647 = scalar_lea.vmem [#allocation11], 1
        %v3648 = vld [vmem:[%s3647] sm:$0x1]
        %v3650 = vlaneseq
        %v3651 = vshrl.u32 %v3650, 7
        %v3652 = vsub.s32 0, %v3651
        %v3653 = vrot.slane %v3648, %v3652
        %v3671 = vunpack.c.l.b16 %v3631
        %v3672 = vunpack.c.l.b16 %v3632
        %v3673 = vunpack.c.l.b16 %v3633
        %v3674 = vunpack.c.l.b16 %v3634
        %v3675 = vunpack.c.l.b16 %v3635
        %v3676 = vunpack.c.l.b16 %v3636
        %v3677 = vunpack.c.l.b16 %v3637
        %v3678 = vunpack.c.l.b16 %v3638
        %v3679 = vunpack.c.l.b16 %v3639
        %v3680 = vunpack.c.l.b16 %v3640
        %v3681 = vunpack.c.l.b16 %v3641
        %v3682 = vunpack.c.l.b16 %v3642
        %v3683 = vunpack.c.l.b16 %v3643
        %v3684 = vunpack.c.l.b16 %v3644
        %v3685 = vunpack.c.l.b16 %v3645
        %v3686 = vunpack.c.l.b16 %v3646
        %v3687 = vpack.c.b16 %v3672, %v3671
        %v3688 = vpack.c.b16 %v3674, %v3673
        %v3689 = vpack.c.b16 %v3676, %v3675
        %v3690 = vpack.c.b16 %v3678, %v3677
        %v3691 = vpack.c.b16 %v3680, %v3679
        %v3692 = vpack.c.b16 %v3682, %v3681
        %v3693 = vpack.c.b16 %v3684, %v3683
        %v3694 = vpack.c.b16 %v3686, %v3685
        %3703 = vmatprep.subr.bf16.mxu0 0
        %3704 = vmatpush1.bf16.msra.mxu0 %v3694
        %3705 = vmatprep.subr.bf16.mxu0 0
        %3706 = vmatpush1.bf16.msra.mxu0 %v3693
        %3707 = vmatprep.subr.bf16.mxu0 0
        %3708 = vmatpush1.bf16.msra.mxu0 %v3692
        %3709 = vmatprep.subr.bf16.mxu0 0
        %3710 = vmatpush1.bf16.msra.mxu0 %v3691
        %3711 = vmatprep.subr.bf16.mxu0 0
        %3712 = vmatpush1.bf16.msra.mxu0 %v3690
        %3713 = vmatprep.subr.bf16.mxu0 0
        %3714 = vmatpush1.bf16.msra.mxu0 %v3689
        %3715 = vmatprep.subr.bf16.mxu0 0
        %3716 = vmatpush1.bf16.msra.mxu0 %v3688
        %3717 = vmatprep.subr.bf16.mxu0 0
        %3718 = vmatpush1.bf16.msra.mxu0 %v3687
        %3719 = vmatprep.subr.bf16.mxu0 0
        %3720 = vmatpush2.bf16.msra.mxu0 0
        %3721 = vmatprep.subr.bf16.mxu0 0
        %3722 = vmatpush2.bf16.msra.mxu0 0
        %3723 = vmatprep.subr.bf16.mxu0 0
        %3724 = vmatpush2.bf16.msra.mxu0 0
        %3725 = vmatprep.subr.bf16.mxu0 0
        %3726 = vmatpush2.bf16.msra.mxu0 0
        %3727 = vmatprep.subr.bf16.mxu0 0
        %3728 = vmatpush2.bf16.msra.mxu0 0
        %3729 = vmatprep.subr.bf16.mxu0 0
        %3730 = vmatpush2.bf16.msra.mxu0 0
        %3731 = vmatprep.subr.bf16.mxu0 0
        %3732 = vmatpush2.bf16.msra.mxu0 0
        %3733 = vmatprep.subr.bf16.mxu0 0
        %3734 = vmatpush2.bf16.msra.mxu0 0
        %3735 = vmatprep.mubr.bf16.mxu0 0
        %3736 = vmatmul.mubr.bf16.gmra.mxu0 %v3629
        %v3737 = vpop.f32.mrf.mxu0
        %v3738 = vadd.f32 %v3653, %v3737
        %v3739 = vpop.f32.mrf.mxu0
        %v3740 = vpop.f32.mrf.mxu0
        %v3741 = vadd.f32 %v3653, %v3740
        %v3742 = vpop.f32.mrf.mxu0
        %3743 = vdwg.mxu0
        %v3744 = vmax.f32 %v3738, 0.0
        %v3745 = vmax.f32 %v3741, 0.0
        %v3746 = vpack.c.bf16 %v3745, %v3744
        %s3747 = scalar_lea.vmem %s8, 32
        %v3748 = vld [vmem:[%s3747] sm:$0xf]
        %v3749 = vld [vmem:[%s3747 + $0x4] sm:$0xf]
        %v3750 = vld [vmem:[%s3747 + $0x8] sm:$0xf]
        %v3751 = vld [vmem:[%s3747 + $0xc] sm:$0xf]
        %v3752 = vld [vmem:[%s3747 + $0x10] sm:$0xf]
        %v3753 = vld [vmem:[%s3747 + $0x14] sm:$0xf]
        %v3754 = vld [vmem:[%s3747 + $0x18] sm:$0xf]
        %v3755 = vld [vmem:[%s3747 + $0x1c] sm:$0xf]
        %s3756 = scalar_lea.vmem [#allocation13], 1
        %v3757 = vld [vmem:[%s3756] sm:$0x1]
        %v3759 = vlaneseq
        %v3760 = vshrl.u32 %v3759, 7
        %v3761 = vsub.s32 0, %v3760
        %v3762 = vrot.slane %v3757, %v3761
        %v3772 = vunpack.c.l.b16 %v3748
        %v3773 = vunpack.c.l.b16 %v3749
        %v3774 = vunpack.c.l.b16 %v3750
        %v3775 = vunpack.c.l.b16 %v3751
        %v3776 = vunpack.c.l.b16 %v3752
        %v3777 = vunpack.c.l.b16 %v3753
        %v3778 = vunpack.c.l.b16 %v3754
        %v3779 = vunpack.c.l.b16 %v3755
        %v3780 = vpack.c.b16 %v3773, %v3772
        %v3781 = vpack.c.b16 %v3775, %v3774
        %v3782 = vpack.c.b16 %v3777, %v3776
        %v3783 = vpack.c.b16 %v3779, %v3778
        %v3789 = vsel %vm1253, %v3746, 0
        %3791 = vmatprep.subr.bf16.mxu0 0
        %3792 = vmatpush1.bf16.msra.mxu0 0
        %3793 = vmatprep.subr.bf16.mxu0 0
        %3794 = vmatpush1.bf16.msra.mxu0 0
        %3795 = vmatprep.subr.bf16.mxu0 0
        %3796 = vmatpush1.bf16.msra.mxu0 0
        %3797 = vmatprep.subr.bf16.mxu0 0
        %3798 = vmatpush1.bf16.msra.mxu0 0
        %3799 = vmatprep.subr.bf16.mxu0 0
        %3800 = vmatpush1.bf16.msra.mxu0 %v3783
        %3801 = vmatprep.subr.bf16.mxu0 0
        %3802 = vmatpush1.bf16.msra.mxu0 %v3782
        %3803 = vmatprep.subr.bf16.mxu0 0
        %3804 = vmatpush1.bf16.msra.mxu0 %v3781
        %3805 = vmatprep.subr.bf16.mxu0 0
        %3806 = vmatpush1.bf16.msra.mxu0 %v3780
        %3807 = vmatprep.subr.bf16.mxu0 0
        %3808 = vmatpush2.bf16.msra.mxu0 0
        %3809 = vmatprep.subr.bf16.mxu0 0
        %3810 = vmatpush2.bf16.msra.mxu0 0
        %3811 = vmatprep.subr.bf16.mxu0 0
        %3812 = vmatpush2.bf16.msra.mxu0 0
        %3813 = vmatprep.subr.bf16.mxu0 0
        %3814 = vmatpush2.bf16.msra.mxu0 0
        %3815 = vmatprep.subr.bf16.mxu0 0
        %3816 = vmatpush2.bf16.msra.mxu0 0
        %3817 = vmatprep.subr.bf16.mxu0 0
        %3818 = vmatpush2.bf16.msra.mxu0 0
        %3819 = vmatprep.subr.bf16.mxu0 0
        %3820 = vmatpush2.bf16.msra.mxu0 0
        %3821 = vmatprep.subr.bf16.mxu0 0
        %3822 = vmatpush2.bf16.msra.mxu0 0
        %3823 = vmatprep.mubr.bf16.mxu0 0
        %3824 = vmatmul.mubr.bf16.gmra.mxu0 %v3789
        %v3825 = vpop.f32.mrf.mxu0
        %v3826 = vadd.f32 %v3762, %v3825
        %v3827 = vpop.f32.mrf.mxu0
        %v3828 = vpop.f32.mrf.mxu0
        %v3829 = vadd.f32 %v3762, %v3828
        %v3830 = vpop.f32.mrf.mxu0
        %3831 = vdwg.mxu0
        %v3832 = vadd.f32 %v3627, %v3826
        %v3833 = vadd.f32 %v3628, %v3829
        %3834 = vadd.xlane.f32.xlu0 %v3832
        %v3835 = vpop.xlane.xlu0 %3834
        %3836 = vadd.xlane.f32.xlu0 %v3833
        %v3837 = vpop.xlane.xlu0 %3836
        %v3838 = vmul.f32 %v3835, %v2136
        %v3839 = vmul.f32 %v3837, %v2136
        %v3840 = vsub.f32 %v3832, %v3838
        %v3841 = vsub.f32 %v3833, %v3839
        %v3842 = vmul.f32 %v3840, %v3840
        %v3843 = vmul.f32 %v3841, %v3841
        %3844 = vadd.xlane.f32.xlu0 %v3842
        %v3845 = vpop.xlane.xlu0 %3844
        %3846 = vadd.xlane.f32.xlu0 %v3843
        %v3847 = vpop.xlane.xlu0 %3846
        %v3848 = vmul.f32 %v3845, %v2136
        %v3849 = vmul.f32 %v3847, %v2136
        %v3850 = vadd.f32 %v3848, 1e-06
        %v3851 = vadd.f32 %v3849, 1e-06
        %v3852 = vrsqrt.pop %v3850
        %v3853 = vrsqrt.pop %v3851
        %v3854 = vmul.f32 %v3840, %v3852
        %v3855 = vmul.f32 %v3841, %v3853
        %s3856 = scalar_lea.vmem [#allocation17], 1
        %v3857 = vld [vmem:[%s3856] sm:$0x1]
        %v3859 = vlaneseq
        %v3860 = vshrl.u32 %v3859, 7
        %v3861 = vsub.s32 0, %v3860
        %v3862 = vrot.slane %v3857, %v3861
        %v3864 = vmul.f32 %v3854, %v3862
        %v3865 = vmul.f32 %v3855, %v3862
        %s3866 = scalar_lea.vmem [#allocation19], 1
        %v3867 = vld [vmem:[%s3866] sm:$0x1]
        %v3869 = vlaneseq
        %v3870 = vshrl.u32 %v3869, 7
        %v3871 = vsub.s32 0, %v3870
        %v3872 = vrot.slane %v3867, %v3871
        %v3874 = vadd.f32 %v3864, %v3872
        %v3875 = vadd.f32 %v3865, %v3872
        %v3876 = vpack.c.bf16 %v3875, %v3874
        %v3877 = vld [vmem:[%s15] sm:$0xf]
        %v3878 = vld [vmem:[%s15 + $0x4] sm:$0xf]
        %v3879 = vld [vmem:[%s15 + $0x8] sm:$0xf]
        %v3880 = vld [vmem:[%s15 + $0xc] sm:$0xf]
        %v3881 = vld [vmem:[%s15 + $0x10] sm:$0xf]
        %v3882 = vld [vmem:[%s15 + $0x14] sm:$0xf]
        %v3883 = vld [vmem:[%s15 + $0x18] sm:$0xf]
        %v3884 = vld [vmem:[%s15 + $0x1c] sm:$0xf]
        %v3885 = vld [vmem:[%s15 + $0x20] sm:$0xf]
        %v3886 = vld [vmem:[%s15 + $0x24] sm:$0xf]
        %v3887 = vld [vmem:[%s15 + $0x28] sm:$0xf]
        %v3888 = vld [vmem:[%s15 + $0x2c] sm:$0xf]
        %v3889 = vld [vmem:[%s15 + $0x30] sm:$0xf]
        %v3890 = vld [vmem:[%s15 + $0x34] sm:$0xf]
        %v3891 = vld [vmem:[%s15 + $0x38] sm:$0xf]
        %v3892 = vld [vmem:[%s15 + $0x3c] sm:$0xf]
        %v3893 = vld [vmem:[%s16] sm:$0x1]
        %v3895 = vlaneseq
        %v3896 = vshrl.u32 %v3895, 7
        %v3897 = vsub.s32 0, %v3896
        %v3898 = vrot.slane %v3893, %v3897
        %v3916 = vunpack.c.l.b16 %v3877
        %v3917 = vunpack.c.l.b16 %v3878
        %v3918 = vunpack.c.l.b16 %v3879
        %v3919 = vunpack.c.l.b16 %v3880
        %v3920 = vunpack.c.l.b16 %v3881
        %v3921 = vunpack.c.l.b16 %v3882
        %v3922 = vunpack.c.l.b16 %v3883
        %v3923 = vunpack.c.l.b16 %v3884
        %v3924 = vunpack.c.l.b16 %v3885
        %v3925 = vunpack.c.l.b16 %v3886
        %v3926 = vunpack.c.l.b16 %v3887
        %v3927 = vunpack.c.l.b16 %v3888
        %v3928 = vunpack.c.l.b16 %v3889
        %v3929 = vunpack.c.l.b16 %v3890
        %v3930 = vunpack.c.l.b16 %v3891
        %v3931 = vunpack.c.l.b16 %v3892
        %v3932 = vpack.c.b16 %v3917, %v3916
        %v3933 = vpack.c.b16 %v3919, %v3918
        %v3934 = vpack.c.b16 %v3921, %v3920
        %v3935 = vpack.c.b16 %v3923, %v3922
        %v3936 = vpack.c.b16 %v3925, %v3924
        %v3937 = vpack.c.b16 %v3927, %v3926
        %v3938 = vpack.c.b16 %v3929, %v3928
        %v3939 = vpack.c.b16 %v3931, %v3930
        %3948 = vmatprep.subr.bf16.mxu0 0
        %3949 = vmatpush1.bf16.msra.mxu0 %v3939
        %3950 = vmatprep.subr.bf16.mxu0 0
        %3951 = vmatpush1.bf16.msra.mxu0 %v3938
        %3952 = vmatprep.subr.bf16.mxu0 0
        %3953 = vmatpush1.bf16.msra.mxu0 %v3937
        %3954 = vmatprep.subr.bf16.mxu0 0
        %3955 = vmatpush1.bf16.msra.mxu0 %v3936
        %3956 = vmatprep.subr.bf16.mxu0 0
        %3957 = vmatpush1.bf16.msra.mxu0 %v3935
        %3958 = vmatprep.subr.bf16.mxu0 0
        %3959 = vmatpush1.bf16.msra.mxu0 %v3934
        %3960 = vmatprep.subr.bf16.mxu0 0
        %3961 = vmatpush1.bf16.msra.mxu0 %v3933
        %3962 = vmatprep.subr.bf16.mxu0 0
        %3963 = vmatpush1.bf16.msra.mxu0 %v3932
        %3964 = vmatprep.subr.bf16.mxu0 0
        %3965 = vmatpush2.bf16.msra.mxu0 0
        %3966 = vmatprep.subr.bf16.mxu0 0
        %3967 = vmatpush2.bf16.msra.mxu0 0
        %3968 = vmatprep.subr.bf16.mxu0 0
        %3969 = vmatpush2.bf16.msra.mxu0 0
        %3970 = vmatprep.subr.bf16.mxu0 0
        %3971 = vmatpush2.bf16.msra.mxu0 0
        %3972 = vmatprep.subr.bf16.mxu0 0
        %3973 = vmatpush2.bf16.msra.mxu0 0
        %3974 = vmatprep.subr.bf16.mxu0 0
        %3975 = vmatpush2.bf16.msra.mxu0 0
        %3976 = vmatprep.subr.bf16.mxu0 0
        %3977 = vmatpush2.bf16.msra.mxu0 0
        %3978 = vmatprep.subr.bf16.mxu0 0
        %3979 = vmatpush2.bf16.msra.mxu0 0
        %3980 = vmatprep.mubr.bf16.mxu0 0
        %3981 = vmatmul.mubr.bf16.gmra.mxu0 %v3876
        %v3982 = vpop.f32.mrf.mxu0
        %v3983 = vadd.f32 %v3898, %v3982
        %v3984 = vpop.f32.mrf.mxu0
        %v3985 = vpop.f32.mrf.mxu0
        %v3986 = vadd.f32 %v3898, %v3985
        %v3987 = vpop.f32.mrf.mxu0
        %3988 = vdwg.mxu0
        %3989 = vst [vmem:[%s788] sm:$0xff] %v3983
        %3990 = vst [vmem:[%s788 + $0x8] sm:$0xff] %v3986
        %s3991 = sand.u32 %s422, 1
        %s3992 = scalar_lea.sflag [#allocation4], %s3991
        %s3993 = sand.u32 %s422, 1
        %s3994 = smul.addr %s3993, 16
        %s3995 = scalar_lea.vmem [#allocation20], %s3994
        %s3996 = sand.u32 %s47, 1
        %s3997 = scalar_lea.sflag [#allocation22], %s3996
        %s3998 = sand.u32 %s448, 1
        %s3999 = smul.addr %s3998, 32
        %s4000 = scalar_lea.vmem [#allocation21], %s3999
        %s4001 = sand.u32 %s47, 1
        %s4002 = scalar_lea.sflag [#allocation22], %s4001
        %s4003 = sand.u32 %s474, 1
        %s4004 = smul.addr %s4003, 32
        %s4005 = scalar_lea.vmem [#allocation23], %s4004
        // Predicated region
        $region133: #{tpu_custom_call.1} parent=87 // pred_check
          %p4006 = pneg %p432
        $region134: #{tpu_custom_call.1} parent=87 // pred_check_branch
          %4008 = sbr.rel (%p4006) target = $region136
        $region135: #{tpu_custom_call.1} parent=87 // pred_region
          %s4010 = ssub.s32 256, 256
          %4011 = vsyncadd %s3992, %s4010
          %s4012 = smul.addr %s47, 2
          %s4013 = smul.addr %s4012, 128
          %s4014 = scalar_lea.hbm %s17, %s4013
          %s4015 = sshll.u32 %s3995, 4
          %s4016 = int_to_ptr.vmem [resolvable:$true] %s4015
          %4021 = dma.vmem_to_hbm [thread:$0]  %s4016, 256, %s4014, %s3992, 128, 128, 8
        $region136: #{tpu_custom_call.1} parent=87 // pred_fallthru
          _
        // Predicated region
        $region137: #{tpu_custom_call.1} parent=87 // pred_check
          %p4022 = pneg %p458
        $region138: #{tpu_custom_call.1} parent=87 // pred_check_branch
          %4024 = sbr.rel (%p4022) target = $region140
        $region139: #{tpu_custom_call.1} parent=87 // pred_region
          %s4026 = ssub.s32 512, 512
          %4027 = vsyncadd %s3997, %s4026
          %s4028 = smul.addr %s47, 4
          %s4029 = smul.addr %s4028, 128
          %s4030 = scalar_lea.hbm %s18, %s4029
          %s4031 = sshll.u32 %s4000, 4
          %s4032 = int_to_ptr.vmem [resolvable:$true] %s4031
          %4037 = dma.vmem_to_hbm [thread:$0]  %s4032, 512, %s4030, %s3997, 128, 128, 8
        $region140: #{tpu_custom_call.1} parent=87 // pred_fallthru
          _
        // Predicated region
        $region141: #{tpu_custom_call.1} parent=87 // pred_check
          %p4038 = pneg %p484
        $region142: #{tpu_custom_call.1} parent=87 // pred_check_branch
          %4040 = sbr.rel (%p4038) target = $region144
        $region143: #{tpu_custom_call.1} parent=87 // pred_region
          %s4042 = ssub.s32 512, 512
          %4043 = vsyncadd %s4002, %s4042
          %s4044 = smul.addr %s47, 4
          %s4045 = smul.addr %s4044, 128
          %s4046 = scalar_lea.hbm %s19, %s4045
          %s4047 = sshll.u32 %s4005, 4
          %s4048 = int_to_ptr.vmem [resolvable:$true] %s4047
          %4053 = dma.vmem_to_hbm [thread:$0]  %s4048, 512, %s4046, %s4002, 128, 128, 8
        $region144: #{tpu_custom_call.1} parent=87 // pred_fallthru
          _
      $region88: #{tpu_custom_call.1} parent=5 // pred_fallthru
        _
      %p4054 = scmp.le.s32.totalorder 2, %s42
      // Predicated region
      $region145: #{tpu_custom_call.1} parent=5 // pred_check
        %p4055 = pneg %p4054
      $region146: #{tpu_custom_call.1} parent=5 // pred_check_branch
        %4057 = sbr.rel (%p4055) target = $region148
      $region147: #{tpu_custom_call.1} parent=5 // pred_region
        %s4058 = ssub.s32 %s42, 2
        // Predicated region
        $region149: #{tpu_custom_call.1} parent=147 // pred_check
          %p4059 = pneg %p438
        $region150: #{tpu_custom_call.1} parent=147 // pred_check_branch
          %4061 = sbr.rel (%p4059) target = $region152
        $region151: #{tpu_custom_call.1} parent=147 // pred_region
          %s4062 = sand.u32 %s423, 1
          %s4063 = scalar_lea.sflag [#allocation4], %s4062
          %s4064 = sand.u32 %s423, 1
          %s4065 = smul.addr %s4064, 16
          %s4066 = scalar_lea.vmem [#allocation20], %s4065
          %4067 = dma.done %s4063, 256
        $region152: #{tpu_custom_call.1} parent=147 // pred_fallthru
          _
        // Predicated region
        $region153: #{tpu_custom_call.1} parent=147 // pred_check
          %p4068 = pneg %p464
        $region154: #{tpu_custom_call.1} parent=147 // pred_check_branch
          %4070 = sbr.rel (%p4068) target = $region156
        $region155: #{tpu_custom_call.1} parent=147 // pred_region
          %s4071 = sand.u32 %s48, 1
          %s4072 = scalar_lea.sflag [#allocation22], %s4071
          %s4073 = sand.u32 %s449, 1
          %s4074 = smul.addr %s4073, 32
          %s4075 = scalar_lea.vmem [#allocation21], %s4074
          %4076 = dma.done %s4072, 512
        $region156: #{tpu_custom_call.1} parent=147 // pred_fallthru
          _
        // Predicated region
        $region157: #{tpu_custom_call.1} parent=147 // pred_check
          %p4077 = pneg %p490
        $region158: #{tpu_custom_call.1} parent=147 // pred_check_branch
          %4079 = sbr.rel (%p4077) target = $region160
        $region159: #{tpu_custom_call.1} parent=147 // pred_region
          %s4080 = sand.u32 %s48, 1
          %s4081 = scalar_lea.sflag [#allocation22], %s4080
          %s4082 = sand.u32 %s475, 1
          %s4083 = smul.addr %s4082, 32
          %s4084 = scalar_lea.vmem [#allocation23], %s4083
          %4085 = dma.done %s4081, 512
        $region160: #{tpu_custom_call.1} parent=147 // pred_fallthru
          _
      $region148: #{tpu_custom_call.1} parent=5 // pred_fallthru
        _
    $region6: #{tpu_custom_call.1} parent=1 // loop_footer
      %s46 = sadd.s32 1, %s42
    $region7: #{tpu_custom_call.1} parent=1 // loop_footer_branch
      %41 = sbr.rel target = $region3
    $region8: #{tpu_custom_call.1} parent=1 // loop_exit
      _
    %4086 = vsyncpa [#allocation3], 1
    %s4087 = scalar_lea.sflag [#allocation3], 1
    %4088 = vsyncpa %s4087, 1
    %4089 = vsyncpa [#allocation6], 1
    %s4090 = scalar_lea.sflag [#allocation6], 1
    %4091 = vsyncpa %s4090, 1
    %4092 = vsyncpa [#allocation9], 1
    %4093 = vsyncpa [#allocation12], 1
    %4094 = vsyncpa [#allocation15], 1
    %4095 = vsyncpa [#allocation18], 1
    %4096 = vsyncpa [#allocation4], 1
    %s4097 = scalar_lea.sflag [#allocation4], 1
    %4098 = vsyncpa %s4097, 1
    %4099 = vsyncpa [#allocation22], 1
    %s4100 = scalar_lea.sflag [#allocation22], 1
    %4101 = vsyncpa %s4100, 1

</llo_original>
